<compile_context>
chip_gen: v7x
topology: tpu7x:2x2x1
jax: 0.10.0
libtpu: 0.0.40
codegen_flags: <defaults>
</compile_context>

<pallas_src>
import numpy as np
import jax
import jax.numpy as jnp
from jax import lax
from jax.experimental import pallas as pl
from jax.experimental.pallas import tpu as pltpu

# ---- NAS actions (fixed deterministically in-script) ---------------------------------
K1, F1 = 5, 6          # conv1 kernel / filters
K2, F2 = 5, 16         # conv2 kernel / filters
H_IN = 28
H1 = H_IN - K1 + 1     # 24  conv1 spatial
HP = H1 // 2           # 12  pooled spatial
H2 = HP - K2 + 1       # 8   conv2 spatial
TMP = F2 * H2 * H2     # 1024 (== int(f2*((29-k1)/2 - k2 + 1)**2) of the module)

# ---- "wide" (row-stride-14, junk-column) layout constants -----------------------------
PH = H_IN // 2                 # 14  : wide row stride
WIDE1 = (HP - 1) * PH + HP     # 166 : valid pooled wide columns (u = io*14 + jo)
WIDE2 = (H2 - 1) * PH + H2     # 106 : valid conv2 wide columns  (t = i*14 + j)
F1P = 8                        # conv1 channels padded 6 -> 8
NBR = 4                        # 2x2 pooling branches
LANE = 128                     # per-sample conv2 / fc1 column block (lane aligned)
W1COL = 192                    # per-sample conv1 column block (>= 60 + 128, >= WIDE1)
NP1 = NBR * K1 * K1            # 100 : conv1 patch rows (branch, di, dj)
NP2 = K2 * K2 * F1P            # 200 : conv2 patch rows (tap, padded channel)
FC1_K = F2 * LANE              # 2048: fc1 contraction length (junk cols zero-weighted)
MAX_OFF2 = (K2 - 1) * PH + (K2 - 1)   # 60 : largest conv2 tap offset


# ===================== conv1 im2col gather indices (static, numpy) ====================

def _conv1_patch_indices():
    # row (br=(a,b), di, dj), wide col u = io*14 + jo  ->  pixel (2io+a+di, 2jo+b+dj).
    # Junk wide columns (jo >= 12 or u >= 166) are clamped in-bounds: they stay finite
    # and are neutralized downstream by zero fc1 weights.
    idx = np.zeros((NP1, W1COL), np.int32)
    for a in range(2):
        for b in range(2):
            br = a * 2 + b
            for di in range(K1):
                for dj in range(K1):
                    row = br * K1 * K1 + di * K1 + dj
                    for u in range(W1COL):
                        io, jo = divmod(u, PH)
                        r = min(2 * io + a + di, H_IN - 1)
                        c = min(2 * jo + b + dj, H_IN - 1)
                        idx[row, u] = r * H_IN + c
    return idx


_CONV1_IDX = _conv1_patch_indices()


# ===================== fused Pallas kernel ============================================

def _nas_fused_kernel(p1_ref, w1_ref, b1_ref, w2_ref, b2_ref,
                      wfc1_ref, bfc1_ref, wfc2_ref, bfc2_ref,
                      o_ref, p2_scr, c_scr):
    n = o_ref.shape[0]

    # ---- conv1 (+ fused 2x2 max-pool) for the whole batch: ONE bf16 MXU GEMM ---------
    z = jnp.dot(w1_ref[...], p1_ref[...],
                preferred_element_type=jnp.float32)            # (32, n*192)
    zmax = jnp.maximum(jnp.maximum(z[0:F1P], z[F1P:2 * F1P]),
                       jnp.maximum(z[2 * F1P:3 * F1P], z[3 * F1P:4 * F1P]))
    pooled = jnp.maximum(zmax + b1_ref[...], 0.0)              # (8, n*192) f32

    # ---- conv2 im2col: 25*n full (8,128) vreg-aligned stores --------------------------
    # Source slices are static extracts of the register-resident `pooled` value (lane
    # rotates on the XLU path); destinations are 8-sublane / 128-lane aligned.
    for s in range(n):
        for di in range(K2):
            for dj in range(K2):
                tap = di * K2 + dj
                start = s * W1COL + di * PH + dj
                p2_scr[tap * F1P:(tap + 1) * F1P,
                       s * LANE:(s + 1) * LANE] = pooled[:, start:start + LANE]

    # ---- conv2 for the whole batch: ONE bf16 MXU GEMM ---------------------------------
    c2 = jnp.dot(w2_ref[...], p2_scr[...].astype(jnp.bfloat16),
                 preferred_element_type=jnp.float32)           # (16, n*128)
    c2 = jnp.maximum(c2 + b2_ref[...], 0.0)

    # ---- stage the NCHW flatten: samples -> sublanes, channels -> 128-lane blocks -----
    # (junk lanes t in [106,128) and j>=8 are zeroed by the fc1 weight packing)
    for s in range(n):
        for c in range(F2):
            c_scr[s:s + 1, c * LANE:(c + 1) * LANE] = c2[c:c + 1, s * LANE:(s + 1) * LANE]

    # ---- fc1 (ONE bf16 GEMM over all samples) + ReLU + fc2, single output store -------
    h = jnp.dot(c_scr[...].astype(jnp.bfloat16), wfc1_ref[...],
                preferred_element_type=jnp.float32)            # (n, 84)
    h = jnp.maximum(h + bfc1_ref[...], 0.0)
    o_ref[...] = jnp.dot(h, wfc2_ref[...],
                         preferred_element_type=jnp.float32) + bfc2_ref[...]


def _full_spec(shape):
    nd = len(shape)
    return pl.BlockSpec(shape, lambda *_: (0,) * nd)


@jax.jit
def nas_forward(x_nchw, packed):
    n = x_nchw.shape[0]
    # conv1 im2col (pool fused as 4 branches x 25 taps), precomputed by XLA as a single
    # gather over the 3 KB input, laid out lane-dense: (100, n*192) bf16.
    xflat = x_nchw.reshape(n, H_IN * H_IN)
    p1 = jnp.take(xflat, jnp.asarray(_CONV1_IDX.reshape(-1)), axis=1)
    p1 = p1.reshape(n, NP1, W1COL).transpose(1, 0, 2).reshape(NP1, n * W1COL)
    p1 = p1.astype(jnp.bfloat16)

    args = (p1, packed["w1"], packed["b1"], packed["w2"], packed["b2"],
            packed["wfc1"], packed["bfc1"], packed["wfc2"], packed["bfc2"])

    return pl.pallas_call(
        _nas_fused_kernel,
        out_shape=jax.ShapeDtypeStruct((n, 10), jnp.float32),
        grid=(1,),
        in_specs=[_full_spec(a.shape) for a in args],
        out_specs=_full_spec((n, 10)),
        scratch_shapes=[
            pltpu.VMEM((NP2, n * LANE), jnp.float32),   # (200, n*128) conv2 patches
            pltpu.VMEM((n, FC1_K), jnp.float32),        # (n, 2048)    fc1 LHS staging
        ],
        compiler_params=pltpu.CompilerParams(
            dimension_semantics=("arbitrary",)),
    )(*args)


# ===================== weight packing (torch layout -> kernel layout) =================

def pack_params(tp):
    # conv1 (6,1,5,5) -> block-diagonal (32,100) bf16: one 8x25 block per pooling branch
    w1flat = tp["conv1_w"].reshape(F1, K1 * K1)
    w1 = jnp.zeros((NBR * F1P, NBR * K1 * K1), jnp.float32)
    for br in range(NBR):
        w1 = w1.at[br * F1P:br * F1P + F1,
                   br * K1 * K1:(br + 1) * K1 * K1].set(w1flat)
    b1 = jnp.zeros((F1P, 1), jnp.float32).at[:F1, 0].set(tp["conv1_b"])

    # conv2 (16,6,5,5) -> (16,200) bf16: col = (di*5+dj)*8 + cin, channels padded 6->8
    w2t = jnp.transpose(tp["conv2_w"], (0, 2, 3, 1))                    # (16,5,5,6)
    w2t = jnp.pad(w2t, ((0, 0), (0, 0), (0, 0), (0, F1P - F1)))
    w2 = w2t.reshape(F2, K2 * K2 * F1P)
    b2 = tp["conv2_b"].reshape(F2, 1)

    # fc1 (84,1024) -> (2048,84) bf16: row = c*128 + i*14 + j.  Absorbs the NCHW flatten
    # AND the kernel's per-sample 128-lane padding; junk rows (j>=8 or t>=112) are zero.
    wfc1 = tp["fc1_w"].reshape(84, F2, H2, H2)                          # (84,16,8,8)
    wfc1 = jnp.transpose(wfc1, (1, 2, 3, 0))                            # (16,8,8,84)
    wfc1 = jnp.pad(wfc1, ((0, 0), (0, 0), (0, PH - H2), (0, 0)))        # (16,8,14,84)
    wfc1 = wfc1.reshape(F2, H2 * PH, 84)                                # (16,112,84)
    wfc1 = jnp.pad(wfc1, ((0, 0), (0, LANE - H2 * PH), (0, 0)))         # (16,128,84)
    wfc1 = wfc1.reshape(F2 * LANE, 84)                                  # (2048,84)
    bfc1 = tp["fc1_b"].reshape(1, 84)

    wfc2 = tp["fc2_w"].T                                                # (84,10)
    bfc2 = tp["fc2_b"].reshape(1, 10)
    return {"w1": w1.astype(jnp.bfloat16), "b1": b1,
            "w2": w2.astype(jnp.bfloat16), "b2": b2,
            "wfc1": wfc1.astype(jnp.bfloat16), "bfc1": bfc1,
            "wfc2": wfc2, "bfc2": bfc2}


# ===================== deterministic init + pure-JAX reference ========================

def init_torch_params(key):
    ks = jax.random.split(key, 8)
    return {
        "conv1_w": jax.random.normal(ks[0], (F1, 1, K1, K1), jnp.float32) * 0.1,
        "conv1_b": jax.random.normal(ks[1], (F1,), jnp.float32) * 0.1,
        "conv2_w": jax.random.normal(ks[2], (F2, F1, K2, K2), jnp.float32) * 0.1,
        "conv2_b": jax.random.normal(ks[3], (F2,), jnp.float32) * 0.1,
        "fc1_w": jax.random.normal(ks[4], (84, TMP), jnp.float32) * 0.05,
        "fc1_b": jax.random.normal(ks[5], (84,), jnp.float32) * 0.05,
        "fc2_w": jax.random.normal(ks[6], (10, 84), jnp.float32) * 0.05,
        "fc2_b": jax.random.normal(ks[7], (10,), jnp.float32) * 0.05,
    }


def reference_forward(x, tp):
    dn = ("NCHW", "OIHW", "NCHW")
    c1 = lax.conv_general_dilated(x, tp["conv1_w"], (1, 1), "VALID",
                                  dimension_numbers=dn,
                                  precision=lax.Precision.HIGHEST)
    c1 = jax.nn.relu(c1 + tp["conv1_b"][None, :, None, None])
    p1 = lax.reduce_window(c1, -jnp.inf, lax.max, (1, 1, 2, 2), (1, 1, 2, 2), "VALID")
    c2 = lax.conv_general_dilated(p1, tp["conv2_w"], (1, 1), "VALID",
                                  dimension_numbers=dn,
                                  precision=lax.Precision.HIGHEST)
    c2 = jax.nn.relu(c2 + tp["conv2_b"][None, :, None, None])
    flat = c2.reshape(x.shape[0], TMP)
    h = jax.nn.relu(flat @ tp["fc1_w"].T + tp["fc1_b"])
    return h @ tp["fc2_w"].T + tp["fc2_b"]


# ===================== main ===========================================================

if __name__ == "__main__":
    root = jax.random.PRNGKey(0)
    k_params, k_x = jax.random.split(root)
    tparams = init_torch_params(k_params)
    packed = pack_params(tparams)

    # batch=2, 1 channel, 28x28 (the module's tmp formula implies 28x28 input)
    x = jax.random.normal(k_x, (2, 1, 28, 28), jnp.float32)

    out = jax.block_until_ready(nas_forward(x, packed))
    assert out.shape == (2, 10) and out.dtype == jnp.float32

    ref = reference_forward(x, tparams)
    assert jnp.allclose(out, ref, rtol=1e-2, atol=1e-2), (
        "mismatch vs reference, max abs err = %s" % jnp.max(jnp.abs(out - ref)))

    print("KERNEL_OK")
</pallas_src>

<mosaic_0001>
module attributes {stable_mosaic.version = 11 : i64} {
  func.func @_nas_fused_kernel(%arg0: i32, %arg1: memref<100x384xbf16, #tpu.memory_space<vmem>>, %arg2: memref<32x100xbf16, #tpu.memory_space<vmem>>, %arg3: memref<8x1xf32, #tpu.memory_space<vmem>>, %arg4: memref<16x200xbf16, #tpu.memory_space<vmem>>, %arg5: memref<16x1xf32, #tpu.memory_space<vmem>>, %arg6: memref<2048x84xbf16, #tpu.memory_space<vmem>>, %arg7: memref<1x84xf32, #tpu.memory_space<vmem>>, %arg8: memref<84x10xf32, #tpu.memory_space<vmem>>, %arg9: memref<1x10xf32, #tpu.memory_space<vmem>>, %arg10: memref<2x10xf32, #tpu.memory_space<vmem>>, %arg11: memref<200x256xf32, #tpu.memory_space<vmem>>, %arg12: memref<2x2048xf32, #tpu.memory_space<vmem>>) attributes {dimension_semantics = [#tpu.dimension_semantics<arbitrary>], iteration_bounds = array<i64: 1>, scalar_prefetch = 0 : i64, scratch_operands = 2 : i64, tpu.core_type = #tpu.core_type<tc>, window_params = [{pipeline_mode = #tpu.pipeline_mode<synchronous>, transform_indices = @transform_0, window_bounds = array<i64: 100, 384>}, {pipeline_mode = #tpu.pipeline_mode<synchronous>, transform_indices = @transform_1, window_bounds = array<i64: 32, 100>}, {pipeline_mode = #tpu.pipeline_mode<synchronous>, transform_indices = @transform_2, window_bounds = array<i64: 8, 1>}, {pipeline_mode = #tpu.pipeline_mode<synchronous>, transform_indices = @transform_3, window_bounds = array<i64: 16, 200>}, {pipeline_mode = #tpu.pipeline_mode<synchronous>, transform_indices = @transform_4, window_bounds = array<i64: 16, 1>}, {pipeline_mode = #tpu.pipeline_mode<synchronous>, transform_indices = @transform_5, window_bounds = array<i64: 2048, 84>}, {pipeline_mode = #tpu.pipeline_mode<synchronous>, transform_indices = @transform_6, window_bounds = array<i64: 1, 84>}, {pipeline_mode = #tpu.pipeline_mode<synchronous>, transform_indices = @transform_7, window_bounds = array<i64: 84, 10>}, {pipeline_mode = #tpu.pipeline_mode<synchronous>, transform_indices = @transform_8, window_bounds = array<i64: 1, 10>}, {pipeline_mode = #tpu.pipeline_mode<synchronous>, transform_indices = @transform_9, window_bounds = array<i64: 2, 10>}]} {
    %c0 = arith.constant 0 : index
    %c0_0 = arith.constant 0 : index
    %0 = vector.load %arg2[%c0, %c0_0] : memref<32x100xbf16, #tpu.memory_space<vmem>>, vector<32x100xbf16>
    %c0_1 = arith.constant 0 : index
    %c0_2 = arith.constant 0 : index
    %1 = vector.load %arg1[%c0_1, %c0_2] : memref<100x384xbf16, #tpu.memory_space<vmem>>, vector<100x384xbf16>
    %cst = arith.constant dense<0.000000e+00> : vector<32x384xf32>
    %2 = tpu.matmul %0, %1, %cst {dimension_numbers = #tpu.dot_dimension_numbers<[1], [0], [0], [1], [0, 0, 1, 1], [], []>} : vector<32x100xbf16>, vector<100x384xbf16>, vector<32x384xf32> -> vector<32x384xf32>
    %3 = vector.extract_strided_slice %2 {offsets = [0, 0], sizes = [8, 384], strides = [1, 1]} : vector<32x384xf32> to vector<8x384xf32>
    %4 = vector.extract_strided_slice %2 {offsets = [8, 0], sizes = [8, 384], strides = [1, 1]} : vector<32x384xf32> to vector<8x384xf32>
    %5 = arith.maximumf %3, %4 : vector<8x384xf32>
    %6 = vector.extract_strided_slice %2 {offsets = [16, 0], sizes = [8, 384], strides = [1, 1]} : vector<32x384xf32> to vector<8x384xf32>
    %7 = vector.extract_strided_slice %2 {offsets = [24, 0], sizes = [8, 384], strides = [1, 1]} : vector<32x384xf32> to vector<8x384xf32>
    %8 = arith.maximumf %6, %7 : vector<8x384xf32>
    %9 = arith.maximumf %5, %8 : vector<8x384xf32>
    %c0_3 = arith.constant 0 : index
    %c0_4 = arith.constant 0 : index
    %10 = vector.load %arg3[%c0_3, %c0_4] : memref<8x1xf32, #tpu.memory_space<vmem>>, vector<8x1xf32>
    %11 = vector.broadcast %10 : vector<8x1xf32> to vector<8x384xf32>
    %12 = arith.addf %9, %11 : vector<8x384xf32>
    %cst_5 = arith.constant 0.000000e+00 : f32
    %13 = vector.broadcast %cst_5 : f32 to vector<8x384xf32>
    %14 = arith.maximumf %12, %13 : vector<8x384xf32>
    %15 = vector.extract_strided_slice %14 {offsets = [0, 0], sizes = [8, 128], strides = [1, 1]} : vector<8x384xf32> to vector<8x128xf32>
    %c0_6 = arith.constant 0 : index
    %c0_7 = arith.constant 0 : index
    %16 = vector.load %arg11[%c0_6, %c0_7] : memref<200x256xf32, #tpu.memory_space<vmem>>, vector<8x128xf32>
    tpu.vector_store %arg11[%c0_6, %c0_7], %15 {strides = array<i32>} : memref<200x256xf32, #tpu.memory_space<vmem>>, vector<8x128xf32>,
    %17 = vector.extract_strided_slice %14 {offsets = [0, 1], sizes = [8, 128], strides = [1, 1]} : vector<8x384xf32> to vector<8x128xf32>
    %c8 = arith.constant 8 : index
    %c0_8 = arith.constant 0 : index
    %18 = vector.load %arg11[%c8, %c0_8] : memref<200x256xf32, #tpu.memory_space<vmem>>, vector<8x128xf32>
    tpu.vector_store %arg11[%c8, %c0_8], %17 {strides = array<i32>} : memref<200x256xf32, #tpu.memory_space<vmem>>, vector<8x128xf32>,
    %19 = vector.extract_strided_slice %14 {offsets = [0, 2], sizes = [8, 128], strides = [1, 1]} : vector<8x384xf32> to vector<8x128xf32>
    %c16 = arith.constant 16 : index
    %c0_9 = arith.constant 0 : index
    %20 = vector.load %arg11[%c16, %c0_9] : memref<200x256xf32, #tpu.memory_space<vmem>>, vector<8x128xf32>
    tpu.vector_store %arg11[%c16, %c0_9], %19 {strides = array<i32>} : memref<200x256xf32, #tpu.memory_space<vmem>>, vector<8x128xf32>,
    %21 = vector.extract_strided_slice %14 {offsets = [0, 3], sizes = [8, 128], strides = [1, 1]} : vector<8x384xf32> to vector<8x128xf32>
    %c24 = arith.constant 24 : index
    %c0_10 = arith.constant 0 : index
    %22 = vector.load %arg11[%c24, %c0_10] : memref<200x256xf32, #tpu.memory_space<vmem>>, vector<8x128xf32>
    tpu.vector_store %arg11[%c24, %c0_10], %21 {strides = array<i32>} : memref<200x256xf32, #tpu.memory_space<vmem>>, vector<8x128xf32>,
    %23 = vector.extract_strided_slice %14 {offsets = [0, 4], sizes = [8, 128], strides = [1, 1]} : vector<8x384xf32> to vector<8x128xf32>
    %c32 = arith.constant 32 : index
    %c0_11 = arith.constant 0 : index
    %24 = vector.load %arg11[%c32, %c0_11] : memref<200x256xf32, #tpu.memory_space<vmem>>, vector<8x128xf32>
    tpu.vector_store %arg11[%c32, %c0_11], %23 {strides = array<i32>} : memref<200x256xf32, #tpu.memory_space<vmem>>, vector<8x128xf32>,
    %25 = vector.extract_strided_slice %14 {offsets = [0, 14], sizes = [8, 128], strides = [1, 1]} : vector<8x384xf32> to vector<8x128xf32>
    %c40 = arith.constant 40 : index
    %c0_12 = arith.constant 0 : index
    %26 = vector.load %arg11[%c40, %c0_12] : memref<200x256xf32, #tpu.memory_space<vmem>>, vector<8x128xf32>
    tpu.vector_store %arg11[%c40, %c0_12], %25 {strides = array<i32>} : memref<200x256xf32, #tpu.memory_space<vmem>>, vector<8x128xf32>,
    %27 = vector.extract_strided_slice %14 {offsets = [0, 15], sizes = [8, 128], strides = [1, 1]} : vector<8x384xf32> to vector<8x128xf32>
    %c48 = arith.constant 48 : index
    %c0_13 = arith.constant 0 : index
    %28 = vector.load %arg11[%c48, %c0_13] : memref<200x256xf32, #tpu.memory_space<vmem>>, vector<8x128xf32>
    tpu.vector_store %arg11[%c48, %c0_13], %27 {strides = array<i32>} : memref<200x256xf32, #tpu.memory_space<vmem>>, vector<8x128xf32>,
    %29 = vector.extract_strided_slice %14 {offsets = [0, 16], sizes = [8, 128], strides = [1, 1]} : vector<8x384xf32> to vector<8x128xf32>
    %c56 = arith.constant 56 : index
    %c0_14 = arith.constant 0 : index
    %30 = vector.load %arg11[%c56, %c0_14] : memref<200x256xf32, #tpu.memory_space<vmem>>, vector<8x128xf32>
    tpu.vector_store %arg11[%c56, %c0_14], %29 {strides = array<i32>} : memref<200x256xf32, #tpu.memory_space<vmem>>, vector<8x128xf32>,
    %31 = vector.extract_strided_slice %14 {offsets = [0, 17], sizes = [8, 128], strides = [1, 1]} : vector<8x384xf32> to vector<8x128xf32>
    %c64 = arith.constant 64 : index
    %c0_15 = arith.constant 0 : index
    %32 = vector.load %arg11[%c64, %c0_15] : memref<200x256xf32, #tpu.memory_space<vmem>>, vector<8x128xf32>
    tpu.vector_store %arg11[%c64, %c0_15], %31 {strides = array<i32>} : memref<200x256xf32, #tpu.memory_space<vmem>>, vector<8x128xf32>,
    %33 = vector.extract_strided_slice %14 {offsets = [0, 18], sizes = [8, 128], strides = [1, 1]} : vector<8x384xf32> to vector<8x128xf32>
    %c72 = arith.constant 72 : index
    %c0_16 = arith.constant 0 : index
    %34 = vector.load %arg11[%c72, %c0_16] : memref<200x256xf32, #tpu.memory_space<vmem>>, vector<8x128xf32>
    tpu.vector_store %arg11[%c72, %c0_16], %33 {strides = array<i32>} : memref<200x256xf32, #tpu.memory_space<vmem>>, vector<8x128xf32>,
    %35 = vector.extract_strided_slice %14 {offsets = [0, 28], sizes = [8, 128], strides = [1, 1]} : vector<8x384xf32> to vector<8x128xf32>
    %c80 = arith.constant 80 : index
    %c0_17 = arith.constant 0 : index
    %36 = vector.load %arg11[%c80, %c0_17] : memref<200x256xf32, #tpu.memory_space<vmem>>, vector<8x128xf32>
    tpu.vector_store %arg11[%c80, %c0_17], %35 {strides = array<i32>} : memref<200x256xf32, #tpu.memory_space<vmem>>, vector<8x128xf32>,
    %37 = vector.extract_strided_slice %14 {offsets = [0, 29], sizes = [8, 128], strides = [1, 1]} : vector<8x384xf32> to vector<8x128xf32>
    %c88 = arith.constant 88 : index
    %c0_18 = arith.constant 0 : index
    %38 = vector.load %arg11[%c88, %c0_18] : memref<200x256xf32, #tpu.memory_space<vmem>>, vector<8x128xf32>
    tpu.vector_store %arg11[%c88, %c0_18], %37 {strides = array<i32>} : memref<200x256xf32, #tpu.memory_space<vmem>>, vector<8x128xf32>,
    %39 = vector.extract_strided_slice %14 {offsets = [0, 30], sizes = [8, 128], strides = [1, 1]} : vector<8x384xf32> to vector<8x128xf32>
    %c96 = arith.constant 96 : index
    %c0_19 = arith.constant 0 : index
    %40 = vector.load %arg11[%c96, %c0_19] : memref<200x256xf32, #tpu.memory_space<vmem>>, vector<8x128xf32>
    tpu.vector_store %arg11[%c96, %c0_19], %39 {strides = array<i32>} : memref<200x256xf32, #tpu.memory_space<vmem>>, vector<8x128xf32>,
    %41 = vector.extract_strided_slice %14 {offsets = [0, 31], sizes = [8, 128], strides = [1, 1]} : vector<8x384xf32> to vector<8x128xf32>
    %c104 = arith.constant 104 : index
    %c0_20 = arith.constant 0 : index
    %42 = vector.load %arg11[%c104, %c0_20] : memref<200x256xf32, #tpu.memory_space<vmem>>, vector<8x128xf32>
    tpu.vector_store %arg11[%c104, %c0_20], %41 {strides = array<i32>} : memref<200x256xf32, #tpu.memory_space<vmem>>, vector<8x128xf32>,
    %43 = vector.extract_strided_slice %14 {offsets = [0, 32], sizes = [8, 128], strides = [1, 1]} : vector<8x384xf32> to vector<8x128xf32>
    %c112 = arith.constant 112 : index
    %c0_21 = arith.constant 0 : index
    %44 = vector.load %arg11[%c112, %c0_21] : memref<200x256xf32, #tpu.memory_space<vmem>>, vector<8x128xf32>
    tpu.vector_store %arg11[%c112, %c0_21], %43 {strides = array<i32>} : memref<200x256xf32, #tpu.memory_space<vmem>>, vector<8x128xf32>,
    %45 = vector.extract_strided_slice %14 {offsets = [0, 42], sizes = [8, 128], strides = [1, 1]} : vector<8x384xf32> to vector<8x128xf32>
    %c120 = arith.constant 120 : index
    %c0_22 = arith.constant 0 : index
    %46 = vector.load %arg11[%c120, %c0_22] : memref<200x256xf32, #tpu.memory_space<vmem>>, vector<8x128xf32>
    tpu.vector_store %arg11[%c120, %c0_22], %45 {strides = array<i32>} : memref<200x256xf32, #tpu.memory_space<vmem>>, vector<8x128xf32>,
    %47 = vector.extract_strided_slice %14 {offsets = [0, 43], sizes = [8, 128], strides = [1, 1]} : vector<8x384xf32> to vector<8x128xf32>
    %c128 = arith.constant 128 : index
    %c0_23 = arith.constant 0 : index
    %48 = vector.load %arg11[%c128, %c0_23] : memref<200x256xf32, #tpu.memory_space<vmem>>, vector<8x128xf32>
    tpu.vector_store %arg11[%c128, %c0_23], %47 {strides = array<i32>} : memref<200x256xf32, #tpu.memory_space<vmem>>, vector<8x128xf32>,
    %49 = vector.extract_strided_slice %14 {offsets = [0, 44], sizes = [8, 128], strides = [1, 1]} : vector<8x384xf32> to vector<8x128xf32>
    %c136 = arith.constant 136 : index
    %c0_24 = arith.constant 0 : index
    %50 = vector.load %arg11[%c136, %c0_24] : memref<200x256xf32, #tpu.memory_space<vmem>>, vector<8x128xf32>
    tpu.vector_store %arg11[%c136, %c0_24], %49 {strides = array<i32>} : memref<200x256xf32, #tpu.memory_space<vmem>>, vector<8x128xf32>,
    %51 = vector.extract_strided_slice %14 {offsets = [0, 45], sizes = [8, 128], strides = [1, 1]} : vector<8x384xf32> to vector<8x128xf32>
    %c144 = arith.constant 144 : index
    %c0_25 = arith.constant 0 : index
    %52 = vector.load %arg11[%c144, %c0_25] : memref<200x256xf32, #tpu.memory_space<vmem>>, vector<8x128xf32>
    tpu.vector_store %arg11[%c144, %c0_25], %51 {strides = array<i32>} : memref<200x256xf32, #tpu.memory_space<vmem>>, vector<8x128xf32>,
    %53 = vector.extract_strided_slice %14 {offsets = [0, 46], sizes = [8, 128], strides = [1, 1]} : vector<8x384xf32> to vector<8x128xf32>
    %c152 = arith.constant 152 : index
    %c0_26 = arith.constant 0 : index
    %54 = vector.load %arg11[%c152, %c0_26] : memref<200x256xf32, #tpu.memory_space<vmem>>, vector<8x128xf32>
    tpu.vector_store %arg11[%c152, %c0_26], %53 {strides = array<i32>} : memref<200x256xf32, #tpu.memory_space<vmem>>, vector<8x128xf32>,
    %55 = vector.extract_strided_slice %14 {offsets = [0, 56], sizes = [8, 128], strides = [1, 1]} : vector<8x384xf32> to vector<8x128xf32>
    %c160 = arith.constant 160 : index
    %c0_27 = arith.constant 0 : index
    %56 = vector.load %arg11[%c160, %c0_27] : memref<200x256xf32, #tpu.memory_space<vmem>>, vector<8x128xf32>
    tpu.vector_store %arg11[%c160, %c0_27], %55 {strides = array<i32>} : memref<200x256xf32, #tpu.memory_space<vmem>>, vector<8x128xf32>,
    %57 = vector.extract_strided_slice %14 {offsets = [0, 57], sizes = [8, 128], strides = [1, 1]} : vector<8x384xf32> to vector<8x128xf32>
    %c168 = arith.constant 168 : index
    %c0_28 = arith.constant 0 : index
    %58 = vector.load %arg11[%c168, %c0_28] : memref<200x256xf32, #tpu.memory_space<vmem>>, vector<8x128xf32>
    tpu.vector_store %arg11[%c168, %c0_28], %57 {strides = array<i32>} : memref<200x256xf32, #tpu.memory_space<vmem>>, vector<8x128xf32>,
    %59 = vector.extract_strided_slice %14 {offsets = [0, 58], sizes = [8, 128], strides = [1, 1]} : vector<8x384xf32> to vector<8x128xf32>
    %c176 = arith.constant 176 : index
    %c0_29 = arith.constant 0 : index
    %60 = vector.load %arg11[%c176, %c0_29] : memref<200x256xf32, #tpu.memory_space<vmem>>, vector<8x128xf32>
    tpu.vector_store %arg11[%c176, %c0_29], %59 {strides = array<i32>} : memref<200x256xf32, #tpu.memory_space<vmem>>, vector<8x128xf32>,
    %61 = vector.extract_strided_slice %14 {offsets = [0, 59], sizes = [8, 128], strides = [1, 1]} : vector<8x384xf32> to vector<8x128xf32>
    %c184 = arith.constant 184 : index
    %c0_30 = arith.constant 0 : index
    %62 = vector.load %arg11[%c184, %c0_30] : memref<200x256xf32, #tpu.memory_space<vmem>>, vector<8x128xf32>
    tpu.vector_store %arg11[%c184, %c0_30], %61 {strides = array<i32>} : memref<200x256xf32, #tpu.memory_space<vmem>>, vector<8x128xf32>,
    %63 = vector.extract_strided_slice %14 {offsets = [0, 60], sizes = [8, 128], strides = [1, 1]} : vector<8x384xf32> to vector<8x128xf32>
    %c192 = arith.constant 192 : index
    %c0_31 = arith.constant 0 : index
    %64 = vector.load %arg11[%c192, %c0_31] : memref<200x256xf32, #tpu.memory_space<vmem>>, vector<8x128xf32>
    tpu.vector_store %arg11[%c192, %c0_31], %63 {strides = array<i32>} : memref<200x256xf32, #tpu.memory_space<vmem>>, vector<8x128xf32>,
    %65 = vector.extract_strided_slice %14 {offsets = [0, 192], sizes = [8, 128], strides = [1, 1]} : vector<8x384xf32> to vector<8x128xf32>
    %c0_32 = arith.constant 0 : index
    %c128_33 = arith.constant 128 : index
    %66 = vector.load %arg11[%c0_32, %c128_33] : memref<200x256xf32, #tpu.memory_space<vmem>>, vector<8x128xf32>
    tpu.vector_store %arg11[%c0_32, %c128_33], %65 {strides = array<i32>} : memref<200x256xf32, #tpu.memory_space<vmem>>, vector<8x128xf32>,
    %67 = vector.extract_strided_slice %14 {offsets = [0, 193], sizes = [8, 128], strides = [1, 1]} : vector<8x384xf32> to vector<8x128xf32>
    %c8_34 = arith.constant 8 : index
    %c128_35 = arith.constant 128 : index
    %68 = vector.load %arg11[%c8_34, %c128_35] : memref<200x256xf32, #tpu.memory_space<vmem>>, vector<8x128xf32>
    tpu.vector_store %arg11[%c8_34, %c128_35], %67 {strides = array<i32>} : memref<200x256xf32, #tpu.memory_space<vmem>>, vector<8x128xf32>,
    %69 = vector.extract_strided_slice %14 {offsets = [0, 194], sizes = [8, 128], strides = [1, 1]} : vector<8x384xf32> to vector<8x128xf32>
    %c16_36 = arith.constant 16 : index
    %c128_37 = arith.constant 128 : index
    %70 = vector.load %arg11[%c16_36, %c128_37] : memref<200x256xf32, #tpu.memory_space<vmem>>, vector<8x128xf32>
    tpu.vector_store %arg11[%c16_36, %c128_37], %69 {strides = array<i32>} : memref<200x256xf32, #tpu.memory_space<vmem>>, vector<8x128xf32>,
    %71 = vector.extract_strided_slice %14 {offsets = [0, 195], sizes = [8, 128], strides = [1, 1]} : vector<8x384xf32> to vector<8x128xf32>
    %c24_38 = arith.constant 24 : index
    %c128_39 = arith.constant 128 : index
    %72 = vector.load %arg11[%c24_38, %c128_39] : memref<200x256xf32, #tpu.memory_space<vmem>>, vector<8x128xf32>
    tpu.vector_store %arg11[%c24_38, %c128_39], %71 {strides = array<i32>} : memref<200x256xf32, #tpu.memory_space<vmem>>, vector<8x128xf32>,
    %73 = vector.extract_strided_slice %14 {offsets = [0, 196], sizes = [8, 128], strides = [1, 1]} : vector<8x384xf32> to vector<8x128xf32>
    %c32_40 = arith.constant 32 : index
    %c128_41 = arith.constant 128 : index
    %74 = vector.load %arg11[%c32_40, %c128_41] : memref<200x256xf32, #tpu.memory_space<vmem>>, vector<8x128xf32>
    tpu.vector_store %arg11[%c32_40, %c128_41], %73 {strides = array<i32>} : memref<200x256xf32, #tpu.memory_space<vmem>>, vector<8x128xf32>,
    %75 = vector.extract_strided_slice %14 {offsets = [0, 206], sizes = [8, 128], strides = [1, 1]} : vector<8x384xf32> to vector<8x128xf32>
    %c40_42 = arith.constant 40 : index
    %c128_43 = arith.constant 128 : index
    %76 = vector.load %arg11[%c40_42, %c128_43] : memref<200x256xf32, #tpu.memory_space<vmem>>, vector<8x128xf32>
    tpu.vector_store %arg11[%c40_42, %c128_43], %75 {strides = array<i32>} : memref<200x256xf32, #tpu.memory_space<vmem>>, vector<8x128xf32>,
    %77 = vector.extract_strided_slice %14 {offsets = [0, 207], sizes = [8, 128], strides = [1, 1]} : vector<8x384xf32> to vector<8x128xf32>
    %c48_44 = arith.constant 48 : index
    %c128_45 = arith.constant 128 : index
    %78 = vector.load %arg11[%c48_44, %c128_45] : memref<200x256xf32, #tpu.memory_space<vmem>>, vector<8x128xf32>
    tpu.vector_store %arg11[%c48_44, %c128_45], %77 {strides = array<i32>} : memref<200x256xf32, #tpu.memory_space<vmem>>, vector<8x128xf32>,
    %79 = vector.extract_strided_slice %14 {offsets = [0, 208], sizes = [8, 128], strides = [1, 1]} : vector<8x384xf32> to vector<8x128xf32>
    %c56_46 = arith.constant 56 : index
    %c128_47 = arith.constant 128 : index
    %80 = vector.load %arg11[%c56_46, %c128_47] : memref<200x256xf32, #tpu.memory_space<vmem>>, vector<8x128xf32>
    tpu.vector_store %arg11[%c56_46, %c128_47], %79 {strides = array<i32>} : memref<200x256xf32, #tpu.memory_space<vmem>>, vector<8x128xf32>,
    %81 = vector.extract_strided_slice %14 {offsets = [0, 209], sizes = [8, 128], strides = [1, 1]} : vector<8x384xf32> to vector<8x128xf32>
    %c64_48 = arith.constant 64 : index
    %c128_49 = arith.constant 128 : index
    %82 = vector.load %arg11[%c64_48, %c128_49] : memref<200x256xf32, #tpu.memory_space<vmem>>, vector<8x128xf32>
    tpu.vector_store %arg11[%c64_48, %c128_49], %81 {strides = array<i32>} : memref<200x256xf32, #tpu.memory_space<vmem>>, vector<8x128xf32>,
    %83 = vector.extract_strided_slice %14 {offsets = [0, 210], sizes = [8, 128], strides = [1, 1]} : vector<8x384xf32> to vector<8x128xf32>
    %c72_50 = arith.constant 72 : index
    %c128_51 = arith.constant 128 : index
    %84 = vector.load %arg11[%c72_50, %c128_51] : memref<200x256xf32, #tpu.memory_space<vmem>>, vector<8x128xf32>
    tpu.vector_store %arg11[%c72_50, %c128_51], %83 {strides = array<i32>} : memref<200x256xf32, #tpu.memory_space<vmem>>, vector<8x128xf32>,
    %85 = vector.extract_strided_slice %14 {offsets = [0, 220], sizes = [8, 128], strides = [1, 1]} : vector<8x384xf32> to vector<8x128xf32>
    %c80_52 = arith.constant 80 : index
    %c128_53 = arith.constant 128 : index
    %86 = vector.load %arg11[%c80_52, %c128_53] : memref<200x256xf32, #tpu.memory_space<vmem>>, vector<8x128xf32>
    tpu.vector_store %arg11[%c80_52, %c128_53], %85 {strides = array<i32>} : memref<200x256xf32, #tpu.memory_space<vmem>>, vector<8x128xf32>,
    %87 = vector.extract_strided_slice %14 {offsets = [0, 221], sizes = [8, 128], strides = [1, 1]} : vector<8x384xf32> to vector<8x128xf32>
    %c88_54 = arith.constant 88 : index
    %c128_55 = arith.constant 128 : index
    %88 = vector.load %arg11[%c88_54, %c128_55] : memref<200x256xf32, #tpu.memory_space<vmem>>, vector<8x128xf32>
    tpu.vector_store %arg11[%c88_54, %c128_55], %87 {strides = array<i32>} : memref<200x256xf32, #tpu.memory_space<vmem>>, vector<8x128xf32>,
    %89 = vector.extract_strided_slice %14 {offsets = [0, 222], sizes = [8, 128], strides = [1, 1]} : vector<8x384xf32> to vector<8x128xf32>
    %c96_56 = arith.constant 96 : index
    %c128_57 = arith.constant 128 : index
    %90 = vector.load %arg11[%c96_56, %c128_57] : memref<200x256xf32, #tpu.memory_space<vmem>>, vector<8x128xf32>
    tpu.vector_store %arg11[%c96_56, %c128_57], %89 {strides = array<i32>} : memref<200x256xf32, #tpu.memory_space<vmem>>, vector<8x128xf32>,
    %91 = vector.extract_strided_slice %14 {offsets = [0, 223], sizes = [8, 128], strides = [1, 1]} : vector<8x384xf32> to vector<8x128xf32>
    %c104_58 = arith.constant 104 : index
    %c128_59 = arith.constant 128 : index
    %92 = vector.load %arg11[%c104_58, %c128_59] : memref<200x256xf32, #tpu.memory_space<vmem>>, vector<8x128xf32>
    tpu.vector_store %arg11[%c104_58, %c128_59], %91 {strides = array<i32>} : memref<200x256xf32, #tpu.memory_space<vmem>>, vector<8x128xf32>,
    %93 = vector.extract_strided_slice %14 {offsets = [0, 224], sizes = [8, 128], strides = [1, 1]} : vector<8x384xf32> to vector<8x128xf32>
    %c112_60 = arith.constant 112 : index
    %c128_61 = arith.constant 128 : index
    %94 = vector.load %arg11[%c112_60, %c128_61] : memref<200x256xf32, #tpu.memory_space<vmem>>, vector<8x128xf32>
    tpu.vector_store %arg11[%c112_60, %c128_61], %93 {strides = array<i32>} : memref<200x256xf32, #tpu.memory_space<vmem>>, vector<8x128xf32>,
    %95 = vector.extract_strided_slice %14 {offsets = [0, 234], sizes = [8, 128], strides = [1, 1]} : vector<8x384xf32> to vector<8x128xf32>
    %c120_62 = arith.constant 120 : index
    %c128_63 = arith.constant 128 : index
    %96 = vector.load %arg11[%c120_62, %c128_63] : memref<200x256xf32, #tpu.memory_space<vmem>>, vector<8x128xf32>
    tpu.vector_store %arg11[%c120_62, %c128_63], %95 {strides = array<i32>} : memref<200x256xf32, #tpu.memory_space<vmem>>, vector<8x128xf32>,
    %97 = vector.extract_strided_slice %14 {offsets = [0, 235], sizes = [8, 128], strides = [1, 1]} : vector<8x384xf32> to vector<8x128xf32>
    %c128_64 = arith.constant 128 : index
    %c128_65 = arith.constant 128 : index
    %98 = vector.load %arg11[%c128_64, %c128_65] : memref<200x256xf32, #tpu.memory_space<vmem>>, vector<8x128xf32>
    tpu.vector_store %arg11[%c128_64, %c128_65], %97 {strides = array<i32>} : memref<200x256xf32, #tpu.memory_space<vmem>>, vector<8x128xf32>,
    %99 = vector.extract_strided_slice %14 {offsets = [0, 236], sizes = [8, 128], strides = [1, 1]} : vector<8x384xf32> to vector<8x128xf32>
    %c136_66 = arith.constant 136 : index
    %c128_67 = arith.constant 128 : index
    %100 = vector.load %arg11[%c136_66, %c128_67] : memref<200x256xf32, #tpu.memory_space<vmem>>, vector<8x128xf32>
    tpu.vector_store %arg11[%c136_66, %c128_67], %99 {strides = array<i32>} : memref<200x256xf32, #tpu.memory_space<vmem>>, vector<8x128xf32>,
    %101 = vector.extract_strided_slice %14 {offsets = [0, 237], sizes = [8, 128], strides = [1, 1]} : vector<8x384xf32> to vector<8x128xf32>
    %c144_68 = arith.constant 144 : index
    %c128_69 = arith.constant 128 : index
    %102 = vector.load %arg11[%c144_68, %c128_69] : memref<200x256xf32, #tpu.memory_space<vmem>>, vector<8x128xf32>
    tpu.vector_store %arg11[%c144_68, %c128_69], %101 {strides = array<i32>} : memref<200x256xf32, #tpu.memory_space<vmem>>, vector<8x128xf32>,
    %103 = vector.extract_strided_slice %14 {offsets = [0, 238], sizes = [8, 128], strides = [1, 1]} : vector<8x384xf32> to vector<8x128xf32>
    %c152_70 = arith.constant 152 : index
    %c128_71 = arith.constant 128 : index
    %104 = vector.load %arg11[%c152_70, %c128_71] : memref<200x256xf32, #tpu.memory_space<vmem>>, vector<8x128xf32>
    tpu.vector_store %arg11[%c152_70, %c128_71], %103 {strides = array<i32>} : memref<200x256xf32, #tpu.memory_space<vmem>>, vector<8x128xf32>,
    %105 = vector.extract_strided_slice %14 {offsets = [0, 248], sizes = [8, 128], strides = [1, 1]} : vector<8x384xf32> to vector<8x128xf32>
    %c160_72 = arith.constant 160 : index
    %c128_73 = arith.constant 128 : index
    %106 = vector.load %arg11[%c160_72, %c128_73] : memref<200x256xf32, #tpu.memory_space<vmem>>, vector<8x128xf32>
    tpu.vector_store %arg11[%c160_72, %c128_73], %105 {strides = array<i32>} : memref<200x256xf32, #tpu.memory_space<vmem>>, vector<8x128xf32>,
    %107 = vector.extract_strided_slice %14 {offsets = [0, 249], sizes = [8, 128], strides = [1, 1]} : vector<8x384xf32> to vector<8x128xf32>
    %c168_74 = arith.constant 168 : index
    %c128_75 = arith.constant 128 : index
    %108 = vector.load %arg11[%c168_74, %c128_75] : memref<200x256xf32, #tpu.memory_space<vmem>>, vector<8x128xf32>
    tpu.vector_store %arg11[%c168_74, %c128_75], %107 {strides = array<i32>} : memref<200x256xf32, #tpu.memory_space<vmem>>, vector<8x128xf32>,
    %109 = vector.extract_strided_slice %14 {offsets = [0, 250], sizes = [8, 128], strides = [1, 1]} : vector<8x384xf32> to vector<8x128xf32>
    %c176_76 = arith.constant 176 : index
    %c128_77 = arith.constant 128 : index
    %110 = vector.load %arg11[%c176_76, %c128_77] : memref<200x256xf32, #tpu.memory_space<vmem>>, vector<8x128xf32>
    tpu.vector_store %arg11[%c176_76, %c128_77], %109 {strides = array<i32>} : memref<200x256xf32, #tpu.memory_space<vmem>>, vector<8x128xf32>,
    %111 = vector.extract_strided_slice %14 {offsets = [0, 251], sizes = [8, 128], strides = [1, 1]} : vector<8x384xf32> to vector<8x128xf32>
    %c184_78 = arith.constant 184 : index
    %c128_79 = arith.constant 128 : index
    %112 = vector.load %arg11[%c184_78, %c128_79] : memref<200x256xf32, #tpu.memory_space<vmem>>, vector<8x128xf32>
    tpu.vector_store %arg11[%c184_78, %c128_79], %111 {strides = array<i32>} : memref<200x256xf32, #tpu.memory_space<vmem>>, vector<8x128xf32>,
    %113 = vector.extract_strided_slice %14 {offsets = [0, 252], sizes = [8, 128], strides = [1, 1]} : vector<8x384xf32> to vector<8x128xf32>
    %c192_80 = arith.constant 192 : index
    %c128_81 = arith.constant 128 : index
    %114 = vector.load %arg11[%c192_80, %c128_81] : memref<200x256xf32, #tpu.memory_space<vmem>>, vector<8x128xf32>
    tpu.vector_store %arg11[%c192_80, %c128_81], %113 {strides = array<i32>} : memref<200x256xf32, #tpu.memory_space<vmem>>, vector<8x128xf32>,
    %c0_82 = arith.constant 0 : index
    %c0_83 = arith.constant 0 : index
    %115 = vector.load %arg4[%c0_82, %c0_83] : memref<16x200xbf16, #tpu.memory_space<vmem>>, vector<16x200xbf16>
    %c0_84 = arith.constant 0 : index
    %c0_85 = arith.constant 0 : index
    %116 = vector.load %arg11[%c0_84, %c0_85] : memref<200x256xf32, #tpu.memory_space<vmem>>, vector<200x256xf32>
    %117 = arith.truncf %116 : vector<200x256xf32> to vector<200x256xbf16>
    %cst_86 = arith.constant dense<0.000000e+00> : vector<16x256xf32>
    %118 = tpu.matmul %115, %117, %cst_86 {dimension_numbers = #tpu.dot_dimension_numbers<[1], [0], [0], [1], [0, 0, 1, 1], [], []>} : vector<16x200xbf16>, vector<200x256xbf16>, vector<16x256xf32> -> vector<16x256xf32>
    %c0_87 = arith.constant 0 : index
    %c0_88 = arith.constant 0 : index
    %119 = vector.load %arg5[%c0_87, %c0_88] : memref<16x1xf32, #tpu.memory_space<vmem>>, vector<16x1xf32>
    %120 = vector.broadcast %119 : vector<16x1xf32> to vector<16x256xf32>
    %121 = arith.addf %118, %120 : vector<16x256xf32>
    %cst_89 = arith.constant 0.000000e+00 : f32
    %122 = vector.broadcast %cst_89 : f32 to vector<16x256xf32>
    %123 = arith.maximumf %121, %122 : vector<16x256xf32>
    %124 = vector.extract_strided_slice %123 {offsets = [0, 0], sizes = [1, 128], strides = [1, 1]} : vector<16x256xf32> to vector<1x128xf32>
    %c0_90 = arith.constant 0 : index
    %c0_91 = arith.constant 0 : index
    %125 = vector.load %arg12[%c0_90, %c0_91] : memref<2x2048xf32, #tpu.memory_space<vmem>>, vector<1x128xf32>
    tpu.vector_store %arg12[%c0_90, %c0_91], %124 {strides = array<i32>} : memref<2x2048xf32, #tpu.memory_space<vmem>>, vector<1x128xf32>,
    %126 = vector.extract_strided_slice %123 {offsets = [1, 0], sizes = [1, 128], strides = [1, 1]} : vector<16x256xf32> to vector<1x128xf32>
    %c0_92 = arith.constant 0 : index
    %c128_93 = arith.constant 128 : index
    %127 = vector.load %arg12[%c0_92, %c128_93] : memref<2x2048xf32, #tpu.memory_space<vmem>>, vector<1x128xf32>
    tpu.vector_store %arg12[%c0_92, %c128_93], %126 {strides = array<i32>} : memref<2x2048xf32, #tpu.memory_space<vmem>>, vector<1x128xf32>,
    %128 = vector.extract_strided_slice %123 {offsets = [2, 0], sizes = [1, 128], strides = [1, 1]} : vector<16x256xf32> to vector<1x128xf32>
    %c0_94 = arith.constant 0 : index
    %c256 = arith.constant 256 : index
    %129 = vector.load %arg12[%c0_94, %c256] : memref<2x2048xf32, #tpu.memory_space<vmem>>, vector<1x128xf32>
    tpu.vector_store %arg12[%c0_94, %c256], %128 {strides = array<i32>} : memref<2x2048xf32, #tpu.memory_space<vmem>>, vector<1x128xf32>,
    %130 = vector.extract_strided_slice %123 {offsets = [3, 0], sizes = [1, 128], strides = [1, 1]} : vector<16x256xf32> to vector<1x128xf32>
    %c0_95 = arith.constant 0 : index
    %c384 = arith.constant 384 : index
    %131 = vector.load %arg12[%c0_95, %c384] : memref<2x2048xf32, #tpu.memory_space<vmem>>, vector<1x128xf32>
    tpu.vector_store %arg12[%c0_95, %c384], %130 {strides = array<i32>} : memref<2x2048xf32, #tpu.memory_space<vmem>>, vector<1x128xf32>,
    %132 = vector.extract_strided_slice %123 {offsets = [4, 0], sizes = [1, 128], strides = [1, 1]} : vector<16x256xf32> to vector<1x128xf32>
    %c0_96 = arith.constant 0 : index
    %c512 = arith.constant 512 : index
    %133 = vector.load %arg12[%c0_96, %c512] : memref<2x2048xf32, #tpu.memory_space<vmem>>, vector<1x128xf32>
    tpu.vector_store %arg12[%c0_96, %c512], %132 {strides = array<i32>} : memref<2x2048xf32, #tpu.memory_space<vmem>>, vector<1x128xf32>,
    %134 = vector.extract_strided_slice %123 {offsets = [5, 0], sizes = [1, 128], strides = [1, 1]} : vector<16x256xf32> to vector<1x128xf32>
    %c0_97 = arith.constant 0 : index
    %c640 = arith.constant 640 : index
    %135 = vector.load %arg12[%c0_97, %c640] : memref<2x2048xf32, #tpu.memory_space<vmem>>, vector<1x128xf32>
    tpu.vector_store %arg12[%c0_97, %c640], %134 {strides = array<i32>} : memref<2x2048xf32, #tpu.memory_space<vmem>>, vector<1x128xf32>,
    %136 = vector.extract_strided_slice %123 {offsets = [6, 0], sizes = [1, 128], strides = [1, 1]} : vector<16x256xf32> to vector<1x128xf32>
    %c0_98 = arith.constant 0 : index
    %c768 = arith.constant 768 : index
    %137 = vector.load %arg12[%c0_98, %c768] : memref<2x2048xf32, #tpu.memory_space<vmem>>, vector<1x128xf32>
    tpu.vector_store %arg12[%c0_98, %c768], %136 {strides = array<i32>} : memref<2x2048xf32, #tpu.memory_space<vmem>>, vector<1x128xf32>,
    %138 = vector.extract_strided_slice %123 {offsets = [7, 0], sizes = [1, 128], strides = [1, 1]} : vector<16x256xf32> to vector<1x128xf32>
    %c0_99 = arith.constant 0 : index
    %c896 = arith.constant 896 : index
    %139 = vector.load %arg12[%c0_99, %c896] : memref<2x2048xf32, #tpu.memory_space<vmem>>, vector<1x128xf32>
    tpu.vector_store %arg12[%c0_99, %c896], %138 {strides = array<i32>} : memref<2x2048xf32, #tpu.memory_space<vmem>>, vector<1x128xf32>,
    %140 = vector.extract_strided_slice %123 {offsets = [8, 0], sizes = [1, 128], strides = [1, 1]} : vector<16x256xf32> to vector<1x128xf32>
    %c0_100 = arith.constant 0 : index
    %c1024 = arith.constant 1024 : index
    %141 = vector.load %arg12[%c0_100, %c1024] : memref<2x2048xf32, #tpu.memory_space<vmem>>, vector<1x128xf32>
    tpu.vector_store %arg12[%c0_100, %c1024], %140 {strides = array<i32>} : memref<2x2048xf32, #tpu.memory_space<vmem>>, vector<1x128xf32>,
    %142 = vector.extract_strided_slice %123 {offsets = [9, 0], sizes = [1, 128], strides = [1, 1]} : vector<16x256xf32> to vector<1x128xf32>
    %c0_101 = arith.constant 0 : index
    %c1152 = arith.constant 1152 : index
    %143 = vector.load %arg12[%c0_101, %c1152] : memref<2x2048xf32, #tpu.memory_space<vmem>>, vector<1x128xf32>
    tpu.vector_store %arg12[%c0_101, %c1152], %142 {strides = array<i32>} : memref<2x2048xf32, #tpu.memory_space<vmem>>, vector<1x128xf32>,
    %144 = vector.extract_strided_slice %123 {offsets = [10, 0], sizes = [1, 128], strides = [1, 1]} : vector<16x256xf32> to vector<1x128xf32>
    %c0_102 = arith.constant 0 : index
    %c1280 = arith.constant 1280 : index
    %145 = vector.load %arg12[%c0_102, %c1280] : memref<2x2048xf32, #tpu.memory_space<vmem>>, vector<1x128xf32>
    tpu.vector_store %arg12[%c0_102, %c1280], %144 {strides = array<i32>} : memref<2x2048xf32, #tpu.memory_space<vmem>>, vector<1x128xf32>,
    %146 = vector.extract_strided_slice %123 {offsets = [11, 0], sizes = [1, 128], strides = [1, 1]} : vector<16x256xf32> to vector<1x128xf32>
    %c0_103 = arith.constant 0 : index
    %c1408 = arith.constant 1408 : index
    %147 = vector.load %arg12[%c0_103, %c1408] : memref<2x2048xf32, #tpu.memory_space<vmem>>, vector<1x128xf32>
    tpu.vector_store %arg12[%c0_103, %c1408], %146 {strides = array<i32>} : memref<2x2048xf32, #tpu.memory_space<vmem>>, vector<1x128xf32>,
    %148 = vector.extract_strided_slice %123 {offsets = [12, 0], sizes = [1, 128], strides = [1, 1]} : vector<16x256xf32> to vector<1x128xf32>
    %c0_104 = arith.constant 0 : index
    %c1536 = arith.constant 1536 : index
    %149 = vector.load %arg12[%c0_104, %c1536] : memref<2x2048xf32, #tpu.memory_space<vmem>>, vector<1x128xf32>
    tpu.vector_store %arg12[%c0_104, %c1536], %148 {strides = array<i32>} : memref<2x2048xf32, #tpu.memory_space<vmem>>, vector<1x128xf32>,
    %150 = vector.extract_strided_slice %123 {offsets = [13, 0], sizes = [1, 128], strides = [1, 1]} : vector<16x256xf32> to vector<1x128xf32>
    %c0_105 = arith.constant 0 : index
    %c1664 = arith.constant 1664 : index
    %151 = vector.load %arg12[%c0_105, %c1664] : memref<2x2048xf32, #tpu.memory_space<vmem>>, vector<1x128xf32>
    tpu.vector_store %arg12[%c0_105, %c1664], %150 {strides = array<i32>} : memref<2x2048xf32, #tpu.memory_space<vmem>>, vector<1x128xf32>,
    %152 = vector.extract_strided_slice %123 {offsets = [14, 0], sizes = [1, 128], strides = [1, 1]} : vector<16x256xf32> to vector<1x128xf32>
    %c0_106 = arith.constant 0 : index
    %c1792 = arith.constant 1792 : index
    %153 = vector.load %arg12[%c0_106, %c1792] : memref<2x2048xf32, #tpu.memory_space<vmem>>, vector<1x128xf32>
    tpu.vector_store %arg12[%c0_106, %c1792], %152 {strides = array<i32>} : memref<2x2048xf32, #tpu.memory_space<vmem>>, vector<1x128xf32>,
    %154 = vector.extract_strided_slice %123 {offsets = [15, 0], sizes = [1, 128], strides = [1, 1]} : vector<16x256xf32> to vector<1x128xf32>
    %c0_107 = arith.constant 0 : index
    %c1920 = arith.constant 1920 : index
    %155 = vector.load %arg12[%c0_107, %c1920] : memref<2x2048xf32, #tpu.memory_space<vmem>>, vector<1x128xf32>
    tpu.vector_store %arg12[%c0_107, %c1920], %154 {strides = array<i32>} : memref<2x2048xf32, #tpu.memory_space<vmem>>, vector<1x128xf32>,
    %156 = vector.extract_strided_slice %123 {offsets = [0, 128], sizes = [1, 128], strides = [1, 1]} : vector<16x256xf32> to vector<1x128xf32>
    %c1 = arith.constant 1 : index
    %c0_108 = arith.constant 0 : index
    %157 = vector.load %arg12[%c1, %c0_108] : memref<2x2048xf32, #tpu.memory_space<vmem>>, vector<1x128xf32>
    tpu.vector_store %arg12[%c1, %c0_108], %156 {strides = array<i32>} : memref<2x2048xf32, #tpu.memory_space<vmem>>, vector<1x128xf32>,
    %158 = vector.extract_strided_slice %123 {offsets = [1, 128], sizes = [1, 128], strides = [1, 1]} : vector<16x256xf32> to vector<1x128xf32>
    %c1_109 = arith.constant 1 : index
    %c128_110 = arith.constant 128 : index
    %159 = vector.load %arg12[%c1_109, %c128_110] : memref<2x2048xf32, #tpu.memory_space<vmem>>, vector<1x128xf32>
    tpu.vector_store %arg12[%c1_109, %c128_110], %158 {strides = array<i32>} : memref<2x2048xf32, #tpu.memory_space<vmem>>, vector<1x128xf32>,
    %160 = vector.extract_strided_slice %123 {offsets = [2, 128], sizes = [1, 128], strides = [1, 1]} : vector<16x256xf32> to vector<1x128xf32>
    %c1_111 = arith.constant 1 : index
    %c256_112 = arith.constant 256 : index
    %161 = vector.load %arg12[%c1_111, %c256_112] : memref<2x2048xf32, #tpu.memory_space<vmem>>, vector<1x128xf32>
    tpu.vector_store %arg12[%c1_111, %c256_112], %160 {strides = array<i32>} : memref<2x2048xf32, #tpu.memory_space<vmem>>, vector<1x128xf32>,
    %162 = vector.extract_strided_slice %123 {offsets = [3, 128], sizes = [1, 128], strides = [1, 1]} : vector<16x256xf32> to vector<1x128xf32>
    %c1_113 = arith.constant 1 : index
    %c384_114 = arith.constant 384 : index
    %163 = vector.load %arg12[%c1_113, %c384_114] : memref<2x2048xf32, #tpu.memory_space<vmem>>, vector<1x128xf32>
    tpu.vector_store %arg12[%c1_113, %c384_114], %162 {strides = array<i32>} : memref<2x2048xf32, #tpu.memory_space<vmem>>, vector<1x128xf32>,
    %164 = vector.extract_strided_slice %123 {offsets = [4, 128], sizes = [1, 128], strides = [1, 1]} : vector<16x256xf32> to vector<1x128xf32>
    %c1_115 = arith.constant 1 : index
    %c512_116 = arith.constant 512 : index
    %165 = vector.load %arg12[%c1_115, %c512_116] : memref<2x2048xf32, #tpu.memory_space<vmem>>, vector<1x128xf32>
    tpu.vector_store %arg12[%c1_115, %c512_116], %164 {strides = array<i32>} : memref<2x2048xf32, #tpu.memory_space<vmem>>, vector<1x128xf32>,
    %166 = vector.extract_strided_slice %123 {offsets = [5, 128], sizes = [1, 128], strides = [1, 1]} : vector<16x256xf32> to vector<1x128xf32>
    %c1_117 = arith.constant 1 : index
    %c640_118 = arith.constant 640 : index
    %167 = vector.load %arg12[%c1_117, %c640_118] : memref<2x2048xf32, #tpu.memory_space<vmem>>, vector<1x128xf32>
    tpu.vector_store %arg12[%c1_117, %c640_118], %166 {strides = array<i32>} : memref<2x2048xf32, #tpu.memory_space<vmem>>, vector<1x128xf32>,
    %168 = vector.extract_strided_slice %123 {offsets = [6, 128], sizes = [1, 128], strides = [1, 1]} : vector<16x256xf32> to vector<1x128xf32>
    %c1_119 = arith.constant 1 : index
    %c768_120 = arith.constant 768 : index
    %169 = vector.load %arg12[%c1_119, %c768_120] : memref<2x2048xf32, #tpu.memory_space<vmem>>, vector<1x128xf32>
    tpu.vector_store %arg12[%c1_119, %c768_120], %168 {strides = array<i32>} : memref<2x2048xf32, #tpu.memory_space<vmem>>, vector<1x128xf32>,
    %170 = vector.extract_strided_slice %123 {offsets = [7, 128], sizes = [1, 128], strides = [1, 1]} : vector<16x256xf32> to vector<1x128xf32>
    %c1_121 = arith.constant 1 : index
    %c896_122 = arith.constant 896 : index
    %171 = vector.load %arg12[%c1_121, %c896_122] : memref<2x2048xf32, #tpu.memory_space<vmem>>, vector<1x128xf32>
    tpu.vector_store %arg12[%c1_121, %c896_122], %170 {strides = array<i32>} : memref<2x2048xf32, #tpu.memory_space<vmem>>, vector<1x128xf32>,
    %172 = vector.extract_strided_slice %123 {offsets = [8, 128], sizes = [1, 128], strides = [1, 1]} : vector<16x256xf32> to vector<1x128xf32>
    %c1_123 = arith.constant 1 : index
    %c1024_124 = arith.constant 1024 : index
    %173 = vector.load %arg12[%c1_123, %c1024_124] : memref<2x2048xf32, #tpu.memory_space<vmem>>, vector<1x128xf32>
    tpu.vector_store %arg12[%c1_123, %c1024_124], %172 {strides = array<i32>} : memref<2x2048xf32, #tpu.memory_space<vmem>>, vector<1x128xf32>,
    %174 = vector.extract_strided_slice %123 {offsets = [9, 128], sizes = [1, 128], strides = [1, 1]} : vector<16x256xf32> to vector<1x128xf32>
    %c1_125 = arith.constant 1 : index
    %c1152_126 = arith.constant 1152 : index
    %175 = vector.load %arg12[%c1_125, %c1152_126] : memref<2x2048xf32, #tpu.memory_space<vmem>>, vector<1x128xf32>
    tpu.vector_store %arg12[%c1_125, %c1152_126], %174 {strides = array<i32>} : memref<2x2048xf32, #tpu.memory_space<vmem>>, vector<1x128xf32>,
    %176 = vector.extract_strided_slice %123 {offsets = [10, 128], sizes = [1, 128], strides = [1, 1]} : vector<16x256xf32> to vector<1x128xf32>
    %c1_127 = arith.constant 1 : index
    %c1280_128 = arith.constant 1280 : index
    %177 = vector.load %arg12[%c1_127, %c1280_128] : memref<2x2048xf32, #tpu.memory_space<vmem>>, vector<1x128xf32>
    tpu.vector_store %arg12[%c1_127, %c1280_128], %176 {strides = array<i32>} : memref<2x2048xf32, #tpu.memory_space<vmem>>, vector<1x128xf32>,
    %178 = vector.extract_strided_slice %123 {offsets = [11, 128], sizes = [1, 128], strides = [1, 1]} : vector<16x256xf32> to vector<1x128xf32>
    %c1_129 = arith.constant 1 : index
    %c1408_130 = arith.constant 1408 : index
    %179 = vector.load %arg12[%c1_129, %c1408_130] : memref<2x2048xf32, #tpu.memory_space<vmem>>, vector<1x128xf32>
    tpu.vector_store %arg12[%c1_129, %c1408_130], %178 {strides = array<i32>} : memref<2x2048xf32, #tpu.memory_space<vmem>>, vector<1x128xf32>,
    %180 = vector.extract_strided_slice %123 {offsets = [12, 128], sizes = [1, 128], strides = [1, 1]} : vector<16x256xf32> to vector<1x128xf32>
    %c1_131 = arith.constant 1 : index
    %c1536_132 = arith.constant 1536 : index
    %181 = vector.load %arg12[%c1_131, %c1536_132] : memref<2x2048xf32, #tpu.memory_space<vmem>>, vector<1x128xf32>
    tpu.vector_store %arg12[%c1_131, %c1536_132], %180 {strides = array<i32>} : memref<2x2048xf32, #tpu.memory_space<vmem>>, vector<1x128xf32>,
    %182 = vector.extract_strided_slice %123 {offsets = [13, 128], sizes = [1, 128], strides = [1, 1]} : vector<16x256xf32> to vector<1x128xf32>
    %c1_133 = arith.constant 1 : index
    %c1664_134 = arith.constant 1664 : index
    %183 = vector.load %arg12[%c1_133, %c1664_134] : memref<2x2048xf32, #tpu.memory_space<vmem>>, vector<1x128xf32>
    tpu.vector_store %arg12[%c1_133, %c1664_134], %182 {strides = array<i32>} : memref<2x2048xf32, #tpu.memory_space<vmem>>, vector<1x128xf32>,
    %184 = vector.extract_strided_slice %123 {offsets = [14, 128], sizes = [1, 128], strides = [1, 1]} : vector<16x256xf32> to vector<1x128xf32>
    %c1_135 = arith.constant 1 : index
    %c1792_136 = arith.constant 1792 : index
    %185 = vector.load %arg12[%c1_135, %c1792_136] : memref<2x2048xf32, #tpu.memory_space<vmem>>, vector<1x128xf32>
    tpu.vector_store %arg12[%c1_135, %c1792_136], %184 {strides = array<i32>} : memref<2x2048xf32, #tpu.memory_space<vmem>>, vector<1x128xf32>,
    %186 = vector.extract_strided_slice %123 {offsets = [15, 128], sizes = [1, 128], strides = [1, 1]} : vector<16x256xf32> to vector<1x128xf32>
    %c1_137 = arith.constant 1 : index
    %c1920_138 = arith.constant 1920 : index
    %187 = vector.load %arg12[%c1_137, %c1920_138] : memref<2x2048xf32, #tpu.memory_space<vmem>>, vector<1x128xf32>
    tpu.vector_store %arg12[%c1_137, %c1920_138], %186 {strides = array<i32>} : memref<2x2048xf32, #tpu.memory_space<vmem>>, vector<1x128xf32>,
    %c0_139 = arith.constant 0 : index
    %c0_140 = arith.constant 0 : index
    %188 = vector.load %arg12[%c0_139, %c0_140] : memref<2x2048xf32, #tpu.memory_space<vmem>>, vector<2x2048xf32>
    %189 = arith.truncf %188 : vector<2x2048xf32> to vector<2x2048xbf16>
    %c0_141 = arith.constant 0 : index
    %c0_142 = arith.constant 0 : index
    %190 = vector.load %arg6[%c0_141, %c0_142] : memref<2048x84xbf16, #tpu.memory_space<vmem>>, vector<2048x84xbf16>
    %cst_143 = arith.constant dense<0.000000e+00> : vector<2x84xf32>
    %191 = tpu.matmul %189, %190, %cst_143 {dimension_numbers = #tpu.dot_dimension_numbers<[1], [0], [0], [1], [0, 0, 1, 1], [], []>} : vector<2x2048xbf16>, vector<2048x84xbf16>, vector<2x84xf32> -> vector<2x84xf32>
    %c0_144 = arith.constant 0 : index
    %c0_145 = arith.constant 0 : index
    %192 = vector.load %arg7[%c0_144, %c0_145] : memref<1x84xf32, #tpu.memory_space<vmem>>, vector<1x84xf32>
    %193 = vector.broadcast %192 : vector<1x84xf32> to vector<2x84xf32>
    %194 = arith.addf %191, %193 : vector<2x84xf32>
    %cst_146 = arith.constant 0.000000e+00 : f32
    %195 = vector.broadcast %cst_146 : f32 to vector<2x84xf32>
    %196 = arith.maximumf %194, %195 : vector<2x84xf32>
    %c0_147 = arith.constant 0 : index
    %c0_148 = arith.constant 0 : index
    %197 = vector.load %arg8[%c0_147, %c0_148] : memref<84x10xf32, #tpu.memory_space<vmem>>, vector<84x10xf32>
    %cst_149 = arith.constant dense<0.000000e+00> : vector<2x10xf32>
    %198 = tpu.matmul %196, %197, %cst_149 {dimension_numbers = #tpu.dot_dimension_numbers<[1], [0], [0], [1], [0, 0, 1, 1], [], []>} : vector<2x84xf32>, vector<84x10xf32>, vector<2x10xf32> -> vector<2x10xf32>
    %c0_150 = arith.constant 0 : index
    %c0_151 = arith.constant 0 : index
    %199 = vector.load %arg9[%c0_150, %c0_151] : memref<1x10xf32, #tpu.memory_space<vmem>>, vector<1x10xf32>
    %200 = vector.broadcast %199 : vector<1x10xf32> to vector<2x10xf32>
    %201 = arith.addf %198, %200 : vector<2x10xf32>
    %c0_152 = arith.constant 0 : index
    %c0_153 = arith.constant 0 : index
    %202 = vector.load %arg10[%c0_152, %c0_153] : memref<2x10xf32, #tpu.memory_space<vmem>>, vector<2x10xf32>
    tpu.vector_store %arg10[%c0_152, %c0_153], %201 {strides = array<i32>} : memref<2x10xf32, #tpu.memory_space<vmem>>, vector<2x10xf32>,
    return
  }
  func.func @transform_0(%arg0: i32) -> (i32, i32) {
    %c0_i32 = arith.constant 0 : i32
    %c0_i32_0 = arith.constant 0 : i32
    %c0_i32_1 = arith.constant 0 : i32
    return %c0_i32, %c0_i32_0 : i32, i32
  }
  func.func @transform_1(%arg0: i32) -> (i32, i32) {
    %c0_i32 = arith.constant 0 : i32
    %c0_i32_0 = arith.constant 0 : i32
    %c0_i32_1 = arith.constant 0 : i32
    return %c0_i32, %c0_i32_0 : i32, i32
  }
  func.func @transform_2(%arg0: i32) -> (i32, i32) {
    %c0_i32 = arith.constant 0 : i32
    %c0_i32_0 = arith.constant 0 : i32
    %c0_i32_1 = arith.constant 0 : i32
    return %c0_i32, %c0_i32_0 : i32, i32
  }
  func.func @transform_3(%arg0: i32) -> (i32, i32) {
    %c0_i32 = arith.constant 0 : i32
    %c0_i32_0 = arith.constant 0 : i32
    %c0_i32_1 = arith.constant 0 : i32
    return %c0_i32, %c0_i32_0 : i32, i32
  }
  func.func @transform_4(%arg0: i32) -> (i32, i32) {
    %c0_i32 = arith.constant 0 : i32
    %c0_i32_0 = arith.constant 0 : i32
    %c0_i32_1 = arith.constant 0 : i32
    return %c0_i32, %c0_i32_0 : i32, i32
  }
  func.func @transform_5(%arg0: i32) -> (i32, i32) {
    %c0_i32 = arith.constant 0 : i32
    %c0_i32_0 = arith.constant 0 : i32
    %c0_i32_1 = arith.constant 0 : i32
    return %c0_i32, %c0_i32_0 : i32, i32
  }
  func.func @transform_6(%arg0: i32) -> (i32, i32) {
    %c0_i32 = arith.constant 0 : i32
    %c0_i32_0 = arith.constant 0 : i32
    %c0_i32_1 = arith.constant 0 : i32
    return %c0_i32, %c0_i32_0 : i32, i32
  }
  func.func @transform_7(%arg0: i32) -> (i32, i32) {
    %c0_i32 = arith.constant 0 : i32
    %c0_i32_0 = arith.constant 0 : i32
    %c0_i32_1 = arith.constant 0 : i32
    return %c0_i32, %c0_i32_0 : i32, i32
  }
  func.func @transform_8(%arg0: i32) -> (i32, i32) {
    %c0_i32 = arith.constant 0 : i32
    %c0_i32_0 = arith.constant 0 : i32
    %c0_i32_1 = arith.constant 0 : i32
    return %c0_i32, %c0_i32_0 : i32, i32
  }
  func.func @transform_9(%arg0: i32) -> (i32, i32) {
    %c0_i32 = arith.constant 0 : i32
    %c0_i32_0 = arith.constant 0 : i32
    %c0_i32_1 = arith.constant 0 : i32
    return %c0_i32, %c0_i32_0 : i32, i32
  }
}

</mosaic_0001>

<llo_original>
// kernel: nas_forward.1
$region0: #{nas_forward.1}
  #allocation0 [shape = 'u32[]', space=smem, size = 0x4, offset = 0x4, fixed_abs, tag = 'smem constant byte address 0x4 - core index']
  #allocation1 [shape = 'u32[144,128]{1,0:T(1,128)}', space=vmem, size = 0x12000, scoped, tag = 'internal scratch']
  #allocation2 [shape = 'f32[200,256]{1,0:T(8,128)}', space=vmem, size = 0x32000, scoped, tag = 'scratch operand']
  #allocation3 [shape = 'f32[2,2048]{1,0:T(2,128)}', space=vmem, size = 0x4000, scoped, tag = 'scratch operand']
  %s0 = inlined_call_operand.vmem [shape: bf16[100,384], index: 0, kind: input, shape index: {}]
  %s1 = inlined_call_operand.vmem [shape: bf16[32,100], index: 1, kind: input, shape index: {}]
  %s2 = inlined_call_operand.vmem [shape: f32[8,1], index: 2, kind: input, shape index: {}]
  %s3 = inlined_call_operand.vmem [shape: bf16[16,200], index: 3, kind: input, shape index: {}]
  %s4 = inlined_call_operand.vmem [shape: f32[16,1], index: 4, kind: input, shape index: {}]
  %s5 = inlined_call_operand.vmem [shape: bf16[2048,84], index: 5, kind: input, shape index: {}]
  %s6 = inlined_call_operand.vmem [shape: f32[1,84], index: 6, kind: input, shape index: {}]
  %s7 = inlined_call_operand.vmem [shape: f32[84,10], index: 7, kind: input, shape index: {}]
  %s8 = inlined_call_operand.vmem [shape: f32[1,10], index: 8, kind: input, shape index: {}]
  %s9 = inlined_call_operand.hbm [shape: f32[2,10], index: 9, kind: output, shape index: {}]
  %s10 = sld [smem:[#allocation0]]
  $region46: #{nas_forward.1} parent=0
    _
  %s12 = ssub.s32 1, %s10
  %s13 = scalar_select 0, %s12, %s10
  $region1: #{nas_forward.1} parent=0
    #allocation4 [shape = 'u8[1024]{0}', space=vmem, size = 0x400, scoped, tag = 'output window, operand 0, single buffered']
    #allocation5 [shape = 's32[1]{0}', space=sflag, size = 0x4, scoped, tag = 'scoped memory for nas_forward.1']
    %14 = vsyncpa [#allocation5], 0
    // Predicated region
    $region2: #{nas_forward.1} parent=1 // pred_check
      _
    $region3: #{nas_forward.1} parent=1 // pred_check_branch
      %16 = sbr.rel (0) target = $region5
    $region4: #{nas_forward.1} parent=1 // pred_region
      _
    $region5: #{nas_forward.1} parent=1 // pred_fallthru
      _
    // Predicated region
    $region6: #{nas_forward.1} parent=1 // pred_check
      _
    $region7: #{nas_forward.1} parent=1 // pred_check_branch
      %18 = sbr.rel (0) target = $region9
    $region8: #{nas_forward.1} parent=1 // pred_region
      _
    $region9: #{nas_forward.1} parent=1 // pred_fallthru
      _
    // Predicated region
    $region10: #{nas_forward.1} parent=1 // pred_check
      _
    $region11: #{nas_forward.1} parent=1 // pred_check_branch
      %20 = sbr.rel (0) target = $region13
    $region12: #{nas_forward.1} parent=1 // pred_region
      _
    $region13: #{nas_forward.1} parent=1 // pred_fallthru
      _
    // Predicated region
    $region14: #{nas_forward.1} parent=1 // pred_check
      _
    $region15: #{nas_forward.1} parent=1 // pred_check_branch
      %22 = sbr.rel (0) target = $region17
    $region16: #{nas_forward.1} parent=1 // pred_region
      _
    $region17: #{nas_forward.1} parent=1 // pred_fallthru
      _
    // Predicated region
    $region18: #{nas_forward.1} parent=1 // pred_check
      _
    $region19: #{nas_forward.1} parent=1 // pred_check_branch
      %24 = sbr.rel (0) target = $region21
    $region20: #{nas_forward.1} parent=1 // pred_region
      _
    $region21: #{nas_forward.1} parent=1 // pred_fallthru
      _
    // Predicated region
    $region22: #{nas_forward.1} parent=1 // pred_check
      _
    $region23: #{nas_forward.1} parent=1 // pred_check_branch
      %26 = sbr.rel (0) target = $region25
    $region24: #{nas_forward.1} parent=1 // pred_region
      _
    $region25: #{nas_forward.1} parent=1 // pred_fallthru
      _
    // Predicated region
    $region26: #{nas_forward.1} parent=1 // pred_check
      _
    $region27: #{nas_forward.1} parent=1 // pred_check_branch
      %28 = sbr.rel (0) target = $region29
    $region28: #{nas_forward.1} parent=1 // pred_region
      _
    $region29: #{nas_forward.1} parent=1 // pred_fallthru
      _
    // Predicated region
    $region30: #{nas_forward.1} parent=1 // pred_check
      _
    $region31: #{nas_forward.1} parent=1 // pred_check_branch
      %30 = sbr.rel (0) target = $region33
    $region32: #{nas_forward.1} parent=1 // pred_region
      _
    $region33: #{nas_forward.1} parent=1 // pred_fallthru
      _
    // Predicated region
    $region34: #{nas_forward.1} parent=1 // pred_check
      _
    $region35: #{nas_forward.1} parent=1 // pred_check_branch
      %32 = sbr.rel (0) target = $region37
    $region36: #{nas_forward.1} parent=1 // pred_region
      _
    $region37: #{nas_forward.1} parent=1 // pred_fallthru
      _
    %v34 = vld [vmem:[%s1] sm:$0xf]
    %v35 = vld [vmem:[%s1 + $0x4] sm:$0xf]
    %v36 = vld [vmem:[%s1 + $0x8] sm:$0xf]
    %v37 = vld [vmem:[%s1 + $0xc] sm:$0xf]
    %v38 = vld [vmem:[%s0] sm:$0xff]
    %v39 = vld [vmem:[%s0 + $0x8] sm:$0xf]
    %v40 = vld [vmem:[%s0 + $0xc] sm:$0xff]
    %v41 = vld [vmem:[%s0 + $0x14] sm:$0xf]
    %v42 = vld [vmem:[%s0 + $0x18] sm:$0xff]
    %v43 = vld [vmem:[%s0 + $0x20] sm:$0xf]
    %v44 = vld [vmem:[%s0 + $0x24] sm:$0xff]
    %v45 = vld [vmem:[%s0 + $0x2c] sm:$0xf]
    %v46 = vld [vmem:[%s0 + $0x30] sm:$0xff]
    %v47 = vld [vmem:[%s0 + $0x38] sm:$0xf]
    %v48 = vld [vmem:[%s0 + $0x3c] sm:$0xff]
    %v49 = vld [vmem:[%s0 + $0x44] sm:$0xf]
    %v50 = vld [vmem:[%s0 + $0x48] sm:$0xff]
    %v51 = vld [vmem:[%s0 + $0x50] sm:$0xf]
    %v52 = vld [vmem:[%s0 + $0x54] sm:$0xff]
    %v53 = vld [vmem:[%s0 + $0x5c] sm:$0xf]
    %v54 = vld [vmem:[%s0 + $0x60] sm:$0xff]
    %v55 = vld [vmem:[%s0 + $0x68] sm:$0xf]
    %v56 = vld [vmem:[%s0 + $0x6c] sm:$0xff]
    %v57 = vld [vmem:[%s0 + $0x74] sm:$0xf]
    %v58 = vld [vmem:[%s0 + $0x78] sm:$0xff]
    %v59 = vld [vmem:[%s0 + $0x80] sm:$0xf]
    %v60 = vld [vmem:[%s0 + $0x84] sm:$0xff]
    %v61 = vld [vmem:[%s0 + $0x8c] sm:$0xf]
    %v62 = vld [vmem:[%s0 + $0x90] sm:$0x33]
    %v63 = vld [vmem:[%s0 + $0x98] sm:$0x3]
    %v68 = vunpack.c.l.b16 %v34
    %v69 = vunpack.c.l.b16 %v35
    %v70 = vunpack.c.l.b16 %v36
    %v71 = vunpack.c.l.b16 %v37
    %v72 = vpack.c.b16 %v69, %v68
    %v73 = vpack.c.b16 %v71, %v70
    %v100 = vunpack.c.l.b16 %v38
    %v101 = vunpack.c.h.b16 %v38
    %v102 = vunpack.c.l.b16 %v39
    %v103 = vunpack.c.l.b16 %v40
    %v104 = vunpack.c.h.b16 %v40
    %v105 = vunpack.c.l.b16 %v41
    %v106 = vunpack.c.l.b16 %v42
    %v107 = vunpack.c.h.b16 %v42
    %v108 = vunpack.c.l.b16 %v43
    %v109 = vunpack.c.l.b16 %v44
    %v110 = vunpack.c.h.b16 %v44
    %v111 = vunpack.c.l.b16 %v45
    %v112 = vunpack.c.l.b16 %v46
    %v113 = vunpack.c.h.b16 %v46
    %v114 = vunpack.c.l.b16 %v47
    %v115 = vunpack.c.l.b16 %v48
    %v116 = vunpack.c.h.b16 %v48
    %v117 = vunpack.c.l.b16 %v49
    %v118 = vunpack.c.l.b16 %v50
    %v119 = vunpack.c.h.b16 %v50
    %v120 = vunpack.c.l.b16 %v51
    %v121 = vunpack.c.l.b16 %v52
    %v122 = vunpack.c.h.b16 %v52
    %v123 = vunpack.c.l.b16 %v53
    %v124 = vunpack.c.l.b16 %v54
    %v125 = vunpack.c.h.b16 %v54
    %v126 = vunpack.c.l.b16 %v55
    %v127 = vunpack.c.l.b16 %v56
    %v128 = vunpack.c.h.b16 %v56
    %v129 = vunpack.c.l.b16 %v57
    %v130 = vunpack.c.l.b16 %v58
    %v131 = vunpack.c.h.b16 %v58
    %v132 = vunpack.c.l.b16 %v59
    %v133 = vunpack.c.l.b16 %v60
    %v134 = vunpack.c.h.b16 %v60
    %v135 = vunpack.c.l.b16 %v61
    %v136 = vunpack.c.l.b16 %v62
    %v137 = vunpack.c.h.b16 %v62
    %v138 = vunpack.c.l.b16 %v63
    %v139 = vpack.c.b16 %v103, %v100
    %v140 = vpack.c.b16 %v104, %v101
    %v141 = vpack.c.b16 %v105, %v102
    %v142 = vpack.c.b16 %v109, %v106
    %v143 = vpack.c.b16 %v110, %v107
    %v144 = vpack.c.b16 %v111, %v108
    %v145 = vpack.c.b16 %v115, %v112
    %v146 = vpack.c.b16 %v116, %v113
    %v147 = vpack.c.b16 %v117, %v114
    %v148 = vpack.c.b16 %v121, %v118
    %v149 = vpack.c.b16 %v122, %v119
    %v150 = vpack.c.b16 %v123, %v120
    %v151 = vpack.c.b16 %v127, %v124
    %v152 = vpack.c.b16 %v128, %v125
    %v153 = vpack.c.b16 %v129, %v126
    %v154 = vpack.c.b16 %v133, %v130
    %v155 = vpack.c.b16 %v134, %v131
    %v156 = vpack.c.b16 %v135, %v132
    %v157 = vpack.c.b16 %v136, %v136
    %v158 = vpack.c.b16 %v137, %v137
    %v159 = vpack.c.b16 %v138, %v138
    %vm178 = vcmask 818176
    %v180 = vsel %vm178, %v72, 0
    %v183 = vsel %vm178, %v73, 0
    %vm185 = vcmask 1041408
    %v187 = vsel %vm185, %v157, 0
    %v190 = vsel %vm185, %v158, 0
    %v193 = vsel %vm185, %v159, 0
    %195 = vmatprep.subr.bf16.mxu0 %v140
    %196 = vmatpush1.bf16.msra.mxu0 %v139
    %197 = vmatprep.subr.bf16.mxu0 %v143
    %198 = vmatpush1.bf16.msra.mxu0 %v142
    %199 = vmatprep.subr.bf16.mxu0 %v146
    %200 = vmatpush1.bf16.msra.mxu0 %v145
    %201 = vmatprep.subr.bf16.mxu0 %v149
    %202 = vmatpush1.bf16.msra.mxu0 %v148
    %203 = vmatprep.subr.bf16.mxu0 %v152
    %204 = vmatpush1.bf16.msra.mxu0 %v151
    %205 = vmatprep.subr.bf16.mxu0 %v155
    %206 = vmatpush1.bf16.msra.mxu0 %v154
    %207 = vmatprep.subr.bf16.mxu0 %v190
    %208 = vmatpush1.bf16.msra.mxu0 %v187
    %209 = vmatprep.subr.bf16.mxu0 0
    %210 = vmatpush1.bf16.msra.mxu0 0
    %211 = vmatprep.subr.bf16.mxu0 0
    %212 = vmatpush1.bf16.msra.mxu0 0
    %213 = vmatprep.subr.bf16.mxu0 0
    %214 = vmatpush1.bf16.msra.mxu0 0
    %215 = vmatprep.subr.bf16.mxu0 0
    %216 = vmatpush1.bf16.msra.mxu0 0
    %217 = vmatprep.subr.bf16.mxu0 0
    %218 = vmatpush1.bf16.msra.mxu0 0
    %219 = vmatprep.subr.bf16.mxu0 0
    %220 = vmatpush1.bf16.msra.mxu0 0
    %221 = vmatprep.subr.bf16.mxu0 0
    %222 = vmatpush1.bf16.msra.mxu0 0
    %223 = vmatprep.subr.bf16.mxu0 0
    %224 = vmatpush1.bf16.msra.mxu0 0
    %225 = vmatprep.subr.bf16.mxu0 0
    %226 = vmatpush1.bf16.msra.mxu0 0
    %227 = vmatprep.mubr.bf16.mxu0 0
    %228 = vmatmul.mubr.bf16.gmra.mrb[0].mxu0 %v180
    %v229 = vpop.f32.mrb[0].mxu0
    %v230 = vadd.f32 0.0, %v229
    %v231 = vpop.f32.mrb[0].mxu0
    %v232 = vadd.f32 0.0, %v231
    %v233 = vpop.f32.mrb[0].mxu0
    %v234 = vadd.f32 0.0, %v233
    %v235 = vpop.f32.mrb[0].mxu0
    %v236 = vadd.f32 0.0, %v235
    %237 = vmatprep.mubr.bf16.mxu0 0
    %238 = vmatmul.mubr.bf16.gmra.mrb[0].mxu0 %v183
    %v239 = vpop.f32.mrb[0].mxu0
    %v240 = vadd.f32 0.0, %v239
    %v241 = vpop.f32.mrb[0].mxu0
    %v242 = vadd.f32 0.0, %v241
    %v243 = vpop.f32.mrb[0].mxu0
    %v244 = vadd.f32 0.0, %v243
    %v245 = vpop.f32.mrb[0].mxu0
    %v246 = vadd.f32 0.0, %v245
    %247 = vdwg.mxu0
    %248 = vmatprep.subr.bf16.mxu0 0
    %249 = vmatpush1.bf16.msra.mxu0 %v141
    %250 = vmatprep.subr.bf16.mxu0 0
    %251 = vmatpush1.bf16.msra.mxu0 %v144
    %252 = vmatprep.subr.bf16.mxu0 0
    %253 = vmatpush1.bf16.msra.mxu0 %v147
    %254 = vmatprep.subr.bf16.mxu0 0
    %255 = vmatpush1.bf16.msra.mxu0 %v150
    %256 = vmatprep.subr.bf16.mxu0 0
    %257 = vmatpush1.bf16.msra.mxu0 %v153
    %258 = vmatprep.subr.bf16.mxu0 0
    %259 = vmatpush1.bf16.msra.mxu0 %v156
    %260 = vmatprep.subr.bf16.mxu0 0
    %261 = vmatpush1.bf16.msra.mxu0 %v193
    %262 = vmatprep.subr.bf16.mxu0 0
    %263 = vmatpush1.bf16.msra.mxu0 0
    %264 = vmatprep.subr.bf16.mxu0 0
    %265 = vmatpush1.bf16.msra.mxu0 0
    %266 = vmatprep.subr.bf16.mxu0 0
    %267 = vmatpush1.bf16.msra.mxu0 0
    %268 = vmatprep.subr.bf16.mxu0 0
    %269 = vmatpush1.bf16.msra.mxu0 0
    %270 = vmatprep.subr.bf16.mxu0 0
    %271 = vmatpush1.bf16.msra.mxu0 0
    %272 = vmatprep.subr.bf16.mxu0 0
    %273 = vmatpush1.bf16.msra.mxu0 0
    %274 = vmatprep.subr.bf16.mxu0 0
    %275 = vmatpush1.bf16.msra.mxu0 0
    %276 = vmatprep.subr.bf16.mxu0 0
    %277 = vmatpush1.bf16.msra.mxu0 0
    %278 = vmatprep.subr.bf16.mxu0 0
    %279 = vmatpush1.bf16.msra.mxu0 0
    %280 = vmatprep.mubr.bf16.mxu0 0
    %281 = vmatmul.mubr.bf16.gmra.mrb[0].mxu0 %v180
    %v282 = vpop.f32.mrb[0].mxu0
    %v283 = vadd.f32 0.0, %v282
    %v284 = vpop.f32.mrb[0].mxu0
    %v285 = vpop.f32.mrb[0].mxu0
    %v286 = vadd.f32 0.0, %v285
    %v287 = vpop.f32.mrb[0].mxu0
    %288 = vmatprep.mubr.bf16.mxu0 0
    %289 = vmatmul.mubr.bf16.gmra.mrb[0].mxu0 %v183
    %v290 = vpop.f32.mrb[0].mxu0
    %v291 = vadd.f32 0.0, %v290
    %v292 = vpop.f32.mrb[0].mxu0
    %v293 = vpop.f32.mrb[0].mxu0
    %v294 = vadd.f32 0.0, %v293
    %v295 = vpop.f32.mrb[0].mxu0
    %296 = vdwg.mxu0
    %v297 = vmax.f32 %v230, %v234
    %v298 = vmax.f32 %v232, %v236
    %v299 = vmax.f32 %v283, %v286
    %v300 = vmax.f32 %v240, %v244
    %v301 = vmax.f32 %v242, %v246
    %v302 = vmax.f32 %v291, %v294
    %v303 = vmax.f32 %v297, %v300
    %v304 = vmax.f32 %v298, %v301
    %v305 = vmax.f32 %v299, %v302
    %v306 = vld [vmem:[%s2] sm:$0xff]
    %308 = vset.pattern.permute.xlu0 0
    %309 = vperm.xlu0 %308, %v306
    %v310 = vpop.permute.xlu0 %309
    %v312 = vadd.f32 %v303, %v310
    %v313 = vadd.f32 %v304, %v310
    %v314 = vadd.f32 %v305, %v310
    %v315 = vmax.f32 %v312, 0.0
    %v316 = vmax.f32 %v313, 0.0
    %v317 = vmax.f32 %v314, 0.0
    %318 = vst [vmem:[#allocation2] sm:$0xff] %v315
    %321 = vrot.lane.b32.xlu0 %v315, 127
    %v322 = vpop.permute.xlu0 %321
    %323 = vrot.lane.b32.xlu0 %v316, 127
    %v324 = vpop.permute.xlu0 %323
    %vm325 = vcmask 1039360
    %v326 = vsel %vm325, %v322, %v324
    %328 = vst [vmem:[#allocation2 + $0x10] sm:$0xff] %v326
    %329 = vrot.lane.b32.xlu0 %v315, 126
    %v330 = vpop.permute.xlu0 %329
    %331 = vrot.lane.b32.xlu0 %v316, 126
    %v332 = vpop.permute.xlu0 %331
    %vm333 = vcmask 1031168
    %v334 = vsel %vm333, %v330, %v332
    %336 = vst [vmem:[#allocation2 + $0x20] sm:$0xff] %v334
    %337 = vrot.lane.b32.xlu0 %v315, 125
    %v338 = vpop.permute.xlu0 %337
    %339 = vrot.lane.b32.xlu0 %v316, 125
    %v340 = vpop.permute.xlu0 %339
    %vm341 = vcmask 1022976
    %v342 = vsel %vm341, %v338, %v340
    %344 = vst [vmem:[#allocation2 + $0x30] sm:$0xff] %v342
    %345 = vrot.lane.b32.xlu0 %v315, 124
    %v346 = vpop.permute.xlu0 %345
    %347 = vrot.lane.b32.xlu0 %v316, 124
    %v348 = vpop.permute.xlu0 %347
    %vm349 = vcmask 1014784
    %v350 = vsel %vm349, %v346, %v348
    %352 = vst [vmem:[#allocation2 + $0x40] sm:$0xff] %v350
    %353 = vrot.lane.b32.xlu0 %v315, 114
    %v354 = vpop.permute.xlu0 %353
    %355 = vrot.lane.b32.xlu0 %v316, 114
    %v356 = vpop.permute.xlu0 %355
    %vm357 = vcmask 932864
    %v358 = vsel %vm357, %v354, %v356
    %360 = vst [vmem:[#allocation2 + $0x50] sm:$0xff] %v358
    %361 = vrot.lane.b32.xlu0 %v315, 113
    %v362 = vpop.permute.xlu0 %361
    %363 = vrot.lane.b32.xlu0 %v316, 113
    %v364 = vpop.permute.xlu0 %363
    %vm365 = vcmask 924672
    %v366 = vsel %vm365, %v362, %v364
    %368 = vst [vmem:[#allocation2 + $0x60] sm:$0xff] %v366
    %369 = vrot.lane.b32.xlu0 %v315, 112
    %v370 = vpop.permute.xlu0 %369
    %371 = vrot.lane.b32.xlu0 %v316, 112
    %v372 = vpop.permute.xlu0 %371
    %vm373 = vcmask 916480
    %v374 = vsel %vm373, %v370, %v372
    %376 = vst [vmem:[#allocation2 + $0x70] sm:$0xff] %v374
    %377 = vrot.lane.b32.xlu0 %v315, 111
    %v378 = vpop.permute.xlu0 %377
    %379 = vrot.lane.b32.xlu0 %v316, 111
    %v380 = vpop.permute.xlu0 %379
    %vm381 = vcmask 908288
    %v382 = vsel %vm381, %v378, %v380
    %384 = vst [vmem:[#allocation2 + $0x80] sm:$0xff] %v382
    %385 = vrot.lane.b32.xlu0 %v315, 110
    %v386 = vpop.permute.xlu0 %385
    %387 = vrot.lane.b32.xlu0 %v316, 110
    %v388 = vpop.permute.xlu0 %387
    %vm389 = vcmask 900096
    %v390 = vsel %vm389, %v386, %v388
    %392 = vst [vmem:[#allocation2 + $0x90] sm:$0xff] %v390
    %393 = vrot.lane.b32.xlu0 %v315, 100
    %v394 = vpop.permute.xlu0 %393
    %395 = vrot.lane.b32.xlu0 %v316, 100
    %v396 = vpop.permute.xlu0 %395
    %v397 = vsel %vm178, %v394, %v396
    %399 = vst [vmem:[#allocation2 + $0xa0] sm:$0xff] %v397
    %400 = vrot.lane.b32.xlu0 %v315, 99
    %v401 = vpop.permute.xlu0 %400
    %402 = vrot.lane.b32.xlu0 %v316, 99
    %v403 = vpop.permute.xlu0 %402
    %vm404 = vcmask 809984
    %v405 = vsel %vm404, %v401, %v403
    %407 = vst [vmem:[#allocation2 + $0xb0] sm:$0xff] %v405
    %408 = vrot.lane.b32.xlu0 %v315, 98
    %v409 = vpop.permute.xlu0 %408
    %410 = vrot.lane.b32.xlu0 %v316, 98
    %v411 = vpop.permute.xlu0 %410
    %vm412 = vcmask 801792
    %v413 = vsel %vm412, %v409, %v411
    %415 = vst [vmem:[#allocation2 + $0xc0] sm:$0xff] %v413
    %416 = vrot.lane.b32.xlu0 %v315, 97
    %v417 = vpop.permute.xlu0 %416
    %418 = vrot.lane.b32.xlu0 %v316, 97
    %v419 = vpop.permute.xlu0 %418
    %vm420 = vcmask 793600
    %v421 = vsel %vm420, %v417, %v419
    %423 = vst [vmem:[#allocation2 + $0xd0] sm:$0xff] %v421
    %424 = vrot.lane.b32.xlu0 %v315, 96
    %v425 = vpop.permute.xlu0 %424
    %426 = vrot.lane.b32.xlu0 %v316, 96
    %v427 = vpop.permute.xlu0 %426
    %vm428 = vcmask 785408
    %v429 = vsel %vm428, %v425, %v427
    %431 = vst [vmem:[#allocation2 + $0xe0] sm:$0xff] %v429
    %432 = vrot.lane.b32.xlu0 %v315, 86
    %v433 = vpop.permute.xlu0 %432
    %434 = vrot.lane.b32.xlu0 %v316, 86
    %v435 = vpop.permute.xlu0 %434
    %vm436 = vcmask 703488
    %v437 = vsel %vm436, %v433, %v435
    %439 = vst [vmem:[#allocation2 + $0xf0] sm:$0xff] %v437
    %440 = vrot.lane.b32.xlu0 %v315, 85
    %v441 = vpop.permute.xlu0 %440
    %442 = vrot.lane.b32.xlu0 %v316, 85
    %v443 = vpop.permute.xlu0 %442
    %vm444 = vcmask 695296
    %v445 = vsel %vm444, %v441, %v443
    %447 = vst [vmem:[#allocation2 + $0x100] sm:$0xff] %v445
    %448 = vrot.lane.b32.xlu0 %v315, 84
    %v449 = vpop.permute.xlu0 %448
    %450 = vrot.lane.b32.xlu0 %v316, 84
    %v451 = vpop.permute.xlu0 %450
    %vm452 = vcmask 687104
    %v453 = vsel %vm452, %v449, %v451
    %455 = vst [vmem:[#allocation2 + $0x110] sm:$0xff] %v453
    %456 = vrot.lane.b32.xlu0 %v315, 83
    %v457 = vpop.permute.xlu0 %456
    %458 = vrot.lane.b32.xlu0 %v316, 83
    %v459 = vpop.permute.xlu0 %458
    %vm460 = vcmask 678912
    %v461 = vsel %vm460, %v457, %v459
    %463 = vst [vmem:[#allocation2 + $0x120] sm:$0xff] %v461
    %464 = vrot.lane.b32.xlu0 %v315, 82
    %v465 = vpop.permute.xlu0 %464
    %466 = vrot.lane.b32.xlu0 %v316, 82
    %v467 = vpop.permute.xlu0 %466
    %vm468 = vcmask 670720
    %v469 = vsel %vm468, %v465, %v467
    %471 = vst [vmem:[#allocation2 + $0x130] sm:$0xff] %v469
    %472 = vrot.lane.b32.xlu0 %v315, 72
    %v473 = vpop.permute.xlu0 %472
    %474 = vrot.lane.b32.xlu0 %v316, 72
    %v475 = vpop.permute.xlu0 %474
    %vm476 = vcmask 588800
    %v477 = vsel %vm476, %v473, %v475
    %479 = vst [vmem:[#allocation2 + $0x140] sm:$0xff] %v477
    %480 = vrot.lane.b32.xlu0 %v315, 71
    %v481 = vpop.permute.xlu0 %480
    %482 = vrot.lane.b32.xlu0 %v316, 71
    %v483 = vpop.permute.xlu0 %482
    %vm484 = vcmask 580608
    %v485 = vsel %vm484, %v481, %v483
    %487 = vst [vmem:[#allocation2 + $0x150] sm:$0xff] %v485
    %488 = vrot.lane.b32.xlu0 %v315, 70
    %v489 = vpop.permute.xlu0 %488
    %490 = vrot.lane.b32.xlu0 %v316, 70
    %v491 = vpop.permute.xlu0 %490
    %vm492 = vcmask 572416
    %v493 = vsel %vm492, %v489, %v491
    %495 = vst [vmem:[#allocation2 + $0x160] sm:$0xff] %v493
    %496 = vrot.lane.b32.xlu0 %v315, 69
    %v497 = vpop.permute.xlu0 %496
    %498 = vrot.lane.b32.xlu0 %v316, 69
    %v499 = vpop.permute.xlu0 %498
    %vm500 = vcmask 564224
    %v501 = vsel %vm500, %v497, %v499
    %503 = vst [vmem:[#allocation2 + $0x170] sm:$0xff] %v501
    %504 = vrot.lane.b32.xlu0 %v315, 68
    %v505 = vpop.permute.xlu0 %504
    %506 = vrot.lane.b32.xlu0 %v316, 68
    %v507 = vpop.permute.xlu0 %506
    %vm508 = vcmask 556032
    %v509 = vsel %vm508, %v505, %v507
    %511 = vst [vmem:[#allocation2 + $0x180] sm:$0xff] %v509
    %513 = vrot.lane.b32.xlu0 %v316, 64
    %v514 = vpop.permute.xlu0 %513
    %515 = vrot.lane.b32.xlu0 %v317, 64
    %v516 = vpop.permute.xlu0 %515
    %vm517 = vcmask 523264
    %v518 = vsel %vm517, %v514, %v516
    %520 = vst [vmem:[#allocation2 + $0x8] sm:$0xff] %v518
    %521 = vrot.lane.b32.xlu0 %v316, 63
    %v522 = vpop.permute.xlu0 %521
    %523 = vrot.lane.b32.xlu0 %v317, 63
    %v524 = vpop.permute.xlu0 %523
    %vm525 = vcmask 515072
    %v526 = vsel %vm525, %v522, %v524
    %528 = vst [vmem:[#allocation2 + $0x18] sm:$0xff] %v526
    %529 = vrot.lane.b32.xlu0 %v316, 62
    %v530 = vpop.permute.xlu0 %529
    %531 = vrot.lane.b32.xlu0 %v317, 62
    %v532 = vpop.permute.xlu0 %531
    %vm533 = vcmask 506880
    %v534 = vsel %vm533, %v530, %v532
    %536 = vst [vmem:[#allocation2 + $0x28] sm:$0xff] %v534
    %537 = vrot.lane.b32.xlu0 %v316, 61
    %v538 = vpop.permute.xlu0 %537
    %539 = vrot.lane.b32.xlu0 %v317, 61
    %v540 = vpop.permute.xlu0 %539
    %vm541 = vcmask 498688
    %v542 = vsel %vm541, %v538, %v540
    %544 = vst [vmem:[#allocation2 + $0x38] sm:$0xff] %v542
    %545 = vrot.lane.b32.xlu0 %v316, 60
    %v546 = vpop.permute.xlu0 %545
    %547 = vrot.lane.b32.xlu0 %v317, 60
    %v548 = vpop.permute.xlu0 %547
    %vm549 = vcmask 490496
    %v550 = vsel %vm549, %v546, %v548
    %552 = vst [vmem:[#allocation2 + $0x48] sm:$0xff] %v550
    %553 = vrot.lane.b32.xlu0 %v316, 50
    %v554 = vpop.permute.xlu0 %553
    %555 = vrot.lane.b32.xlu0 %v317, 50
    %v556 = vpop.permute.xlu0 %555
    %vm557 = vcmask 408576
    %v558 = vsel %vm557, %v554, %v556
    %560 = vst [vmem:[#allocation2 + $0x58] sm:$0xff] %v558
    %561 = vrot.lane.b32.xlu0 %v316, 49
    %v562 = vpop.permute.xlu0 %561
    %563 = vrot.lane.b32.xlu0 %v317, 49
    %v564 = vpop.permute.xlu0 %563
    %vm565 = vcmask 400384
    %v566 = vsel %vm565, %v562, %v564
    %568 = vst [vmem:[#allocation2 + $0x68] sm:$0xff] %v566
    %569 = vrot.lane.b32.xlu0 %v316, 48
    %v570 = vpop.permute.xlu0 %569
    %571 = vrot.lane.b32.xlu0 %v317, 48
    %v572 = vpop.permute.xlu0 %571
    %vm573 = vcmask 392192
    %v574 = vsel %vm573, %v570, %v572
    %576 = vst [vmem:[#allocation2 + $0x78] sm:$0xff] %v574
    %577 = vrot.lane.b32.xlu0 %v316, 47
    %v578 = vpop.permute.xlu0 %577
    %579 = vrot.lane.b32.xlu0 %v317, 47
    %v580 = vpop.permute.xlu0 %579
    %vm581 = vcmask 384000
    %v582 = vsel %vm581, %v578, %v580
    %584 = vst [vmem:[#allocation2 + $0x88] sm:$0xff] %v582
    %585 = vrot.lane.b32.xlu0 %v316, 46
    %v586 = vpop.permute.xlu0 %585
    %587 = vrot.lane.b32.xlu0 %v317, 46
    %v588 = vpop.permute.xlu0 %587
    %vm589 = vcmask 375808
    %v590 = vsel %vm589, %v586, %v588
    %592 = vst [vmem:[#allocation2 + $0x98] sm:$0xff] %v590
    %593 = vrot.lane.b32.xlu0 %v316, 36
    %v594 = vpop.permute.xlu0 %593
    %595 = vrot.lane.b32.xlu0 %v317, 36
    %v596 = vpop.permute.xlu0 %595
    %vm597 = vcmask 293888
    %v598 = vsel %vm597, %v594, %v596
    %600 = vst [vmem:[#allocation2 + $0xa8] sm:$0xff] %v598
    %601 = vrot.lane.b32.xlu0 %v316, 35
    %v602 = vpop.permute.xlu0 %601
    %603 = vrot.lane.b32.xlu0 %v317, 35
    %v604 = vpop.permute.xlu0 %603
    %vm605 = vcmask 285696
    %v606 = vsel %vm605, %v602, %v604
    %608 = vst [vmem:[#allocation2 + $0xb8] sm:$0xff] %v606
    %609 = vrot.lane.b32.xlu0 %v316, 34
    %v610 = vpop.permute.xlu0 %609
    %611 = vrot.lane.b32.xlu0 %v317, 34
    %v612 = vpop.permute.xlu0 %611
    %vm613 = vcmask 277504
    %v614 = vsel %vm613, %v610, %v612
    %616 = vst [vmem:[#allocation2 + $0xc8] sm:$0xff] %v614
    %617 = vrot.lane.b32.xlu0 %v316, 33
    %v618 = vpop.permute.xlu0 %617
    %619 = vrot.lane.b32.xlu0 %v317, 33
    %v620 = vpop.permute.xlu0 %619
    %vm621 = vcmask 269312
    %v622 = vsel %vm621, %v618, %v620
    %624 = vst [vmem:[#allocation2 + $0xd8] sm:$0xff] %v622
    %625 = vrot.lane.b32.xlu0 %v316, 32
    %v626 = vpop.permute.xlu0 %625
    %627 = vrot.lane.b32.xlu0 %v317, 32
    %v628 = vpop.permute.xlu0 %627
    %vm629 = vcmask 261120
    %v630 = vsel %vm629, %v626, %v628
    %632 = vst [vmem:[#allocation2 + $0xe8] sm:$0xff] %v630
    %633 = vrot.lane.b32.xlu0 %v316, 22
    %v634 = vpop.permute.xlu0 %633
    %635 = vrot.lane.b32.xlu0 %v317, 22
    %v636 = vpop.permute.xlu0 %635
    %vm637 = vcmask 179200
    %v638 = vsel %vm637, %v634, %v636
    %640 = vst [vmem:[#allocation2 + $0xf8] sm:$0xff] %v638
    %641 = vrot.lane.b32.xlu0 %v316, 21
    %v642 = vpop.permute.xlu0 %641
    %643 = vrot.lane.b32.xlu0 %v317, 21
    %v644 = vpop.permute.xlu0 %643
    %vm645 = vcmask 171008
    %v646 = vsel %vm645, %v642, %v644
    %648 = vst [vmem:[#allocation2 + $0x108] sm:$0xff] %v646
    %649 = vrot.lane.b32.xlu0 %v316, 20
    %v650 = vpop.permute.xlu0 %649
    %651 = vrot.lane.b32.xlu0 %v317, 20
    %v652 = vpop.permute.xlu0 %651
    %vm653 = vcmask 162816
    %v654 = vsel %vm653, %v650, %v652
    %656 = vst [vmem:[#allocation2 + $0x118] sm:$0xff] %v654
    %657 = vrot.lane.b32.xlu0 %v316, 19
    %v658 = vpop.permute.xlu0 %657
    %659 = vrot.lane.b32.xlu0 %v317, 19
    %v660 = vpop.permute.xlu0 %659
    %vm661 = vcmask 154624
    %v662 = vsel %vm661, %v658, %v660
    %664 = vst [vmem:[#allocation2 + $0x128] sm:$0xff] %v662
    %665 = vrot.lane.b32.xlu0 %v316, 18
    %v666 = vpop.permute.xlu0 %665
    %667 = vrot.lane.b32.xlu0 %v317, 18
    %v668 = vpop.permute.xlu0 %667
    %vm669 = vcmask 146432
    %v670 = vsel %vm669, %v666, %v668
    %672 = vst [vmem:[#allocation2 + $0x138] sm:$0xff] %v670
    %673 = vrot.lane.b32.xlu0 %v316, 8
    %v674 = vpop.permute.xlu0 %673
    %675 = vrot.lane.b32.xlu0 %v317, 8
    %v676 = vpop.permute.xlu0 %675
    %vm677 = vcmask 64512
    %v678 = vsel %vm677, %v674, %v676
    %680 = vst [vmem:[#allocation2 + $0x148] sm:$0xff] %v678
    %681 = vrot.lane.b32.xlu0 %v316, 7
    %v682 = vpop.permute.xlu0 %681
    %683 = vrot.lane.b32.xlu0 %v317, 7
    %v684 = vpop.permute.xlu0 %683
    %vm685 = vcmask 56320
    %v686 = vsel %vm685, %v682, %v684
    %688 = vst [vmem:[#allocation2 + $0x158] sm:$0xff] %v686
    %689 = vrot.lane.b32.xlu0 %v316, 6
    %v690 = vpop.permute.xlu0 %689
    %691 = vrot.lane.b32.xlu0 %v317, 6
    %v692 = vpop.permute.xlu0 %691
    %vm693 = vcmask 48128
    %v694 = vsel %vm693, %v690, %v692
    %696 = vst [vmem:[#allocation2 + $0x168] sm:$0xff] %v694
    %697 = vrot.lane.b32.xlu0 %v316, 5
    %v698 = vpop.permute.xlu0 %697
    %699 = vrot.lane.b32.xlu0 %v317, 5
    %v700 = vpop.permute.xlu0 %699
    %vm701 = vcmask 39936
    %v702 = vsel %vm701, %v698, %v700
    %704 = vst [vmem:[#allocation2 + $0x178] sm:$0xff] %v702
    %705 = vrot.lane.b32.xlu0 %v316, 4
    %v706 = vpop.permute.xlu0 %705
    %707 = vrot.lane.b32.xlu0 %v317, 4
    %v708 = vpop.permute.xlu0 %707
    %vm709 = vcmask 31744
    %v710 = vsel %vm709, %v706, %v708
    %712 = vst [vmem:[#allocation2 + $0x188] sm:$0xff] %v710
    %v713 = vld [vmem:[%s3] sm:$0xff]
    %v714 = vld [vmem:[%s3 + $0x8] sm:$0xff]
    %v715 = vld [vmem:[#allocation2] sm:$0xff]
    %v716 = vld [vmem:[#allocation2 + $0x8] sm:$0xff]
    %v717 = vld [vmem:[#allocation2 + $0x10] sm:$0xff]
    %v718 = vld [vmem:[#allocation2 + $0x18] sm:$0xff]
    %v719 = vld [vmem:[#allocation2 + $0x20] sm:$0xff]
    %v720 = vld [vmem:[#allocation2 + $0x28] sm:$0xff]
    %v721 = vld [vmem:[#allocation2 + $0x30] sm:$0xff]
    %v722 = vld [vmem:[#allocation2 + $0x38] sm:$0xff]
    %v723 = vld [vmem:[#allocation2 + $0x40] sm:$0xff]
    %v724 = vld [vmem:[#allocation2 + $0x48] sm:$0xff]
    %v725 = vld [vmem:[#allocation2 + $0x50] sm:$0xff]
    %v726 = vld [vmem:[#allocation2 + $0x58] sm:$0xff]
    %v727 = vld [vmem:[#allocation2 + $0x60] sm:$0xff]
    %v728 = vld [vmem:[#allocation2 + $0x68] sm:$0xff]
    %v729 = vld [vmem:[#allocation2 + $0x70] sm:$0xff]
    %v730 = vld [vmem:[#allocation2 + $0x78] sm:$0xff]
    %v731 = vld [vmem:[#allocation2 + $0x80] sm:$0xff]
    %v732 = vld [vmem:[#allocation2 + $0x88] sm:$0xff]
    %v733 = vld [vmem:[#allocation2 + $0x90] sm:$0xff]
    %v734 = vld [vmem:[#allocation2 + $0x98] sm:$0xff]
    %v735 = vld [vmem:[#allocation2 + $0xa0] sm:$0xff]
    %v736 = vld [vmem:[#allocation2 + $0xa8] sm:$0xff]
    %v737 = vld [vmem:[#allocation2 + $0xb0] sm:$0xff]
    %v738 = vld [vmem:[#allocation2 + $0xb8] sm:$0xff]
    %v739 = vld [vmem:[#allocation2 + $0xc0] sm:$0xff]
    %v740 = vld [vmem:[#allocation2 + $0xc8] sm:$0xff]
    %v741 = vld [vmem:[#allocation2 + $0xd0] sm:$0xff]
    %v742 = vld [vmem:[#allocation2 + $0xd8] sm:$0xff]
    %v743 = vld [vmem:[#allocation2 + $0xe0] sm:$0xff]
    %v744 = vld [vmem:[#allocation2 + $0xe8] sm:$0xff]
    %v745 = vld [vmem:[#allocation2 + $0xf0] sm:$0xff]
    %v746 = vld [vmem:[#allocation2 + $0xf8] sm:$0xff]
    %v747 = vld [vmem:[#allocation2 + $0x100] sm:$0xff]
    %v748 = vld [vmem:[#allocation2 + $0x108] sm:$0xff]
    %v749 = vld [vmem:[#allocation2 + $0x110] sm:$0xff]
    %v750 = vld [vmem:[#allocation2 + $0x118] sm:$0xff]
    %v751 = vld [vmem:[#allocation2 + $0x120] sm:$0xff]
    %v752 = vld [vmem:[#allocation2 + $0x128] sm:$0xff]
    %v753 = vld [vmem:[#allocation2 + $0x130] sm:$0xff]
    %v754 = vld [vmem:[#allocation2 + $0x138] sm:$0xff]
    %v755 = vld [vmem:[#allocation2 + $0x140] sm:$0xff]
    %v756 = vld [vmem:[#allocation2 + $0x148] sm:$0xff]
    %v757 = vld [vmem:[#allocation2 + $0x150] sm:$0xff]
    %v758 = vld [vmem:[#allocation2 + $0x158] sm:$0xff]
    %v759 = vld [vmem:[#allocation2 + $0x160] sm:$0xff]
    %v760 = vld [vmem:[#allocation2 + $0x168] sm:$0xff]
    %v761 = vld [vmem:[#allocation2 + $0x170] sm:$0xff]
    %v762 = vld [vmem:[#allocation2 + $0x178] sm:$0xff]
    %v763 = vld [vmem:[#allocation2 + $0x180] sm:$0xff]
    %v764 = vld [vmem:[#allocation2 + $0x188] sm:$0xff]
    %v765 = vpack.c.bf16 %v717, %v715
    %v766 = vpack.c.bf16 %v718, %v716
    %v767 = vpack.c.bf16 %v721, %v719
    %v768 = vpack.c.bf16 %v722, %v720
    %v769 = vpack.c.bf16 %v725, %v723
    %v770 = vpack.c.bf16 %v726, %v724
    %v771 = vpack.c.bf16 %v729, %v727
    %v772 = vpack.c.bf16 %v730, %v728
    %v773 = vpack.c.bf16 %v733, %v731
    %v774 = vpack.c.bf16 %v734, %v732
    %v775 = vpack.c.bf16 %v737, %v735
    %v776 = vpack.c.bf16 %v738, %v736
    %v777 = vpack.c.bf16 %v741, %v739
    %v778 = vpack.c.bf16 %v742, %v740
    %v779 = vpack.c.bf16 %v745, %v743
    %v780 = vpack.c.bf16 %v746, %v744
    %v781 = vpack.c.bf16 %v749, %v747
    %v782 = vpack.c.bf16 %v750, %v748
    %v783 = vpack.c.bf16 %v753, %v751
    %v784 = vpack.c.bf16 %v754, %v752
    %v785 = vpack.c.bf16 %v757, %v755
    %v786 = vpack.c.bf16 %v758, %v756
    %v787 = vpack.c.bf16 %v761, %v759
    %v788 = vpack.c.bf16 %v762, %v760
    %v789 = vpack.c.bf16 %v763, %v763
    %v790 = vpack.c.bf16 %v764, %v764
    %v791 = vld [vmem:[%s4] sm:$0xff]
    %v792 = vld [vmem:[%s4 + $0x8] sm:$0xff]
    %794 = vset.pattern.permute.xlu0 0
    %795 = vperm.xlu0 %794, %v791
    %v796 = vpop.permute.xlu0 %795
    %799 = vset.pattern.permute.xlu0 0
    %800 = vperm.xlu0 %799, %v792
    %v801 = vpop.permute.xlu0 %800
    %v805 = vunpack.c.l.b16 %v713
    %v806 = vunpack.c.h.b16 %v713
    %v807 = vunpack.c.l.b16 %v714
    %v808 = vunpack.c.h.b16 %v714
    %v809 = vpack.c.b16 %v807, %v805
    %v810 = vpack.c.b16 %v808, %v806
    %v813 = vsel %vm476, %v810, 0
    %vm815 = vcmask 1043456
    %v817 = vsel %vm815, %v789, 0
    %v820 = vsel %vm815, %v790, 0
    %822 = vmatprep.subr.bf16.mxu0 %v766
    %823 = vmatpush1.bf16.msra.mxu0 %v765
    %824 = vmatprep.subr.bf16.mxu0 %v768
    %825 = vmatpush1.bf16.msra.mxu0 %v767
    %826 = vmatprep.subr.bf16.mxu0 %v770
    %827 = vmatpush1.bf16.msra.mxu0 %v769
    %828 = vmatprep.subr.bf16.mxu0 %v772
    %829 = vmatpush1.bf16.msra.mxu0 %v771
    %830 = vmatprep.subr.bf16.mxu0 %v774
    %831 = vmatpush1.bf16.msra.mxu0 %v773
    %832 = vmatprep.subr.bf16.mxu0 %v776
    %833 = vmatpush1.bf16.msra.mxu0 %v775
    %834 = vmatprep.subr.bf16.mxu0 %v778
    %835 = vmatpush1.bf16.msra.mxu0 %v777
    %836 = vmatprep.subr.bf16.mxu0 %v780
    %837 = vmatpush1.bf16.msra.mxu0 %v779
    %838 = vmatprep.subr.bf16.mxu0 %v782
    %839 = vmatpush1.bf16.msra.mxu0 %v781
    %840 = vmatprep.subr.bf16.mxu0 %v784
    %841 = vmatpush1.bf16.msra.mxu0 %v783
    %842 = vmatprep.subr.bf16.mxu0 %v786
    %843 = vmatpush1.bf16.msra.mxu0 %v785
    %844 = vmatprep.subr.bf16.mxu0 %v788
    %845 = vmatpush1.bf16.msra.mxu0 %v787
    %846 = vmatprep.subr.bf16.mxu0 %v820
    %847 = vmatpush1.bf16.msra.mxu0 %v817
    %848 = vmatprep.subr.bf16.mxu0 0
    %849 = vmatpush1.bf16.msra.mxu0 0
    %850 = vmatprep.subr.bf16.mxu0 0
    %851 = vmatpush1.bf16.msra.mxu0 0
    %852 = vmatprep.subr.bf16.mxu0 0
    %853 = vmatpush1.bf16.msra.mxu0 0
    %854 = vmatprep.mubr.bf16.mxu0 %v813
    %855 = vmatmul.mubr.bf16.gmra.mrb[0].mxu0 %v809
    %v856 = vpop.f32.mrb[0].mxu0
    %v857 = vadd.f32 %v796, %v856
    %v858 = vpop.f32.mrb[0].mxu0
    %v859 = vadd.f32 %v796, %v858
    %v860 = vpop.f32.mrb[0].mxu0
    %v861 = vadd.f32 %v801, %v860
    %v862 = vpop.f32.mrb[0].mxu0
    %v863 = vadd.f32 %v801, %v862
    %864 = vdwg.mxu0
    %v865 = vmax.f32 %v857, 0.0
    %v866 = vmax.f32 %v859, 0.0
    %v867 = vmax.f32 %v861, 0.0
    %v868 = vmax.f32 %v863, 0.0
    %869 = vst [vmem:[#allocation3] sm:$0x1] %v865
    %v872 = vunpack.c.l.s4 1983009808
    %v873 = vunpack.c.0.s8 %v872
    %v874 = vlaneseq
    %v875 = vshrl.u32 %v874, 7
    %v876 = vsub.s32 %v873, %v875
    %v877 = vrot.slane %v865, %v876
    %v878 = vrot.slane %v877, 7
    %v879 = vrot.slane %v878, 2
    %881 = vst [vmem:[#allocation3 + $0x2] sm:$0x1] %v879
    %v882 = vcombine.high %v877, %v877
    %884 = vst [vmem:[#allocation3 + $0x4] sm:$0x1] %v882
    %v885 = vrot.slane %v882, 7
    %v886 = vrot.slane %v885, 2
    %888 = vst [vmem:[#allocation3 + $0x6] sm:$0x1] %v886
    %v889 = vcombine.high %v865, %v865
    %v891 = vunpack.c.l.s4 1983009808
    %v892 = vunpack.c.0.s8 %v891
    %v893 = vlaneseq
    %v894 = vshrl.u32 %v893, 7
    %v895 = vsub.s32 %v892, %v894
    %v896 = vrot.slane %v889, %v895
    %898 = vst [vmem:[#allocation3 + $0x8] sm:$0x1] %v896
    %v899 = vrot.slane %v896, 7
    %v900 = vrot.slane %v899, 2
    %902 = vst [vmem:[#allocation3 + $0xa] sm:$0x1] %v900
    %v903 = vcombine.high %v896, %v896
    %905 = vst [vmem:[#allocation3 + $0xc] sm:$0x1] %v903
    %v906 = vrot.slane %v903, 7
    %v907 = vrot.slane %v906, 2
    %909 = vst [vmem:[#allocation3 + $0xe] sm:$0x1] %v907
    %910 = vst [vmem:[#allocation3 + $0x10] sm:$0x1] %v867
    %v913 = vunpack.c.l.s4 1983009808
    %v914 = vunpack.c.0.s8 %v913
    %v915 = vlaneseq
    %v916 = vshrl.u32 %v915, 7
    %v917 = vsub.s32 %v914, %v916
    %v918 = vrot.slane %v867, %v917
    %v919 = vrot.slane %v918, 7
    %v920 = vrot.slane %v919, 2
    %922 = vst [vmem:[#allocation3 + $0x12] sm:$0x1] %v920
    %v923 = vcombine.high %v918, %v918
    %925 = vst [vmem:[#allocation3 + $0x14] sm:$0x1] %v923
    %v926 = vrot.slane %v923, 7
    %v927 = vrot.slane %v926, 2
    %929 = vst [vmem:[#allocation3 + $0x16] sm:$0x1] %v927
    %v930 = vcombine.high %v867, %v867
    %v932 = vunpack.c.l.s4 1983009808
    %v933 = vunpack.c.0.s8 %v932
    %v934 = vlaneseq
    %v935 = vshrl.u32 %v934, 7
    %v936 = vsub.s32 %v933, %v935
    %v937 = vrot.slane %v930, %v936
    %939 = vst [vmem:[#allocation3 + $0x18] sm:$0x1] %v937
    %v940 = vrot.slane %v937, 7
    %v941 = vrot.slane %v940, 2
    %943 = vst [vmem:[#allocation3 + $0x1a] sm:$0x1] %v941
    %v944 = vcombine.high %v937, %v937
    %946 = vst [vmem:[#allocation3 + $0x1c] sm:$0x1] %v944
    %v947 = vrot.slane %v944, 7
    %v948 = vrot.slane %v947, 2
    %950 = vst [vmem:[#allocation3 + $0x1e] sm:$0x1] %v948
    %951 = vst [vmem:[#allocation3 + $0x1] sm:$0x1] %v866
    %v954 = vunpack.c.l.s4 1983009808
    %v955 = vunpack.c.0.s8 %v954
    %v956 = vlaneseq
    %v957 = vshrl.u32 %v956, 7
    %v958 = vsub.s32 %v955, %v957
    %v959 = vrot.slane %v866, %v958
    %v960 = vrot.slane %v959, 7
    %v961 = vrot.slane %v960, 2
    %963 = vst [vmem:[#allocation3 + $0x3] sm:$0x1] %v961
    %v964 = vcombine.high %v959, %v959
    %966 = vst [vmem:[#allocation3 + $0x5] sm:$0x1] %v964
    %v967 = vrot.slane %v964, 7
    %v968 = vrot.slane %v967, 2
    %970 = vst [vmem:[#allocation3 + $0x7] sm:$0x1] %v968
    %v971 = vcombine.high %v866, %v866
    %v973 = vunpack.c.l.s4 1983009808
    %v974 = vunpack.c.0.s8 %v973
    %v975 = vlaneseq
    %v976 = vshrl.u32 %v975, 7
    %v977 = vsub.s32 %v974, %v976
    %v978 = vrot.slane %v971, %v977
    %980 = vst [vmem:[#allocation3 + $0x9] sm:$0x1] %v978
    %v981 = vrot.slane %v978, 7
    %v982 = vrot.slane %v981, 2
    %984 = vst [vmem:[#allocation3 + $0xb] sm:$0x1] %v982
    %v985 = vcombine.high %v978, %v978
    %987 = vst [vmem:[#allocation3 + $0xd] sm:$0x1] %v985
    %v988 = vrot.slane %v985, 7
    %v989 = vrot.slane %v988, 2
    %991 = vst [vmem:[#allocation3 + $0xf] sm:$0x1] %v989
    %992 = vst [vmem:[#allocation3 + $0x11] sm:$0x1] %v868
    %v995 = vunpack.c.l.s4 1983009808
    %v996 = vunpack.c.0.s8 %v995
    %v997 = vlaneseq
    %v998 = vshrl.u32 %v997, 7
    %v999 = vsub.s32 %v996, %v998
    %v1000 = vrot.slane %v868, %v999
    %v1001 = vrot.slane %v1000, 7
    %v1002 = vrot.slane %v1001, 2
    %1004 = vst [vmem:[#allocation3 + $0x13] sm:$0x1] %v1002
    %v1005 = vcombine.high %v1000, %v1000
    %1007 = vst [vmem:[#allocation3 + $0x15] sm:$0x1] %v1005
    %v1008 = vrot.slane %v1005, 7
    %v1009 = vrot.slane %v1008, 2
    %1011 = vst [vmem:[#allocation3 + $0x17] sm:$0x1] %v1009
    %v1012 = vcombine.high %v868, %v868
    %v1014 = vunpack.c.l.s4 1983009808
    %v1015 = vunpack.c.0.s8 %v1014
    %v1016 = vlaneseq
    %v1017 = vshrl.u32 %v1016, 7
    %v1018 = vsub.s32 %v1015, %v1017
    %v1019 = vrot.slane %v1012, %v1018
    %1021 = vst [vmem:[#allocation3 + $0x19] sm:$0x1] %v1019
    %v1022 = vrot.slane %v1019, 7
    %v1023 = vrot.slane %v1022, 2
    %1025 = vst [vmem:[#allocation3 + $0x1b] sm:$0x1] %v1023
    %v1026 = vcombine.high %v1019, %v1019
    %1028 = vst [vmem:[#allocation3 + $0x1d] sm:$0x1] %v1026
    %v1029 = vrot.slane %v1026, 7
    %v1030 = vrot.slane %v1029, 2
    %1032 = vst [vmem:[#allocation3 + $0x1f] sm:$0x1] %v1030
    %v1033 = vld [vmem:[#allocation3] sm:$0xff]
    %v1034 = vld [vmem:[#allocation3 + $0x8] sm:$0xff]
    %v1035 = vld [vmem:[#allocation3 + $0x10] sm:$0xff]
    %v1036 = vld [vmem:[#allocation3 + $0x18] sm:$0xff]
    %v1041 = vcombine.high %v1033, %v1033
    %v1043 = vunpack.c.l.s4 1983009808
    %v1044 = vunpack.c.0.s8 %v1043
    %v1045 = vlaneseq
    %v1046 = vshrl.u32 %v1045, 7
    %v1047 = vsub.s32 %v1044, %v1046
    %v1048 = vrot.slane %v1033, %v1047
    %v1050 = vunpack.c.l.s4 1983009808
    %v1051 = vunpack.c.0.s8 %v1050
    %v1052 = vlaneseq
    %v1053 = vshrl.u32 %v1052, 7
    %v1054 = vsub.s32 %v1051, %v1053
    %v1055 = vrot.slane %v1041, %v1054
    %v1056 = vcombine.high %v1048, %v1048
    %v1057 = vcombine.high %v1055, %v1055
    %v1058 = vcombine.high %v1034, %v1034
    %v1060 = vunpack.c.l.s4 1983009808
    %v1061 = vunpack.c.0.s8 %v1060
    %v1062 = vlaneseq
    %v1063 = vshrl.u32 %v1062, 7
    %v1064 = vsub.s32 %v1061, %v1063
    %v1065 = vrot.slane %v1034, %v1064
    %v1067 = vunpack.c.l.s4 1983009808
    %v1068 = vunpack.c.0.s8 %v1067
    %v1069 = vlaneseq
    %v1070 = vshrl.u32 %v1069, 7
    %v1071 = vsub.s32 %v1068, %v1070
    %v1072 = vrot.slane %v1058, %v1071
    %v1073 = vcombine.high %v1065, %v1065
    %v1074 = vcombine.high %v1072, %v1072
    %v1075 = vcombine.high %v1035, %v1035
    %v1077 = vunpack.c.l.s4 1983009808
    %v1078 = vunpack.c.0.s8 %v1077
    %v1079 = vlaneseq
    %v1080 = vshrl.u32 %v1079, 7
    %v1081 = vsub.s32 %v1078, %v1080
    %v1082 = vrot.slane %v1035, %v1081
    %v1084 = vunpack.c.l.s4 1983009808
    %v1085 = vunpack.c.0.s8 %v1084
    %v1086 = vlaneseq
    %v1087 = vshrl.u32 %v1086, 7
    %v1088 = vsub.s32 %v1085, %v1087
    %v1089 = vrot.slane %v1075, %v1088
    %v1090 = vcombine.high %v1082, %v1082
    %v1091 = vcombine.high %v1089, %v1089
    %v1092 = vcombine.high %v1036, %v1036
    %v1094 = vunpack.c.l.s4 1983009808
    %v1095 = vunpack.c.0.s8 %v1094
    %v1096 = vlaneseq
    %v1097 = vshrl.u32 %v1096, 7
    %v1098 = vsub.s32 %v1095, %v1097
    %v1099 = vrot.slane %v1036, %v1098
    %v1101 = vunpack.c.l.s4 1983009808
    %v1102 = vunpack.c.0.s8 %v1101
    %v1103 = vlaneseq
    %v1104 = vshrl.u32 %v1103, 7
    %v1105 = vsub.s32 %v1102, %v1104
    %v1106 = vrot.slane %v1092, %v1105
    %v1107 = vcombine.high %v1099, %v1099
    %v1108 = vcombine.high %v1106, %v1106
    %v1125 = vpack.c.bf16 %v1048, %v1048
    %v1126 = vpack.c.bf16 %v1056, %v1056
    %v1127 = vpack.c.bf16 %v1055, %v1055
    %v1128 = vpack.c.bf16 %v1057, %v1057
    %v1129 = vpack.c.bf16 %v1065, %v1065
    %v1130 = vpack.c.bf16 %v1073, %v1073
    %v1131 = vpack.c.bf16 %v1072, %v1072
    %v1132 = vpack.c.bf16 %v1074, %v1074
    %v1133 = vpack.c.bf16 %v1082, %v1082
    %v1134 = vpack.c.bf16 %v1090, %v1090
    %v1135 = vpack.c.bf16 %v1089, %v1089
    %v1136 = vpack.c.bf16 %v1091, %v1091
    %v1137 = vpack.c.bf16 %v1099, %v1099
    %v1138 = vpack.c.bf16 %v1107, %v1107
    %v1139 = vpack.c.bf16 %v1106, %v1106
    %v1140 = vpack.c.bf16 %v1108, %v1108
    %v1141 = vld [vmem:[%s5] sm:$0xf]
    %v1142 = vld [vmem:[%s5 + $0x4] sm:$0xf]
    %v1143 = vld [vmem:[%s5 + $0x8] sm:$0xf]
    %v1144 = vld [vmem:[%s5 + $0xc] sm:$0xf]
    %v1145 = vld [vmem:[%s5 + $0x10] sm:$0xf]
    %v1146 = vld [vmem:[%s5 + $0x14] sm:$0xf]
    %v1147 = vld [vmem:[%s5 + $0x18] sm:$0xf]
    %v1148 = vld [vmem:[%s5 + $0x1c] sm:$0xf]
    %v1149 = vld [vmem:[%s5 + $0x20] sm:$0xf]
    %v1150 = vld [vmem:[%s5 + $0x24] sm:$0xf]
    %v1151 = vld [vmem:[%s5 + $0x28] sm:$0xf]
    %v1152 = vld [vmem:[%s5 + $0x2c] sm:$0xf]
    %v1153 = vld [vmem:[%s5 + $0x30] sm:$0xf]
    %v1154 = vld [vmem:[%s5 + $0x34] sm:$0xf]
    %v1155 = vld [vmem:[%s5 + $0x38] sm:$0xf]
    %v1156 = vld [vmem:[%s5 + $0x3c] sm:$0xf]
    %v1157 = vld [vmem:[%s5 + $0x40] sm:$0xf]
    %v1158 = vld [vmem:[%s5 + $0x44] sm:$0xf]
    %v1159 = vld [vmem:[%s5 + $0x48] sm:$0xf]
    %v1160 = vld [vmem:[%s5 + $0x4c] sm:$0xf]
    %v1161 = vld [vmem:[%s5 + $0x50] sm:$0xf]
    %v1162 = vld [vmem:[%s5 + $0x54] sm:$0xf]
    %v1163 = vld [vmem:[%s5 + $0x58] sm:$0xf]
    %v1164 = vld [vmem:[%s5 + $0x5c] sm:$0xf]
    %v1165 = vld [vmem:[%s5 + $0x60] sm:$0xf]
    %v1166 = vld [vmem:[%s5 + $0x64] sm:$0xf]
    %v1167 = vld [vmem:[%s5 + $0x68] sm:$0xf]
    %v1168 = vld [vmem:[%s5 + $0x6c] sm:$0xf]
    %v1169 = vld [vmem:[%s5 + $0x70] sm:$0xf]
    %v1170 = vld [vmem:[%s5 + $0x74] sm:$0xf]
    %v1171 = vld [vmem:[%s5 + $0x78] sm:$0xf]
    %v1172 = vld [vmem:[%s5 + $0x7c] sm:$0xf]
    %v1173 = vld [vmem:[%s5 + $0x80] sm:$0xf]
    %v1174 = vld [vmem:[%s5 + $0x84] sm:$0xf]
    %v1175 = vld [vmem:[%s5 + $0x88] sm:$0xf]
    %v1176 = vld [vmem:[%s5 + $0x8c] sm:$0xf]
    %v1177 = vld [vmem:[%s5 + $0x90] sm:$0xf]
    %v1178 = vld [vmem:[%s5 + $0x94] sm:$0xf]
    %v1179 = vld [vmem:[%s5 + $0x98] sm:$0xf]
    %v1180 = vld [vmem:[%s5 + $0x9c] sm:$0xf]
    %v1181 = vld [vmem:[%s5 + $0xa0] sm:$0xf]
    %v1182 = vld [vmem:[%s5 + $0xa4] sm:$0xf]
    %v1183 = vld [vmem:[%s5 + $0xa8] sm:$0xf]
    %v1184 = vld [vmem:[%s5 + $0xac] sm:$0xf]
    %v1185 = vld [vmem:[%s5 + $0xb0] sm:$0xf]
    %v1186 = vld [vmem:[%s5 + $0xb4] sm:$0xf]
    %v1187 = vld [vmem:[%s5 + $0xb8] sm:$0xf]
    %v1188 = vld [vmem:[%s5 + $0xbc] sm:$0xf]
    %v1189 = vld [vmem:[%s5 + $0xc0] sm:$0xf]
    %v1190 = vld [vmem:[%s5 + $0xc4] sm:$0xf]
    %v1191 = vld [vmem:[%s5 + $0xc8] sm:$0xf]
    %v1192 = vld [vmem:[%s5 + $0xcc] sm:$0xf]
    %v1193 = vld [vmem:[%s5 + $0xd0] sm:$0xf]
    %v1194 = vld [vmem:[%s5 + $0xd4] sm:$0xf]
    %v1195 = vld [vmem:[%s5 + $0xd8] sm:$0xf]
    %v1196 = vld [vmem:[%s5 + $0xdc] sm:$0xf]
    %v1197 = vld [vmem:[%s5 + $0xe0] sm:$0xf]
    %v1198 = vld [vmem:[%s5 + $0xe4] sm:$0xf]
    %v1199 = vld [vmem:[%s5 + $0xe8] sm:$0xf]
    %v1200 = vld [vmem:[%s5 + $0xec] sm:$0xf]
    %v1201 = vld [vmem:[%s5 + $0xf0] sm:$0xf]
    %v1202 = vld [vmem:[%s5 + $0xf4] sm:$0xf]
    %v1203 = vld [vmem:[%s5 + $0xf8] sm:$0xf]
    %v1204 = vld [vmem:[%s5 + $0xfc] sm:$0xf]
    %v1205 = vld [vmem:[%s5 + $0x100] sm:$0xf]
    %v1206 = vld [vmem:[%s5 + $0x104] sm:$0xf]
    %v1207 = vld [vmem:[%s5 + $0x108] sm:$0xf]
    %v1208 = vld [vmem:[%s5 + $0x10c] sm:$0xf]
    %v1209 = vld [vmem:[%s5 + $0x110] sm:$0xf]
    %v1210 = vld [vmem:[%s5 + $0x114] sm:$0xf]
    %v1211 = vld [vmem:[%s5 + $0x118] sm:$0xf]
    %v1212 = vld [vmem:[%s5 + $0x11c] sm:$0xf]
    %v1213 = vld [vmem:[%s5 + $0x120] sm:$0xf]
    %v1214 = vld [vmem:[%s5 + $0x124] sm:$0xf]
    %v1215 = vld [vmem:[%s5 + $0x128] sm:$0xf]
    %v1216 = vld [vmem:[%s5 + $0x12c] sm:$0xf]
    %v1217 = vld [vmem:[%s5 + $0x130] sm:$0xf]
    %v1218 = vld [vmem:[%s5 + $0x134] sm:$0xf]
    %v1219 = vld [vmem:[%s5 + $0x138] sm:$0xf]
    %v1220 = vld [vmem:[%s5 + $0x13c] sm:$0xf]
    %v1221 = vld [vmem:[%s5 + $0x140] sm:$0xf]
    %v1222 = vld [vmem:[%s5 + $0x144] sm:$0xf]
    %v1223 = vld [vmem:[%s5 + $0x148] sm:$0xf]
    %v1224 = vld [vmem:[%s5 + $0x14c] sm:$0xf]
    %v1225 = vld [vmem:[%s5 + $0x150] sm:$0xf]
    %v1226 = vld [vmem:[%s5 + $0x154] sm:$0xf]
    %v1227 = vld [vmem:[%s5 + $0x158] sm:$0xf]
    %v1228 = vld [vmem:[%s5 + $0x15c] sm:$0xf]
    %v1229 = vld [vmem:[%s5 + $0x160] sm:$0xf]
    %v1230 = vld [vmem:[%s5 + $0x164] sm:$0xf]
    %v1231 = vld [vmem:[%s5 + $0x168] sm:$0xf]
    %v1232 = vld [vmem:[%s5 + $0x16c] sm:$0xf]
    %v1233 = vld [vmem:[%s5 + $0x170] sm:$0xf]
    %v1234 = vld [vmem:[%s5 + $0x174] sm:$0xf]
    %v1235 = vld [vmem:[%s5 + $0x178] sm:$0xf]
    %v1236 = vld [vmem:[%s5 + $0x17c] sm:$0xf]
    %v1237 = vld [vmem:[%s5 + $0x180] sm:$0xf]
    %v1238 = vld [vmem:[%s5 + $0x184] sm:$0xf]
    %v1239 = vld [vmem:[%s5 + $0x188] sm:$0xf]
    %v1240 = vld [vmem:[%s5 + $0x18c] sm:$0xf]
    %v1241 = vld [vmem:[%s5 + $0x190] sm:$0xf]
    %v1242 = vld [vmem:[%s5 + $0x194] sm:$0xf]
    %v1243 = vld [vmem:[%s5 + $0x198] sm:$0xf]
    %v1244 = vld [vmem:[%s5 + $0x19c] sm:$0xf]
    %v1245 = vld [vmem:[%s5 + $0x1a0] sm:$0xf]
    %v1246 = vld [vmem:[%s5 + $0x1a4] sm:$0xf]
    %v1247 = vld [vmem:[%s5 + $0x1a8] sm:$0xf]
    %v1248 = vld [vmem:[%s5 + $0x1ac] sm:$0xf]
    %v1249 = vld [vmem:[%s5 + $0x1b0] sm:$0xf]
    %v1250 = vld [vmem:[%s5 + $0x1b4] sm:$0xf]
    %v1251 = vld [vmem:[%s5 + $0x1b8] sm:$0xf]
    %v1252 = vld [vmem:[%s5 + $0x1bc] sm:$0xf]
    %v1253 = vld [vmem:[%s5 + $0x1c0] sm:$0xf]
    %v1254 = vld [vmem:[%s5 + $0x1c4] sm:$0xf]
    %v1255 = vld [vmem:[%s5 + $0x1c8] sm:$0xf]
    %v1256 = vld [vmem:[%s5 + $0x1cc] sm:$0xf]
    %v1257 = vld [vmem:[%s5 + $0x1d0] sm:$0xf]
    %v1258 = vld [vmem:[%s5 + $0x1d4] sm:$0xf]
    %v1259 = vld [vmem:[%s5 + $0x1d8] sm:$0xf]
    %v1260 = vld [vmem:[%s5 + $0x1dc] sm:$0xf]
    %v1261 = vld [vmem:[%s5 + $0x1e0] sm:$0xf]
    %v1262 = vld [vmem:[%s5 + $0x1e4] sm:$0xf]
    %v1263 = vld [vmem:[%s5 + $0x1e8] sm:$0xf]
    %v1264 = vld [vmem:[%s5 + $0x1ec] sm:$0xf]
    %v1265 = vld [vmem:[%s5 + $0x1f0] sm:$0xf]
    %v1266 = vld [vmem:[%s5 + $0x1f4] sm:$0xf]
    %v1267 = vld [vmem:[%s5 + $0x1f8] sm:$0xf]
    %v1268 = vld [vmem:[%s5 + $0x1fc] sm:$0xf]
    %v1269 = vld [vmem:[%s5 + $0x200] sm:$0xf]
    %v1270 = vld [vmem:[%s5 + $0x204] sm:$0xf]
    %v1271 = vld [vmem:[%s5 + $0x208] sm:$0xf]
    %v1272 = vld [vmem:[%s5 + $0x20c] sm:$0xf]
    %v1273 = vld [vmem:[%s5 + $0x210] sm:$0xf]
    %v1274 = vld [vmem:[%s5 + $0x214] sm:$0xf]
    %v1275 = vld [vmem:[%s5 + $0x218] sm:$0xf]
    %v1276 = vld [vmem:[%s5 + $0x21c] sm:$0xf]
    %v1277 = vld [vmem:[%s5 + $0x220] sm:$0xf]
    %v1278 = vld [vmem:[%s5 + $0x224] sm:$0xf]
    %v1279 = vld [vmem:[%s5 + $0x228] sm:$0xf]
    %v1280 = vld [vmem:[%s5 + $0x22c] sm:$0xf]
    %v1281 = vld [vmem:[%s5 + $0x230] sm:$0xf]
    %v1282 = vld [vmem:[%s5 + $0x234] sm:$0xf]
    %v1283 = vld [vmem:[%s5 + $0x238] sm:$0xf]
    %v1284 = vld [vmem:[%s5 + $0x23c] sm:$0xf]
    %v1285 = vld [vmem:[%s5 + $0x240] sm:$0xf]
    %v1286 = vld [vmem:[%s5 + $0x244] sm:$0xf]
    %v1287 = vld [vmem:[%s5 + $0x248] sm:$0xf]
    %v1288 = vld [vmem:[%s5 + $0x24c] sm:$0xf]
    %v1289 = vld [vmem:[%s5 + $0x250] sm:$0xf]
    %v1290 = vld [vmem:[%s5 + $0x254] sm:$0xf]
    %v1291 = vld [vmem:[%s5 + $0x258] sm:$0xf]
    %v1292 = vld [vmem:[%s5 + $0x25c] sm:$0xf]
    %v1293 = vld [vmem:[%s5 + $0x260] sm:$0xf]
    %v1294 = vld [vmem:[%s5 + $0x264] sm:$0xf]
    %v1295 = vld [vmem:[%s5 + $0x268] sm:$0xf]
    %v1296 = vld [vmem:[%s5 + $0x26c] sm:$0xf]
    %v1297 = vld [vmem:[%s5 + $0x270] sm:$0xf]
    %v1298 = vld [vmem:[%s5 + $0x274] sm:$0xf]
    %v1299 = vld [vmem:[%s5 + $0x278] sm:$0xf]
    %v1300 = vld [vmem:[%s5 + $0x27c] sm:$0xf]
    %v1301 = vld [vmem:[%s5 + $0x280] sm:$0xf]
    %v1302 = vld [vmem:[%s5 + $0x284] sm:$0xf]
    %v1303 = vld [vmem:[%s5 + $0x288] sm:$0xf]
    %v1304 = vld [vmem:[%s5 + $0x28c] sm:$0xf]
    %v1305 = vld [vmem:[%s5 + $0x290] sm:$0xf]
    %v1306 = vld [vmem:[%s5 + $0x294] sm:$0xf]
    %v1307 = vld [vmem:[%s5 + $0x298] sm:$0xf]
    %v1308 = vld [vmem:[%s5 + $0x29c] sm:$0xf]
    %v1309 = vld [vmem:[%s5 + $0x2a0] sm:$0xf]
    %v1310 = vld [vmem:[%s5 + $0x2a4] sm:$0xf]
    %v1311 = vld [vmem:[%s5 + $0x2a8] sm:$0xf]
    %v1312 = vld [vmem:[%s5 + $0x2ac] sm:$0xf]
    %v1313 = vld [vmem:[%s5 + $0x2b0] sm:$0xf]
    %v1314 = vld [vmem:[%s5 + $0x2b4] sm:$0xf]
    %v1315 = vld [vmem:[%s5 + $0x2b8] sm:$0xf]
    %v1316 = vld [vmem:[%s5 + $0x2bc] sm:$0xf]
    %v1317 = vld [vmem:[%s5 + $0x2c0] sm:$0xf]
    %v1318 = vld [vmem:[%s5 + $0x2c4] sm:$0xf]
    %v1319 = vld [vmem:[%s5 + $0x2c8] sm:$0xf]
    %v1320 = vld [vmem:[%s5 + $0x2cc] sm:$0xf]
    %v1321 = vld [vmem:[%s5 + $0x2d0] sm:$0xf]
    %v1322 = vld [vmem:[%s5 + $0x2d4] sm:$0xf]
    %v1323 = vld [vmem:[%s5 + $0x2d8] sm:$0xf]
    %v1324 = vld [vmem:[%s5 + $0x2dc] sm:$0xf]
    %v1325 = vld [vmem:[%s5 + $0x2e0] sm:$0xf]
    %v1326 = vld [vmem:[%s5 + $0x2e4] sm:$0xf]
    %v1327 = vld [vmem:[%s5 + $0x2e8] sm:$0xf]
    %v1328 = vld [vmem:[%s5 + $0x2ec] sm:$0xf]
    %v1329 = vld [vmem:[%s5 + $0x2f0] sm:$0xf]
    %v1330 = vld [vmem:[%s5 + $0x2f4] sm:$0xf]
    %v1331 = vld [vmem:[%s5 + $0x2f8] sm:$0xf]
    %v1332 = vld [vmem:[%s5 + $0x2fc] sm:$0xf]
    %v1333 = vld [vmem:[%s5 + $0x300] sm:$0xf]
    %v1334 = vld [vmem:[%s5 + $0x304] sm:$0xf]
    %v1335 = vld [vmem:[%s5 + $0x308] sm:$0xf]
    %v1336 = vld [vmem:[%s5 + $0x30c] sm:$0xf]
    %v1337 = vld [vmem:[%s5 + $0x310] sm:$0xf]
    %v1338 = vld [vmem:[%s5 + $0x314] sm:$0xf]
    %v1339 = vld [vmem:[%s5 + $0x318] sm:$0xf]
    %v1340 = vld [vmem:[%s5 + $0x31c] sm:$0xf]
    %v1341 = vld [vmem:[%s5 + $0x320] sm:$0xf]
    %v1342 = vld [vmem:[%s5 + $0x324] sm:$0xf]
    %v1343 = vld [vmem:[%s5 + $0x328] sm:$0xf]
    %v1344 = vld [vmem:[%s5 + $0x32c] sm:$0xf]
    %v1345 = vld [vmem:[%s5 + $0x330] sm:$0xf]
    %v1346 = vld [vmem:[%s5 + $0x334] sm:$0xf]
    %v1347 = vld [vmem:[%s5 + $0x338] sm:$0xf]
    %v1348 = vld [vmem:[%s5 + $0x33c] sm:$0xf]
    %v1349 = vld [vmem:[%s5 + $0x340] sm:$0xf]
    %v1350 = vld [vmem:[%s5 + $0x344] sm:$0xf]
    %v1351 = vld [vmem:[%s5 + $0x348] sm:$0xf]
    %v1352 = vld [vmem:[%s5 + $0x34c] sm:$0xf]
    %v1353 = vld [vmem:[%s5 + $0x350] sm:$0xf]
    %v1354 = vld [vmem:[%s5 + $0x354] sm:$0xf]
    %v1355 = vld [vmem:[%s5 + $0x358] sm:$0xf]
    %v1356 = vld [vmem:[%s5 + $0x35c] sm:$0xf]
    %v1357 = vld [vmem:[%s5 + $0x360] sm:$0xf]
    %v1358 = vld [vmem:[%s5 + $0x364] sm:$0xf]
    %v1359 = vld [vmem:[%s5 + $0x368] sm:$0xf]
    %v1360 = vld [vmem:[%s5 + $0x36c] sm:$0xf]
    %v1361 = vld [vmem:[%s5 + $0x370] sm:$0xf]
    %v1362 = vld [vmem:[%s5 + $0x374] sm:$0xf]
    %v1363 = vld [vmem:[%s5 + $0x378] sm:$0xf]
    %v1364 = vld [vmem:[%s5 + $0x37c] sm:$0xf]
    %v1365 = vld [vmem:[%s5 + $0x380] sm:$0xf]
    %v1366 = vld [vmem:[%s5 + $0x384] sm:$0xf]
    %v1367 = vld [vmem:[%s5 + $0x388] sm:$0xf]
    %v1368 = vld [vmem:[%s5 + $0x38c] sm:$0xf]
    %v1369 = vld [vmem:[%s5 + $0x390] sm:$0xf]
    %v1370 = vld [vmem:[%s5 + $0x394] sm:$0xf]
    %v1371 = vld [vmem:[%s5 + $0x398] sm:$0xf]
    %v1372 = vld [vmem:[%s5 + $0x39c] sm:$0xf]
    %v1373 = vld [vmem:[%s5 + $0x3a0] sm:$0xf]
    %v1374 = vld [vmem:[%s5 + $0x3a4] sm:$0xf]
    %v1375 = vld [vmem:[%s5 + $0x3a8] sm:$0xf]
    %v1376 = vld [vmem:[%s5 + $0x3ac] sm:$0xf]
    %v1377 = vld [vmem:[%s5 + $0x3b0] sm:$0xf]
    %v1378 = vld [vmem:[%s5 + $0x3b4] sm:$0xf]
    %v1379 = vld [vmem:[%s5 + $0x3b8] sm:$0xf]
    %v1380 = vld [vmem:[%s5 + $0x3bc] sm:$0xf]
    %v1381 = vld [vmem:[%s5 + $0x3c0] sm:$0xf]
    %v1382 = vld [vmem:[%s5 + $0x3c4] sm:$0xf]
    %v1383 = vld [vmem:[%s5 + $0x3c8] sm:$0xf]
    %v1384 = vld [vmem:[%s5 + $0x3cc] sm:$0xf]
    %v1385 = vld [vmem:[%s5 + $0x3d0] sm:$0xf]
    %v1386 = vld [vmem:[%s5 + $0x3d4] sm:$0xf]
    %v1387 = vld [vmem:[%s5 + $0x3d8] sm:$0xf]
    %v1388 = vld [vmem:[%s5 + $0x3dc] sm:$0xf]
    %v1389 = vld [vmem:[%s5 + $0x3e0] sm:$0xf]
    %v1390 = vld [vmem:[%s5 + $0x3e4] sm:$0xf]
    %v1391 = vld [vmem:[%s5 + $0x3e8] sm:$0xf]
    %v1392 = vld [vmem:[%s5 + $0x3ec] sm:$0xf]
    %v1393 = vld [vmem:[%s5 + $0x3f0] sm:$0xf]
    %v1394 = vld [vmem:[%s5 + $0x3f4] sm:$0xf]
    %v1395 = vld [vmem:[%s5 + $0x3f8] sm:$0xf]
    %v1396 = vld [vmem:[%s5 + $0x3fc] sm:$0xf]
    %v1397 = vld [vmem:[%s6] sm:$0x1]
    %v1399 = vlaneseq
    %v1400 = vshrl.u32 %v1399, 7
    %v1401 = vsub.s32 0, %v1400
    %v1402 = vrot.slane %v1397, %v1401
    %v1660 = vunpack.c.l.b16 %v1141
    %v1661 = vunpack.c.l.b16 %v1142
    %v1662 = vunpack.c.l.b16 %v1143
    %v1663 = vunpack.c.l.b16 %v1144
    %v1664 = vunpack.c.l.b16 %v1145
    %v1665 = vunpack.c.l.b16 %v1146
    %v1666 = vunpack.c.l.b16 %v1147
    %v1667 = vunpack.c.l.b16 %v1148
    %v1668 = vunpack.c.l.b16 %v1149
    %v1669 = vunpack.c.l.b16 %v1150
    %v1670 = vunpack.c.l.b16 %v1151
    %v1671 = vunpack.c.l.b16 %v1152
    %v1672 = vunpack.c.l.b16 %v1153
    %v1673 = vunpack.c.l.b16 %v1154
    %v1674 = vunpack.c.l.b16 %v1155
    %v1675 = vunpack.c.l.b16 %v1156
    %v1676 = vunpack.c.l.b16 %v1157
    %v1677 = vunpack.c.l.b16 %v1158
    %v1678 = vunpack.c.l.b16 %v1159
    %v1679 = vunpack.c.l.b16 %v1160
    %v1680 = vunpack.c.l.b16 %v1161
    %v1681 = vunpack.c.l.b16 %v1162
    %v1682 = vunpack.c.l.b16 %v1163
    %v1683 = vunpack.c.l.b16 %v1164
    %v1684 = vunpack.c.l.b16 %v1165
    %v1685 = vunpack.c.l.b16 %v1166
    %v1686 = vunpack.c.l.b16 %v1167
    %v1687 = vunpack.c.l.b16 %v1168
    %v1688 = vunpack.c.l.b16 %v1169
    %v1689 = vunpack.c.l.b16 %v1170
    %v1690 = vunpack.c.l.b16 %v1171
    %v1691 = vunpack.c.l.b16 %v1172
    %v1692 = vunpack.c.l.b16 %v1173
    %v1693 = vunpack.c.l.b16 %v1174
    %v1694 = vunpack.c.l.b16 %v1175
    %v1695 = vunpack.c.l.b16 %v1176
    %v1696 = vunpack.c.l.b16 %v1177
    %v1697 = vunpack.c.l.b16 %v1178
    %v1698 = vunpack.c.l.b16 %v1179
    %v1699 = vunpack.c.l.b16 %v1180
    %v1700 = vunpack.c.l.b16 %v1181
    %v1701 = vunpack.c.l.b16 %v1182
    %v1702 = vunpack.c.l.b16 %v1183
    %v1703 = vunpack.c.l.b16 %v1184
    %v1704 = vunpack.c.l.b16 %v1185
    %v1705 = vunpack.c.l.b16 %v1186
    %v1706 = vunpack.c.l.b16 %v1187
    %v1707 = vunpack.c.l.b16 %v1188
    %v1708 = vunpack.c.l.b16 %v1189
    %v1709 = vunpack.c.l.b16 %v1190
    %v1710 = vunpack.c.l.b16 %v1191
    %v1711 = vunpack.c.l.b16 %v1192
    %v1712 = vunpack.c.l.b16 %v1193
    %v1713 = vunpack.c.l.b16 %v1194
    %v1714 = vunpack.c.l.b16 %v1195
    %v1715 = vunpack.c.l.b16 %v1196
    %v1716 = vunpack.c.l.b16 %v1197
    %v1717 = vunpack.c.l.b16 %v1198
    %v1718 = vunpack.c.l.b16 %v1199
    %v1719 = vunpack.c.l.b16 %v1200
    %v1720 = vunpack.c.l.b16 %v1201
    %v1721 = vunpack.c.l.b16 %v1202
    %v1722 = vunpack.c.l.b16 %v1203
    %v1723 = vunpack.c.l.b16 %v1204
    %v1724 = vunpack.c.l.b16 %v1205
    %v1725 = vunpack.c.l.b16 %v1206
    %v1726 = vunpack.c.l.b16 %v1207
    %v1727 = vunpack.c.l.b16 %v1208
    %v1728 = vunpack.c.l.b16 %v1209
    %v1729 = vunpack.c.l.b16 %v1210
    %v1730 = vunpack.c.l.b16 %v1211
    %v1731 = vunpack.c.l.b16 %v1212
    %v1732 = vunpack.c.l.b16 %v1213
    %v1733 = vunpack.c.l.b16 %v1214
    %v1734 = vunpack.c.l.b16 %v1215
    %v1735 = vunpack.c.l.b16 %v1216
    %v1736 = vunpack.c.l.b16 %v1217
    %v1737 = vunpack.c.l.b16 %v1218
    %v1738 = vunpack.c.l.b16 %v1219
    %v1739 = vunpack.c.l.b16 %v1220
    %v1740 = vunpack.c.l.b16 %v1221
    %v1741 = vunpack.c.l.b16 %v1222
    %v1742 = vunpack.c.l.b16 %v1223
    %v1743 = vunpack.c.l.b16 %v1224
    %v1744 = vunpack.c.l.b16 %v1225
    %v1745 = vunpack.c.l.b16 %v1226
    %v1746 = vunpack.c.l.b16 %v1227
    %v1747 = vunpack.c.l.b16 %v1228
    %v1748 = vunpack.c.l.b16 %v1229
    %v1749 = vunpack.c.l.b16 %v1230
    %v1750 = vunpack.c.l.b16 %v1231
    %v1751 = vunpack.c.l.b16 %v1232
    %v1752 = vunpack.c.l.b16 %v1233
    %v1753 = vunpack.c.l.b16 %v1234
    %v1754 = vunpack.c.l.b16 %v1235
    %v1755 = vunpack.c.l.b16 %v1236
    %v1756 = vunpack.c.l.b16 %v1237
    %v1757 = vunpack.c.l.b16 %v1238
    %v1758 = vunpack.c.l.b16 %v1239
    %v1759 = vunpack.c.l.b16 %v1240
    %v1760 = vunpack.c.l.b16 %v1241
    %v1761 = vunpack.c.l.b16 %v1242
    %v1762 = vunpack.c.l.b16 %v1243
    %v1763 = vunpack.c.l.b16 %v1244
    %v1764 = vunpack.c.l.b16 %v1245
    %v1765 = vunpack.c.l.b16 %v1246
    %v1766 = vunpack.c.l.b16 %v1247
    %v1767 = vunpack.c.l.b16 %v1248
    %v1768 = vunpack.c.l.b16 %v1249
    %v1769 = vunpack.c.l.b16 %v1250
    %v1770 = vunpack.c.l.b16 %v1251
    %v1771 = vunpack.c.l.b16 %v1252
    %v1772 = vunpack.c.l.b16 %v1253
    %v1773 = vunpack.c.l.b16 %v1254
    %v1774 = vunpack.c.l.b16 %v1255
    %v1775 = vunpack.c.l.b16 %v1256
    %v1776 = vunpack.c.l.b16 %v1257
    %v1777 = vunpack.c.l.b16 %v1258
    %v1778 = vunpack.c.l.b16 %v1259
    %v1779 = vunpack.c.l.b16 %v1260
    %v1780 = vunpack.c.l.b16 %v1261
    %v1781 = vunpack.c.l.b16 %v1262
    %v1782 = vunpack.c.l.b16 %v1263
    %v1783 = vunpack.c.l.b16 %v1264
    %v1784 = vunpack.c.l.b16 %v1265
    %v1785 = vunpack.c.l.b16 %v1266
    %v1786 = vunpack.c.l.b16 %v1267
    %v1787 = vunpack.c.l.b16 %v1268
    %v1788 = vunpack.c.l.b16 %v1269
    %v1789 = vunpack.c.l.b16 %v1270
    %v1790 = vunpack.c.l.b16 %v1271
    %v1791 = vunpack.c.l.b16 %v1272
    %v1792 = vunpack.c.l.b16 %v1273
    %v1793 = vunpack.c.l.b16 %v1274
    %v1794 = vunpack.c.l.b16 %v1275
    %v1795 = vunpack.c.l.b16 %v1276
    %v1796 = vunpack.c.l.b16 %v1277
    %v1797 = vunpack.c.l.b16 %v1278
    %v1798 = vunpack.c.l.b16 %v1279
    %v1799 = vunpack.c.l.b16 %v1280
    %v1800 = vunpack.c.l.b16 %v1281
    %v1801 = vunpack.c.l.b16 %v1282
    %v1802 = vunpack.c.l.b16 %v1283
    %v1803 = vunpack.c.l.b16 %v1284
    %v1804 = vunpack.c.l.b16 %v1285
    %v1805 = vunpack.c.l.b16 %v1286
    %v1806 = vunpack.c.l.b16 %v1287
    %v1807 = vunpack.c.l.b16 %v1288
    %v1808 = vunpack.c.l.b16 %v1289
    %v1809 = vunpack.c.l.b16 %v1290
    %v1810 = vunpack.c.l.b16 %v1291
    %v1811 = vunpack.c.l.b16 %v1292
    %v1812 = vunpack.c.l.b16 %v1293
    %v1813 = vunpack.c.l.b16 %v1294
    %v1814 = vunpack.c.l.b16 %v1295
    %v1815 = vunpack.c.l.b16 %v1296
    %v1816 = vunpack.c.l.b16 %v1297
    %v1817 = vunpack.c.l.b16 %v1298
    %v1818 = vunpack.c.l.b16 %v1299
    %v1819 = vunpack.c.l.b16 %v1300
    %v1820 = vunpack.c.l.b16 %v1301
    %v1821 = vunpack.c.l.b16 %v1302
    %v1822 = vunpack.c.l.b16 %v1303
    %v1823 = vunpack.c.l.b16 %v1304
    %v1824 = vunpack.c.l.b16 %v1305
    %v1825 = vunpack.c.l.b16 %v1306
    %v1826 = vunpack.c.l.b16 %v1307
    %v1827 = vunpack.c.l.b16 %v1308
    %v1828 = vunpack.c.l.b16 %v1309
    %v1829 = vunpack.c.l.b16 %v1310
    %v1830 = vunpack.c.l.b16 %v1311
    %v1831 = vunpack.c.l.b16 %v1312
    %v1832 = vunpack.c.l.b16 %v1313
    %v1833 = vunpack.c.l.b16 %v1314
    %v1834 = vunpack.c.l.b16 %v1315
    %v1835 = vunpack.c.l.b16 %v1316
    %v1836 = vunpack.c.l.b16 %v1317
    %v1837 = vunpack.c.l.b16 %v1318
    %v1838 = vunpack.c.l.b16 %v1319
    %v1839 = vunpack.c.l.b16 %v1320
    %v1840 = vunpack.c.l.b16 %v1321
    %v1841 = vunpack.c.l.b16 %v1322
    %v1842 = vunpack.c.l.b16 %v1323
    %v1843 = vunpack.c.l.b16 %v1324
    %v1844 = vunpack.c.l.b16 %v1325
    %v1845 = vunpack.c.l.b16 %v1326
    %v1846 = vunpack.c.l.b16 %v1327
    %v1847 = vunpack.c.l.b16 %v1328
    %v1848 = vunpack.c.l.b16 %v1329
    %v1849 = vunpack.c.l.b16 %v1330
    %v1850 = vunpack.c.l.b16 %v1331
    %v1851 = vunpack.c.l.b16 %v1332
    %v1852 = vunpack.c.l.b16 %v1333
    %v1853 = vunpack.c.l.b16 %v1334
    %v1854 = vunpack.c.l.b16 %v1335
    %v1855 = vunpack.c.l.b16 %v1336
    %v1856 = vunpack.c.l.b16 %v1337
    %v1857 = vunpack.c.l.b16 %v1338
    %v1858 = vunpack.c.l.b16 %v1339
    %v1859 = vunpack.c.l.b16 %v1340
    %v1860 = vunpack.c.l.b16 %v1341
    %v1861 = vunpack.c.l.b16 %v1342
    %v1862 = vunpack.c.l.b16 %v1343
    %v1863 = vunpack.c.l.b16 %v1344
    %v1864 = vunpack.c.l.b16 %v1345
    %v1865 = vunpack.c.l.b16 %v1346
    %v1866 = vunpack.c.l.b16 %v1347
    %v1867 = vunpack.c.l.b16 %v1348
    %v1868 = vunpack.c.l.b16 %v1349
    %v1869 = vunpack.c.l.b16 %v1350
    %v1870 = vunpack.c.l.b16 %v1351
    %v1871 = vunpack.c.l.b16 %v1352
    %v1872 = vunpack.c.l.b16 %v1353
    %v1873 = vunpack.c.l.b16 %v1354
    %v1874 = vunpack.c.l.b16 %v1355
    %v1875 = vunpack.c.l.b16 %v1356
    %v1876 = vunpack.c.l.b16 %v1357
    %v1877 = vunpack.c.l.b16 %v1358
    %v1878 = vunpack.c.l.b16 %v1359
    %v1879 = vunpack.c.l.b16 %v1360
    %v1880 = vunpack.c.l.b16 %v1361
    %v1881 = vunpack.c.l.b16 %v1362
    %v1882 = vunpack.c.l.b16 %v1363
    %v1883 = vunpack.c.l.b16 %v1364
    %v1884 = vunpack.c.l.b16 %v1365
    %v1885 = vunpack.c.l.b16 %v1366
    %v1886 = vunpack.c.l.b16 %v1367
    %v1887 = vunpack.c.l.b16 %v1368
    %v1888 = vunpack.c.l.b16 %v1369
    %v1889 = vunpack.c.l.b16 %v1370
    %v1890 = vunpack.c.l.b16 %v1371
    %v1891 = vunpack.c.l.b16 %v1372
    %v1892 = vunpack.c.l.b16 %v1373
    %v1893 = vunpack.c.l.b16 %v1374
    %v1894 = vunpack.c.l.b16 %v1375
    %v1895 = vunpack.c.l.b16 %v1376
    %v1896 = vunpack.c.l.b16 %v1377
    %v1897 = vunpack.c.l.b16 %v1378
    %v1898 = vunpack.c.l.b16 %v1379
    %v1899 = vunpack.c.l.b16 %v1380
    %v1900 = vunpack.c.l.b16 %v1381
    %v1901 = vunpack.c.l.b16 %v1382
    %v1902 = vunpack.c.l.b16 %v1383
    %v1903 = vunpack.c.l.b16 %v1384
    %v1904 = vunpack.c.l.b16 %v1385
    %v1905 = vunpack.c.l.b16 %v1386
    %v1906 = vunpack.c.l.b16 %v1387
    %v1907 = vunpack.c.l.b16 %v1388
    %v1908 = vunpack.c.l.b16 %v1389
    %v1909 = vunpack.c.l.b16 %v1390
    %v1910 = vunpack.c.l.b16 %v1391
    %v1911 = vunpack.c.l.b16 %v1392
    %v1912 = vunpack.c.l.b16 %v1393
    %v1913 = vunpack.c.l.b16 %v1394
    %v1914 = vunpack.c.l.b16 %v1395
    %v1915 = vunpack.c.l.b16 %v1396
    %v1916 = vpack.c.b16 %v1661, %v1660
    %v1917 = vpack.c.b16 %v1663, %v1662
    %v1918 = vpack.c.b16 %v1665, %v1664
    %v1919 = vpack.c.b16 %v1667, %v1666
    %v1920 = vpack.c.b16 %v1669, %v1668
    %v1921 = vpack.c.b16 %v1671, %v1670
    %v1922 = vpack.c.b16 %v1673, %v1672
    %v1923 = vpack.c.b16 %v1675, %v1674
    %v1924 = vpack.c.b16 %v1677, %v1676
    %v1925 = vpack.c.b16 %v1679, %v1678
    %v1926 = vpack.c.b16 %v1681, %v1680
    %v1927 = vpack.c.b16 %v1683, %v1682
    %v1928 = vpack.c.b16 %v1685, %v1684
    %v1929 = vpack.c.b16 %v1687, %v1686
    %v1930 = vpack.c.b16 %v1689, %v1688
    %v1931 = vpack.c.b16 %v1691, %v1690
    %v1932 = vpack.c.b16 %v1693, %v1692
    %v1933 = vpack.c.b16 %v1695, %v1694
    %v1934 = vpack.c.b16 %v1697, %v1696
    %v1935 = vpack.c.b16 %v1699, %v1698
    %v1936 = vpack.c.b16 %v1701, %v1700
    %v1937 = vpack.c.b16 %v1703, %v1702
    %v1938 = vpack.c.b16 %v1705, %v1704
    %v1939 = vpack.c.b16 %v1707, %v1706
    %v1940 = vpack.c.b16 %v1709, %v1708
    %v1941 = vpack.c.b16 %v1711, %v1710
    %v1942 = vpack.c.b16 %v1713, %v1712
    %v1943 = vpack.c.b16 %v1715, %v1714
    %v1944 = vpack.c.b16 %v1717, %v1716
    %v1945 = vpack.c.b16 %v1719, %v1718
    %v1946 = vpack.c.b16 %v1721, %v1720
    %v1947 = vpack.c.b16 %v1723, %v1722
    %v1948 = vpack.c.b16 %v1725, %v1724
    %v1949 = vpack.c.b16 %v1727, %v1726
    %v1950 = vpack.c.b16 %v1729, %v1728
    %v1951 = vpack.c.b16 %v1731, %v1730
    %v1952 = vpack.c.b16 %v1733, %v1732
    %v1953 = vpack.c.b16 %v1735, %v1734
    %v1954 = vpack.c.b16 %v1737, %v1736
    %v1955 = vpack.c.b16 %v1739, %v1738
    %v1956 = vpack.c.b16 %v1741, %v1740
    %v1957 = vpack.c.b16 %v1743, %v1742
    %v1958 = vpack.c.b16 %v1745, %v1744
    %v1959 = vpack.c.b16 %v1747, %v1746
    %v1960 = vpack.c.b16 %v1749, %v1748
    %v1961 = vpack.c.b16 %v1751, %v1750
    %v1962 = vpack.c.b16 %v1753, %v1752
    %v1963 = vpack.c.b16 %v1755, %v1754
    %v1964 = vpack.c.b16 %v1757, %v1756
    %v1965 = vpack.c.b16 %v1759, %v1758
    %v1966 = vpack.c.b16 %v1761, %v1760
    %v1967 = vpack.c.b16 %v1763, %v1762
    %v1968 = vpack.c.b16 %v1765, %v1764
    %v1969 = vpack.c.b16 %v1767, %v1766
    %v1970 = vpack.c.b16 %v1769, %v1768
    %v1971 = vpack.c.b16 %v1771, %v1770
    %v1972 = vpack.c.b16 %v1773, %v1772
    %v1973 = vpack.c.b16 %v1775, %v1774
    %v1974 = vpack.c.b16 %v1777, %v1776
    %v1975 = vpack.c.b16 %v1779, %v1778
    %v1976 = vpack.c.b16 %v1781, %v1780
    %v1977 = vpack.c.b16 %v1783, %v1782
    %v1978 = vpack.c.b16 %v1785, %v1784
    %v1979 = vpack.c.b16 %v1787, %v1786
    %v1980 = vpack.c.b16 %v1789, %v1788
    %v1981 = vpack.c.b16 %v1791, %v1790
    %v1982 = vpack.c.b16 %v1793, %v1792
    %v1983 = vpack.c.b16 %v1795, %v1794
    %v1984 = vpack.c.b16 %v1797, %v1796
    %v1985 = vpack.c.b16 %v1799, %v1798
    %v1986 = vpack.c.b16 %v1801, %v1800
    %v1987 = vpack.c.b16 %v1803, %v1802
    %v1988 = vpack.c.b16 %v1805, %v1804
    %v1989 = vpack.c.b16 %v1807, %v1806
    %v1990 = vpack.c.b16 %v1809, %v1808
    %v1991 = vpack.c.b16 %v1811, %v1810
    %v1992 = vpack.c.b16 %v1813, %v1812
    %v1993 = vpack.c.b16 %v1815, %v1814
    %v1994 = vpack.c.b16 %v1817, %v1816
    %v1995 = vpack.c.b16 %v1819, %v1818
    %v1996 = vpack.c.b16 %v1821, %v1820
    %v1997 = vpack.c.b16 %v1823, %v1822
    %v1998 = vpack.c.b16 %v1825, %v1824
    %v1999 = vpack.c.b16 %v1827, %v1826
    %v2000 = vpack.c.b16 %v1829, %v1828
    %v2001 = vpack.c.b16 %v1831, %v1830
    %v2002 = vpack.c.b16 %v1833, %v1832
    %v2003 = vpack.c.b16 %v1835, %v1834
    %v2004 = vpack.c.b16 %v1837, %v1836
    %v2005 = vpack.c.b16 %v1839, %v1838
    %v2006 = vpack.c.b16 %v1841, %v1840
    %v2007 = vpack.c.b16 %v1843, %v1842
    %v2008 = vpack.c.b16 %v1845, %v1844
    %v2009 = vpack.c.b16 %v1847, %v1846
    %v2010 = vpack.c.b16 %v1849, %v1848
    %v2011 = vpack.c.b16 %v1851, %v1850
    %v2012 = vpack.c.b16 %v1853, %v1852
    %v2013 = vpack.c.b16 %v1855, %v1854
    %v2014 = vpack.c.b16 %v1857, %v1856
    %v2015 = vpack.c.b16 %v1859, %v1858
    %v2016 = vpack.c.b16 %v1861, %v1860
    %v2017 = vpack.c.b16 %v1863, %v1862
    %v2018 = vpack.c.b16 %v1865, %v1864
    %v2019 = vpack.c.b16 %v1867, %v1866
    %v2020 = vpack.c.b16 %v1869, %v1868
    %v2021 = vpack.c.b16 %v1871, %v1870
    %v2022 = vpack.c.b16 %v1873, %v1872
    %v2023 = vpack.c.b16 %v1875, %v1874
    %v2024 = vpack.c.b16 %v1877, %v1876
    %v2025 = vpack.c.b16 %v1879, %v1878
    %v2026 = vpack.c.b16 %v1881, %v1880
    %v2027 = vpack.c.b16 %v1883, %v1882
    %v2028 = vpack.c.b16 %v1885, %v1884
    %v2029 = vpack.c.b16 %v1887, %v1886
    %v2030 = vpack.c.b16 %v1889, %v1888
    %v2031 = vpack.c.b16 %v1891, %v1890
    %v2032 = vpack.c.b16 %v1893, %v1892
    %v2033 = vpack.c.b16 %v1895, %v1894
    %v2034 = vpack.c.b16 %v1897, %v1896
    %v2035 = vpack.c.b16 %v1899, %v1898
    %v2036 = vpack.c.b16 %v1901, %v1900
    %v2037 = vpack.c.b16 %v1903, %v1902
    %v2038 = vpack.c.b16 %v1905, %v1904
    %v2039 = vpack.c.b16 %v1907, %v1906
    %v2040 = vpack.c.b16 %v1909, %v1908
    %v2041 = vpack.c.b16 %v1911, %v1910
    %v2042 = vpack.c.b16 %v1913, %v1912
    %v2043 = vpack.c.b16 %v1915, %v1914
    %2172 = vmatprep.subr.bf16.mxu0 0
    %2173 = vmatpush1.bf16.msra.mxu0 %v1916
    %2174 = vmatprep.subr.bf16.mxu0 0
    %2175 = vmatpush1.bf16.msra.mxu0 %v1917
    %2176 = vmatprep.subr.bf16.mxu0 0
    %2177 = vmatpush1.bf16.msra.mxu0 %v1918
    %2178 = vmatprep.subr.bf16.mxu0 0
    %2179 = vmatpush1.bf16.msra.mxu0 %v1919
    %2180 = vmatprep.subr.bf16.mxu0 0
    %2181 = vmatpush1.bf16.msra.mxu0 %v1920
    %2182 = vmatprep.subr.bf16.mxu0 0
    %2183 = vmatpush1.bf16.msra.mxu0 %v1921
    %2184 = vmatprep.subr.bf16.mxu0 0
    %2185 = vmatpush1.bf16.msra.mxu0 %v1922
    %2186 = vmatprep.subr.bf16.mxu0 0
    %2187 = vmatpush1.bf16.msra.mxu0 %v1923
    %2188 = vmatprep.subr.bf16.mxu0 0
    %2189 = vmatpush1.bf16.msra.mxu0 %v1924
    %2190 = vmatprep.subr.bf16.mxu0 0
    %2191 = vmatpush1.bf16.msra.mxu0 %v1925
    %2192 = vmatprep.subr.bf16.mxu0 0
    %2193 = vmatpush1.bf16.msra.mxu0 %v1926
    %2194 = vmatprep.subr.bf16.mxu0 0
    %2195 = vmatpush1.bf16.msra.mxu0 %v1927
    %2196 = vmatprep.subr.bf16.mxu0 0
    %2197 = vmatpush1.bf16.msra.mxu0 %v1928
    %2198 = vmatprep.subr.bf16.mxu0 0
    %2199 = vmatpush1.bf16.msra.mxu0 %v1929
    %2200 = vmatprep.subr.bf16.mxu0 0
    %2201 = vmatpush1.bf16.msra.mxu0 %v1930
    %2202 = vmatprep.subr.bf16.mxu0 0
    %2203 = vmatpush1.bf16.msra.mxu0 %v1931
    %2204 = vmatprep.mubr.bf16.mxu0 %v1126
    %2205 = vmatmul.mubr.bf16.gmra.mrb[0].mxu0 %v1125
    %v2206 = vpop.f32.mrb[0].mxu0
    %v2207 = vadd.f32 %v1402, %v2206
    %v2208 = vpop.f32.mrb[0].mxu0
    %v2209 = vpop.f32.mrb[0].mxu0
    %v2210 = vpop.f32.mrb[0].mxu0
    %2211 = vdwg.mxu0
    %2212 = vmatprep.subr.bf16.mxu0 0
    %2213 = vmatpush1.bf16.msra.mxu0 %v1932
    %2214 = vmatprep.subr.bf16.mxu0 0
    %2215 = vmatpush1.bf16.msra.mxu0 %v1933
    %2216 = vmatprep.subr.bf16.mxu0 0
    %2217 = vmatpush1.bf16.msra.mxu0 %v1934
    %2218 = vmatprep.subr.bf16.mxu0 0
    %2219 = vmatpush1.bf16.msra.mxu0 %v1935
    %2220 = vmatprep.subr.bf16.mxu0 0
    %2221 = vmatpush1.bf16.msra.mxu0 %v1936
    %2222 = vmatprep.subr.bf16.mxu0 0
    %2223 = vmatpush1.bf16.msra.mxu0 %v1937
    %2224 = vmatprep.subr.bf16.mxu0 0
    %2225 = vmatpush1.bf16.msra.mxu0 %v1938
    %2226 = vmatprep.subr.bf16.mxu0 0
    %2227 = vmatpush1.bf16.msra.mxu0 %v1939
    %2228 = vmatprep.subr.bf16.mxu0 0
    %2229 = vmatpush1.bf16.msra.mxu0 %v1940
    %2230 = vmatprep.subr.bf16.mxu0 0
    %2231 = vmatpush1.bf16.msra.mxu0 %v1941
    %2232 = vmatprep.subr.bf16.mxu0 0
    %2233 = vmatpush1.bf16.msra.mxu0 %v1942
    %2234 = vmatprep.subr.bf16.mxu0 0
    %2235 = vmatpush1.bf16.msra.mxu0 %v1943
    %2236 = vmatprep.subr.bf16.mxu0 0
    %2237 = vmatpush1.bf16.msra.mxu0 %v1944
    %2238 = vmatprep.subr.bf16.mxu0 0
    %2239 = vmatpush1.bf16.msra.mxu0 %v1945
    %2240 = vmatprep.subr.bf16.mxu0 0
    %2241 = vmatpush1.bf16.msra.mxu0 %v1946
    %2242 = vmatprep.subr.bf16.mxu0 0
    %2243 = vmatpush1.bf16.msra.mxu0 %v1947
    %2244 = vmatprep.mubr.bf16.mxu0 %v1128
    %2245 = vmatmul.mubr.bf16.gmra.mrb[0].mxu0 %v1127
    %v2246 = vpop.f32.mrb[0].mxu0
    %v2247 = vadd.f32 %v2207, %v2246
    %v2248 = vpop.f32.mrb[0].mxu0
    %v2249 = vpop.f32.mrb[0].mxu0
    %v2250 = vpop.f32.mrb[0].mxu0
    %2251 = vdwg.mxu0
    %2252 = vmatprep.subr.bf16.mxu0 0
    %2253 = vmatpush1.bf16.msra.mxu0 %v1948
    %2254 = vmatprep.subr.bf16.mxu0 0
    %2255 = vmatpush1.bf16.msra.mxu0 %v1949
    %2256 = vmatprep.subr.bf16.mxu0 0
    %2257 = vmatpush1.bf16.msra.mxu0 %v1950
    %2258 = vmatprep.subr.bf16.mxu0 0
    %2259 = vmatpush1.bf16.msra.mxu0 %v1951
    %2260 = vmatprep.subr.bf16.mxu0 0
    %2261 = vmatpush1.bf16.msra.mxu0 %v1952
    %2262 = vmatprep.subr.bf16.mxu0 0
    %2263 = vmatpush1.bf16.msra.mxu0 %v1953
    %2264 = vmatprep.subr.bf16.mxu0 0
    %2265 = vmatpush1.bf16.msra.mxu0 %v1954
    %2266 = vmatprep.subr.bf16.mxu0 0
    %2267 = vmatpush1.bf16.msra.mxu0 %v1955
    %2268 = vmatprep.subr.bf16.mxu0 0
    %2269 = vmatpush1.bf16.msra.mxu0 %v1956
    %2270 = vmatprep.subr.bf16.mxu0 0
    %2271 = vmatpush1.bf16.msra.mxu0 %v1957
    %2272 = vmatprep.subr.bf16.mxu0 0
    %2273 = vmatpush1.bf16.msra.mxu0 %v1958
    %2274 = vmatprep.subr.bf16.mxu0 0
    %2275 = vmatpush1.bf16.msra.mxu0 %v1959
    %2276 = vmatprep.subr.bf16.mxu0 0
    %2277 = vmatpush1.bf16.msra.mxu0 %v1960
    %2278 = vmatprep.subr.bf16.mxu0 0
    %2279 = vmatpush1.bf16.msra.mxu0 %v1961
    %2280 = vmatprep.subr.bf16.mxu0 0
    %2281 = vmatpush1.bf16.msra.mxu0 %v1962
    %2282 = vmatprep.subr.bf16.mxu0 0
    %2283 = vmatpush1.bf16.msra.mxu0 %v1963
    %2284 = vmatprep.mubr.bf16.mxu0 %v1130
    %2285 = vmatmul.mubr.bf16.gmra.mrb[0].mxu0 %v1129
    %v2286 = vpop.f32.mrb[0].mxu0
    %v2287 = vadd.f32 %v2247, %v2286
    %v2288 = vpop.f32.mrb[0].mxu0
    %v2289 = vpop.f32.mrb[0].mxu0
    %v2290 = vpop.f32.mrb[0].mxu0
    %2291 = vdwg.mxu0
    %2292 = vmatprep.subr.bf16.mxu0 0
    %2293 = vmatpush1.bf16.msra.mxu0 %v1964
    %2294 = vmatprep.subr.bf16.mxu0 0
    %2295 = vmatpush1.bf16.msra.mxu0 %v1965
    %2296 = vmatprep.subr.bf16.mxu0 0
    %2297 = vmatpush1.bf16.msra.mxu0 %v1966
    %2298 = vmatprep.subr.bf16.mxu0 0
    %2299 = vmatpush1.bf16.msra.mxu0 %v1967
    %2300 = vmatprep.subr.bf16.mxu0 0
    %2301 = vmatpush1.bf16.msra.mxu0 %v1968
    %2302 = vmatprep.subr.bf16.mxu0 0
    %2303 = vmatpush1.bf16.msra.mxu0 %v1969
    %2304 = vmatprep.subr.bf16.mxu0 0
    %2305 = vmatpush1.bf16.msra.mxu0 %v1970
    %2306 = vmatprep.subr.bf16.mxu0 0
    %2307 = vmatpush1.bf16.msra.mxu0 %v1971
    %2308 = vmatprep.subr.bf16.mxu0 0
    %2309 = vmatpush1.bf16.msra.mxu0 %v1972
    %2310 = vmatprep.subr.bf16.mxu0 0
    %2311 = vmatpush1.bf16.msra.mxu0 %v1973
    %2312 = vmatprep.subr.bf16.mxu0 0
    %2313 = vmatpush1.bf16.msra.mxu0 %v1974
    %2314 = vmatprep.subr.bf16.mxu0 0
    %2315 = vmatpush1.bf16.msra.mxu0 %v1975
    %2316 = vmatprep.subr.bf16.mxu0 0
    %2317 = vmatpush1.bf16.msra.mxu0 %v1976
    %2318 = vmatprep.subr.bf16.mxu0 0
    %2319 = vmatpush1.bf16.msra.mxu0 %v1977
    %2320 = vmatprep.subr.bf16.mxu0 0
    %2321 = vmatpush1.bf16.msra.mxu0 %v1978
    %2322 = vmatprep.subr.bf16.mxu0 0
    %2323 = vmatpush1.bf16.msra.mxu0 %v1979
    %2324 = vmatprep.mubr.bf16.mxu0 %v1132
    %2325 = vmatmul.mubr.bf16.gmra.mrb[0].mxu0 %v1131
    %v2326 = vpop.f32.mrb[0].mxu0
    %v2327 = vadd.f32 %v2287, %v2326
    %v2328 = vpop.f32.mrb[0].mxu0
    %v2329 = vpop.f32.mrb[0].mxu0
    %v2330 = vpop.f32.mrb[0].mxu0
    %2331 = vdwg.mxu0
    %2332 = vmatprep.subr.bf16.mxu0 0
    %2333 = vmatpush1.bf16.msra.mxu0 %v1980
    %2334 = vmatprep.subr.bf16.mxu0 0
    %2335 = vmatpush1.bf16.msra.mxu0 %v1981
    %2336 = vmatprep.subr.bf16.mxu0 0
    %2337 = vmatpush1.bf16.msra.mxu0 %v1982
    %2338 = vmatprep.subr.bf16.mxu0 0
    %2339 = vmatpush1.bf16.msra.mxu0 %v1983
    %2340 = vmatprep.subr.bf16.mxu0 0
    %2341 = vmatpush1.bf16.msra.mxu0 %v1984
    %2342 = vmatprep.subr.bf16.mxu0 0
    %2343 = vmatpush1.bf16.msra.mxu0 %v1985
    %2344 = vmatprep.subr.bf16.mxu0 0
    %2345 = vmatpush1.bf16.msra.mxu0 %v1986
    %2346 = vmatprep.subr.bf16.mxu0 0
    %2347 = vmatpush1.bf16.msra.mxu0 %v1987
    %2348 = vmatprep.subr.bf16.mxu0 0
    %2349 = vmatpush1.bf16.msra.mxu0 %v1988
    %2350 = vmatprep.subr.bf16.mxu0 0
    %2351 = vmatpush1.bf16.msra.mxu0 %v1989
    %2352 = vmatprep.subr.bf16.mxu0 0
    %2353 = vmatpush1.bf16.msra.mxu0 %v1990
    %2354 = vmatprep.subr.bf16.mxu0 0
    %2355 = vmatpush1.bf16.msra.mxu0 %v1991
    %2356 = vmatprep.subr.bf16.mxu0 0
    %2357 = vmatpush1.bf16.msra.mxu0 %v1992
    %2358 = vmatprep.subr.bf16.mxu0 0
    %2359 = vmatpush1.bf16.msra.mxu0 %v1993
    %2360 = vmatprep.subr.bf16.mxu0 0
    %2361 = vmatpush1.bf16.msra.mxu0 %v1994
    %2362 = vmatprep.subr.bf16.mxu0 0
    %2363 = vmatpush1.bf16.msra.mxu0 %v1995
    %2364 = vmatprep.mubr.bf16.mxu0 %v1134
    %2365 = vmatmul.mubr.bf16.gmra.mrb[0].mxu0 %v1133
    %v2366 = vpop.f32.mrb[0].mxu0
    %v2367 = vadd.f32 %v2327, %v2366
    %v2368 = vpop.f32.mrb[0].mxu0
    %v2369 = vpop.f32.mrb[0].mxu0
    %v2370 = vpop.f32.mrb[0].mxu0
    %2371 = vdwg.mxu0
    %2372 = vmatprep.subr.bf16.mxu0 0
    %2373 = vmatpush1.bf16.msra.mxu0 %v1996
    %2374 = vmatprep.subr.bf16.mxu0 0
    %2375 = vmatpush1.bf16.msra.mxu0 %v1997
    %2376 = vmatprep.subr.bf16.mxu0 0
    %2377 = vmatpush1.bf16.msra.mxu0 %v1998
    %2378 = vmatprep.subr.bf16.mxu0 0
    %2379 = vmatpush1.bf16.msra.mxu0 %v1999
    %2380 = vmatprep.subr.bf16.mxu0 0
    %2381 = vmatpush1.bf16.msra.mxu0 %v2000
    %2382 = vmatprep.subr.bf16.mxu0 0
    %2383 = vmatpush1.bf16.msra.mxu0 %v2001
    %2384 = vmatprep.subr.bf16.mxu0 0
    %2385 = vmatpush1.bf16.msra.mxu0 %v2002
    %2386 = vmatprep.subr.bf16.mxu0 0
    %2387 = vmatpush1.bf16.msra.mxu0 %v2003
    %2388 = vmatprep.subr.bf16.mxu0 0
    %2389 = vmatpush1.bf16.msra.mxu0 %v2004
    %2390 = vmatprep.subr.bf16.mxu0 0
    %2391 = vmatpush1.bf16.msra.mxu0 %v2005
    %2392 = vmatprep.subr.bf16.mxu0 0
    %2393 = vmatpush1.bf16.msra.mxu0 %v2006
    %2394 = vmatprep.subr.bf16.mxu0 0
    %2395 = vmatpush1.bf16.msra.mxu0 %v2007
    %2396 = vmatprep.subr.bf16.mxu0 0
    %2397 = vmatpush1.bf16.msra.mxu0 %v2008
    %2398 = vmatprep.subr.bf16.mxu0 0
    %2399 = vmatpush1.bf16.msra.mxu0 %v2009
    %2400 = vmatprep.subr.bf16.mxu0 0
    %2401 = vmatpush1.bf16.msra.mxu0 %v2010
    %2402 = vmatprep.subr.bf16.mxu0 0
    %2403 = vmatpush1.bf16.msra.mxu0 %v2011
    %2404 = vmatprep.mubr.bf16.mxu0 %v1136
    %2405 = vmatmul.mubr.bf16.gmra.mrb[0].mxu0 %v1135
    %v2406 = vpop.f32.mrb[0].mxu0
    %v2407 = vadd.f32 %v2367, %v2406
    %v2408 = vpop.f32.mrb[0].mxu0
    %v2409 = vpop.f32.mrb[0].mxu0
    %v2410 = vpop.f32.mrb[0].mxu0
    %2411 = vdwg.mxu0
    %2412 = vmatprep.subr.bf16.mxu0 0
    %2413 = vmatpush1.bf16.msra.mxu0 %v2012
    %2414 = vmatprep.subr.bf16.mxu0 0
    %2415 = vmatpush1.bf16.msra.mxu0 %v2013
    %2416 = vmatprep.subr.bf16.mxu0 0
    %2417 = vmatpush1.bf16.msra.mxu0 %v2014
    %2418 = vmatprep.subr.bf16.mxu0 0
    %2419 = vmatpush1.bf16.msra.mxu0 %v2015
    %2420 = vmatprep.subr.bf16.mxu0 0
    %2421 = vmatpush1.bf16.msra.mxu0 %v2016
    %2422 = vmatprep.subr.bf16.mxu0 0
    %2423 = vmatpush1.bf16.msra.mxu0 %v2017
    %2424 = vmatprep.subr.bf16.mxu0 0
    %2425 = vmatpush1.bf16.msra.mxu0 %v2018
    %2426 = vmatprep.subr.bf16.mxu0 0
    %2427 = vmatpush1.bf16.msra.mxu0 %v2019
    %2428 = vmatprep.subr.bf16.mxu0 0
    %2429 = vmatpush1.bf16.msra.mxu0 %v2020
    %2430 = vmatprep.subr.bf16.mxu0 0
    %2431 = vmatpush1.bf16.msra.mxu0 %v2021
    %2432 = vmatprep.subr.bf16.mxu0 0
    %2433 = vmatpush1.bf16.msra.mxu0 %v2022
    %2434 = vmatprep.subr.bf16.mxu0 0
    %2435 = vmatpush1.bf16.msra.mxu0 %v2023
    %2436 = vmatprep.subr.bf16.mxu0 0
    %2437 = vmatpush1.bf16.msra.mxu0 %v2024
    %2438 = vmatprep.subr.bf16.mxu0 0
    %2439 = vmatpush1.bf16.msra.mxu0 %v2025
    %2440 = vmatprep.subr.bf16.mxu0 0
    %2441 = vmatpush1.bf16.msra.mxu0 %v2026
    %2442 = vmatprep.subr.bf16.mxu0 0
    %2443 = vmatpush1.bf16.msra.mxu0 %v2027
    %2444 = vmatprep.mubr.bf16.mxu0 %v1138
    %2445 = vmatmul.mubr.bf16.gmra.mrb[0].mxu0 %v1137
    %v2446 = vpop.f32.mrb[0].mxu0
    %v2447 = vadd.f32 %v2407, %v2446
    %v2448 = vpop.f32.mrb[0].mxu0
    %v2449 = vpop.f32.mrb[0].mxu0
    %v2450 = vpop.f32.mrb[0].mxu0
    %2451 = vdwg.mxu0
    %2452 = vmatprep.subr.bf16.mxu0 0
    %2453 = vmatpush1.bf16.msra.mxu0 %v2028
    %2454 = vmatprep.subr.bf16.mxu0 0
    %2455 = vmatpush1.bf16.msra.mxu0 %v2029
    %2456 = vmatprep.subr.bf16.mxu0 0
    %2457 = vmatpush1.bf16.msra.mxu0 %v2030
    %2458 = vmatprep.subr.bf16.mxu0 0
    %2459 = vmatpush1.bf16.msra.mxu0 %v2031
    %2460 = vmatprep.subr.bf16.mxu0 0
    %2461 = vmatpush1.bf16.msra.mxu0 %v2032
    %2462 = vmatprep.subr.bf16.mxu0 0
    %2463 = vmatpush1.bf16.msra.mxu0 %v2033
    %2464 = vmatprep.subr.bf16.mxu0 0
    %2465 = vmatpush1.bf16.msra.mxu0 %v2034
    %2466 = vmatprep.subr.bf16.mxu0 0
    %2467 = vmatpush1.bf16.msra.mxu0 %v2035
    %2468 = vmatprep.subr.bf16.mxu0 0
    %2469 = vmatpush1.bf16.msra.mxu0 %v2036
    %2470 = vmatprep.subr.bf16.mxu0 0
    %2471 = vmatpush1.bf16.msra.mxu0 %v2037
    %2472 = vmatprep.subr.bf16.mxu0 0
    %2473 = vmatpush1.bf16.msra.mxu0 %v2038
    %2474 = vmatprep.subr.bf16.mxu0 0
    %2475 = vmatpush1.bf16.msra.mxu0 %v2039
    %2476 = vmatprep.subr.bf16.mxu0 0
    %2477 = vmatpush1.bf16.msra.mxu0 %v2040
    %2478 = vmatprep.subr.bf16.mxu0 0
    %2479 = vmatpush1.bf16.msra.mxu0 %v2041
    %2480 = vmatprep.subr.bf16.mxu0 0
    %2481 = vmatpush1.bf16.msra.mxu0 %v2042
    %2482 = vmatprep.subr.bf16.mxu0 0
    %2483 = vmatpush1.bf16.msra.mxu0 %v2043
    %2484 = vmatprep.mubr.bf16.mxu0 %v1140
    %2485 = vmatmul.mubr.bf16.gmra.mrb[0].mxu0 %v1139
    %v2486 = vpop.f32.mrb[0].mxu0
    %v2487 = vadd.f32 %v2447, %v2486
    %v2488 = vpop.f32.mrb[0].mxu0
    %v2489 = vpop.f32.mrb[0].mxu0
    %v2490 = vpop.f32.mrb[0].mxu0
    %2491 = vdwg.mxu0
    %v2492 = vmax.f32 %v2487, 0.0
    %v2493 = vld [vmem:[%s7] sm:$0xff]
    %v2494 = vld [vmem:[%s7 + $0x8] sm:$0xff]
    %v2495 = vld [vmem:[%s7 + $0x10] sm:$0xff]
    %v2496 = vld [vmem:[%s7 + $0x18] sm:$0xff]
    %v2497 = vld [vmem:[%s7 + $0x20] sm:$0xff]
    %v2498 = vld [vmem:[%s7 + $0x28] sm:$0xff]
    %v2499 = vld [vmem:[%s7 + $0x30] sm:$0xff]
    %v2500 = vld [vmem:[%s7 + $0x38] sm:$0xff]
    %v2501 = vld [vmem:[%s7 + $0x40] sm:$0xff]
    %v2502 = vld [vmem:[%s7 + $0x48] sm:$0xff]
    %v2503 = vld [vmem:[%s7 + $0x50] sm:$0xf]
    %v2504 = vld [vmem:[%s8] sm:$0x1]
    %v2506 = vlaneseq
    %v2507 = vshrl.u32 %v2506, 7
    %v2508 = vsub.s32 0, %v2507
    %v2509 = vrot.slane %v2504, %v2508
    %v2512 = vsel %vm452, %v2492, 0
    %v2515 = vsel %vm815, %v2503, 0
    %2517 = vmatprep.subr.mxu0 0.0
    %2518 = vmatpush1.msra.mxu0 %v2493
    %2519 = vmatprep.subr.mxu0 0.0
    %2520 = vmatpush1.msra.mxu0 %v2494
    %2521 = vmatprep.subr.mxu0 0.0
    %2522 = vmatpush1.msra.mxu0 %v2495
    %2523 = vmatprep.subr.mxu0 0.0
    %2524 = vmatpush1.msra.mxu0 %v2496
    %2525 = vmatprep.subr.mxu0 0.0
    %2526 = vmatpush1.msra.mxu0 %v2497
    %2527 = vmatprep.subr.mxu0 0.0
    %2528 = vmatpush1.msra.mxu0 %v2498
    %2529 = vmatprep.subr.mxu0 0.0
    %2530 = vmatpush1.msra.mxu0 %v2499
    %2531 = vmatprep.subr.mxu0 0.0
    %2532 = vmatpush1.msra.mxu0 %v2500
    %2533 = vmatprep.subr.mxu0 0.0
    %2534 = vmatpush1.msra.mxu0 %v2501
    %2535 = vmatprep.subr.mxu0 0.0
    %2536 = vmatpush1.msra.mxu0 %v2502
    %2537 = vmatprep.subr.mxu0 0.0
    %2538 = vmatpush1.msra.mxu0 %v2515
    %2539 = vmatprep.subr.mxu0 0.0
    %2540 = vmatpush1.msra.mxu0 0.0
    %2541 = vmatprep.subr.mxu0 0.0
    %2542 = vmatpush1.msra.mxu0 0.0
    %2543 = vmatprep.subr.mxu0 0.0
    %2544 = vmatpush1.msra.mxu0 0.0
    %2545 = vmatprep.subr.mxu0 0.0
    %2546 = vmatpush1.msra.mxu0 0.0
    %2547 = vmatprep.subr.mxu0 0.0
    %2548 = vmatpush1.msra.mxu0 0.0
    %2549 = vmatprep.subr.mxu0 0.0
    %2550 = vmatpush1.msra.mxu0 0.0
    %2551 = vmatprep.subr.mxu0 0.0
    %2552 = vmatpush1.msra.mxu0 0.0
    %2553 = vmatprep.subr.mxu0 0.0
    %2554 = vmatpush1.msra.mxu0 0.0
    %2555 = vmatprep.subr.mxu0 0.0
    %2556 = vmatpush1.msra.mxu0 0.0
    %2557 = vmatprep.subr.mxu0 0.0
    %2558 = vmatpush1.msra.mxu0 0.0
    %2559 = vmatprep.subr.mxu0 0.0
    %2560 = vmatpush1.msra.mxu0 0.0
    %2561 = vmatprep.subr.mxu0 0.0
    %2562 = vmatpush1.msra.mxu0 0.0
    %2563 = vmatprep.subr.mxu0 0.0
    %2564 = vmatpush1.msra.mxu0 0.0
    %2565 = vmatprep.subr.mxu0 0.0
    %2566 = vmatpush1.msra.mxu0 0.0
    %2567 = vmatprep.subr.mxu0 0.0
    %2568 = vmatpush1.msra.mxu0 0.0
    %2569 = vmatprep.subr.mxu0 0.0
    %2570 = vmatpush1.msra.mxu0 0.0
    %2571 = vmatprep.subr.mxu0 0.0
    %2572 = vmatpush1.msra.mxu0 0.0
    %2573 = vmatprep.subr.mxu0 0.0
    %2574 = vmatpush1.msra.mxu0 0.0
    %2575 = vmatprep.subr.mxu0 0.0
    %2576 = vmatpush1.msra.mxu0 0.0
    %2577 = vmatprep.subr.mxu0 0.0
    %2578 = vmatpush1.msra.mxu0 0.0
    %2579 = vmatprep.subr.mxu0 0.0
    %2580 = vmatpush1.msra.mxu0 0.0
    %2581 = vmatprep.mubr.f32.mxu0 0.0
    %2582 = vmatmul.mubr.f32.gmra.mrb[0].mxu0 %v2512
    %v2583 = vpop.f32.mrb[0].mxu0
    %v2584 = vadd.f32 %v2509, %v2583
    %v2585 = vpop.f32.mrb[0].mxu0
    %2586 = vdwg.mxu0
    %vm2587 = vcmask 74752
    %2588 = vst.msk [vmem:[#allocation4] sm:$0x3] %vm2587, %v2584
    // Predicated region
    $region38: #{nas_forward.1} parent=1 // pred_check
      _
    $region39: #{nas_forward.1} parent=1 // pred_check_branch
      %2590 = sbr.rel (0) target = $region41
    $region40: #{nas_forward.1} parent=1 // pred_region
      %s2592 = ssub.s32 32, 32
      %2593 = vsyncadd [#allocation5], %s2592
      %s2595 = sshll.u32 [#allocation4], 4
      %s2596 = int_to_ptr.vmem [resolvable:$true] %s2595
      %2598 = dma.vmem_to_hbm [thread:$0]  %s2596, 32, %s9, [#allocation5]
    $region41: #{nas_forward.1} parent=1 // pred_fallthru
      _
    // Predicated region
    $region42: #{nas_forward.1} parent=1 // pred_check
      _
    $region43: #{nas_forward.1} parent=1 // pred_check_branch
      %2600 = sbr.rel (0) target = $region45
    $region44: #{nas_forward.1} parent=1 // pred_region
      %2601 = dma.done [#allocation5], 32
    $region45: #{nas_forward.1} parent=1 // pred_fallthru
      _
    %2602 = vsyncpa [#allocation5], 1

</llo_original>
